<compile_context>
chip_gen: v6e
topology: v6e:2x2x1
jax: 0.10.0
libtpu: 0.0.40
codegen_flags: <defaults>
</compile_context>

<pallas_src>
import functools

import jax
import jax.numpy as jnp
import numpy as np
from jax.experimental import pallas as pl
from jax.experimental.pallas import tpu as pltpu


# ------------------------------ fused kernel ------------------------------- #

def _lenet_kernel(TB, x_ref,
                  k1_ref, b1_ref, qw1_ref, ph1_ref,
                  k2_ref, b2_ref, qw2_ref, ph2_ref,
                  fc1w_ref, fc1b_ref, fc2w_ref, fc2b_ref, fc3w_ref, fc3b_ref,
                  o_ref, feat_ref):
    f32, bf16 = jnp.float32, jnp.bfloat16

    def mm(a, b):
        # bf16 MXU matmul with f32 accumulation (safe on v5e/v6e/v7x).
        return jnp.dot(a, b, preferred_element_type=f32)

    def sigmoid(z):
        # exp on the EUP; approximate reciprocal also on the EUP (frees VALU).
        return pl.reciprocal(1.0 + jnp.exp(-z), approx=True)

    # Weights: constant index_maps -> fetched once, VMEM resident for all steps.
    k1, qw1, ph1 = k1_ref[...], qw1_ref[...], ph1_ref[...]
    k2, qw2, ph2 = k2_ref[...], qw2_ref[...], ph2_ref[...]
    b1, b2 = b1_ref[...], b2_ref[...]

    # ---- conv/pool stack: per-image, but with single deep-K matmuls -------- #
    for b in range(TB):
        x = x_ref[b]                                         # (32, 32) bf16, padded

        # conv1 (5x5, pad=2) as ONE matmul: lanes of LHS pack (di, w), K = 160.
        lhs1 = jnp.concatenate([x[di:di + 28, :] for di in range(5)], axis=1)
        a1 = sigmoid(mm(lhs1, k1) + b1)                      # (28, 168), lane = j*6+c
        a1 = a1.astype(bf16)

        # pool1: 2x2 average pool = lane-dim matmul (W) + row matmul (H).
        p1 = mm(ph1, mm(a1, qw1).astype(bf16))               # (14, 84)
        p1 = p1.astype(bf16)

        # conv2 (5x5, valid) as ONE matmul: K = 5*84 = 420.
        lhs2 = jnp.concatenate([p1[di:di + 10, :] for di in range(5)], axis=1)
        a2 = sigmoid(mm(lhs2, k2) + b2)                      # (10, 160), lane = j*16+c
        a2 = a2.astype(bf16)

        # pool2
        p2 = mm(ph2, mm(a2, qw2).astype(bf16))               # (5, 80), lane = w*16+c

        # Flatten (h-major) into the batched feature buffer (torch NCHW flatten
        # order is folded into fc1w on the host).
        for h in range(5):
            feat_ref[b:b + 1, h * 80:(h + 1) * 80] = p2[h:h + 1, :]

    # ---- batched FC tail: M = TB rows through the MXU ---------------------- #
    feat = feat_ref[...].astype(bf16)                                   # (TB, 400)
    h1 = sigmoid(mm(feat, fc1w_ref[...]) + fc1b_ref[...])               # (TB, 120)
    h2 = sigmoid(mm(h1.astype(bf16), fc2w_ref[...]) + fc2b_ref[...])    # (TB, 84)
    out = mm(h2.astype(bf16), fc3w_ref[...]) + fc3b_ref[...]            # (TB, 128)
    o_ref[...] = out.astype(o_ref.dtype)


# --------------------------- host-side weight prep -------------------------- #

def prepare_params(p):
    """One-time host-side repack of torch-layout weights into kernel layout."""
    f32, bf16 = jnp.float32, jnp.bfloat16

    def band(w_oihw, win, wout):
        # K[di*win*cin + w*cin + ci, j*cout + co] = w[co, ci, di, w-j]  (0 <= w-j < 5)
        cout, cin, kh, kw = w_oihw.shape
        wt = jnp.transpose(w_oihw, (2, 3, 1, 0))                     # (di,dj,ci,co)
        shift = (jnp.arange(win)[None, :, None] ==
                 jnp.arange(wout)[None, None, :] +
                 jnp.arange(kw)[:, None, None]).astype(f32)          # (dj,w,j)
        k = jnp.einsum('dwj,edco->ewcjo', shift, wt)                 # (di,w,ci,j,co)
        return k.reshape(kh * win * cin, wout * cout)                # stacked along K

    def pool_w(win, c):
        sel = 0.5 * (jnp.arange(win)[:, None] // 2 ==
                     jnp.arange(win // 2)[None, :]).astype(f32)      # (win, wout)
        return jnp.einsum('jk,cd->jckd', sel,
                          jnp.eye(c, dtype=f32)).reshape(win * c, (win // 2) * c)

    def pool_h(hin):
        return 0.5 * (jnp.arange(hin)[None, :] // 2 ==
                      jnp.arange(hin // 2)[:, None]).astype(f32)     # (hout, hin)

    # FC1 rows: torch flatten order (c, h, w) -> kernel order f = h*80 + w*16 + c.
    fc1w = p["fc1_w"].reshape(16, 5, 5, 120).transpose(1, 2, 0, 3).reshape(400, 120)
    # FC3 zero-padded to 128 output lanes (lane-dense, unmasked output store).
    fc3w = jnp.pad(p["fc3_w"], ((0, 0), (0, 118)))
    fc3b = jnp.pad(p["fc3_b"], (0, 118))

    return dict(
        k1=band(p["conv1_w"], 32, 28).astype(bf16),                  # (160, 168)
        b1=jnp.tile(p["conv1_b"], 28).reshape(1, 168).astype(f32),
        qw1=pool_w(28, 6).astype(bf16),                              # (168, 84)
        ph1=pool_h(28).astype(bf16),                                 # (14, 28)
        k2=band(p["conv2_w"], 14, 10).astype(bf16),                  # (420, 160)
        b2=jnp.tile(p["conv2_b"], 10).reshape(1, 160).astype(f32),
        qw2=pool_w(10, 16).astype(bf16),                             # (160, 80)
        ph2=pool_h(10).astype(bf16),                                 # (5, 10)
        fc1w=fc1w.astype(bf16),                                      # (400, 120)
        fc1b=p["fc1_b"].reshape(1, 120).astype(f32),
        fc2w=p["fc2_w"].astype(bf16),                                # (120, 84)
        fc2b=p["fc2_b"].reshape(1, 84).astype(f32),
        fc3w=fc3w.astype(bf16),                                      # (84, 128)
        fc3b=fc3b.reshape(1, 128).astype(f32),
    )


# --------------------------------- wrapper ---------------------------------- #

_WEIGHT_ORDER = ("k1", "b1", "qw1", "ph1", "k2", "b2", "qw2", "ph2",
                 "fc1w", "fc1b", "fc2w", "fc2b", "fc3w", "fc3b")


def _choose_tb(batch):
    # Batch tile: multiple of 8 (fills MXU sublanes in the FC matmuls), capped
    # at 32 so per-step code/activations stay small and larger batches produce
    # several grid steps (v7x 2-TC balance, v5e/v7x VMEM budgets).
    return int(max(8, min(32, 8 * ((batch + 7) // 8))))


def _forward_impl(x_nchw, w):
    B = x_nchw.shape[0]
    TB = _choose_tb(B)
    B_pad = ((B + TB - 1) // TB) * TB

    # One pad op covers both batch padding (to a multiple of TB) and conv1's
    # spatial padding (2,2); cast to bf16 once so the input DMA is half-width.
    x = jnp.pad(x_nchw[:, 0], ((0, B_pad - B), (2, 2), (2, 2))).astype(jnp.bfloat16)

    weights = [w[n] for n in _WEIGHT_ORDER]

    def full_spec(a):
        return pl.BlockSpec(a.shape, lambda b, _nd=a.ndim: (0,) * _nd)

    flops_per_img = 2 * (28 * 160 * 168 + 28 * 168 * 84 + 14 * 28 * 84
                         + 10 * 420 * 160 + 10 * 160 * 80 + 5 * 10 * 80
                         + 400 * 120 + 120 * 84 + 84 * 128)
    trans_per_img = 2 * (28 * 168 + 10 * 160 + 120 + 84)
    bytes_w = sum(int(np.prod(a.shape)) * a.dtype.itemsize for a in weights)

    out = pl.pallas_call(
        functools.partial(_lenet_kernel, TB),
        out_shape=jax.ShapeDtypeStruct((B_pad, 128), jnp.float32),
        grid=(B_pad // TB,),
        in_specs=[pl.BlockSpec((TB, 32, 32), lambda b: (b, 0, 0))]
                 + [full_spec(a) for a in weights],
        out_specs=pl.BlockSpec((TB, 128), lambda b: (b, 0)),
        scratch_shapes=[pltpu.VMEM((TB, 400), jnp.float32)],
        compiler_params=pltpu.CompilerParams(
            dimension_semantics=("parallel",)),
        cost_estimate=pl.CostEstimate(
            flops=B_pad * flops_per_img,
            transcendentals=B_pad * trans_per_img,
            bytes_accessed=int(x.size) * 2 + bytes_w + B_pad * 128 * 4),
    )(x, *weights)
    return out[:B, :10]


neural_net_forward = jax.jit(_forward_impl)


# ------------------------------ parameter init ------------------------------ #

def init_params(key):
    def uinit(k, shape, fan_in):
        bound = 1.0 / np.sqrt(fan_in)
        return jax.random.uniform(k, shape, jnp.float32, -bound, bound)

    ks = jax.random.split(key, 10)
    return {
        "conv1_w": uinit(ks[0], (6, 1, 5, 5), 1 * 5 * 5),
        "conv1_b": uinit(ks[1], (6,), 1 * 5 * 5),
        "conv2_w": uinit(ks[2], (16, 6, 5, 5), 6 * 5 * 5),
        "conv2_b": uinit(ks[3], (16,), 6 * 5 * 5),
        "fc1_w": uinit(ks[4], (400, 120), 400),
        "fc1_b": uinit(ks[5], (120,), 400),
        "fc2_w": uinit(ks[6], (120, 84), 120),
        "fc2_b": uinit(ks[7], (84,), 120),
        "fc3_w": uinit(ks[8], (84, 10), 84),
        "fc3_b": uinit(ks[9], (10,), 84),
    }


if __name__ == "__main__":
    key = jax.random.PRNGKey(0)
    pkey, xkey = jax.random.split(key)
    params = init_params(pkey)
    prepared = prepare_params(params)
    # FC1 expects 16*5*5 features => input must be (B, 1, 28, 28).
    x = jax.random.normal(xkey, (2, 1, 28, 28), jnp.float32)
    logits = neural_net_forward(x, prepared)
    jax.block_until_ready(logits)
    assert logits.shape == (2, 10)
    print("KERNEL_OK")
</pallas_src>

<mosaic_0001>
module attributes {stable_mosaic.version = 11 : i64} {
  func.func @_lenet_kernel(%arg0: i32, %arg1: memref<8x32x32xbf16, #tpu.memory_space<vmem>>, %arg2: memref<160x168xbf16, #tpu.memory_space<vmem>>, %arg3: memref<1x168xf32, #tpu.memory_space<vmem>>, %arg4: memref<168x84xbf16, #tpu.memory_space<vmem>>, %arg5: memref<14x28xbf16, #tpu.memory_space<vmem>>, %arg6: memref<420x160xbf16, #tpu.memory_space<vmem>>, %arg7: memref<1x160xf32, #tpu.memory_space<vmem>>, %arg8: memref<160x80xbf16, #tpu.memory_space<vmem>>, %arg9: memref<5x10xbf16, #tpu.memory_space<vmem>>, %arg10: memref<400x120xbf16, #tpu.memory_space<vmem>>, %arg11: memref<1x120xf32, #tpu.memory_space<vmem>>, %arg12: memref<120x84xbf16, #tpu.memory_space<vmem>>, %arg13: memref<1x84xf32, #tpu.memory_space<vmem>>, %arg14: memref<84x128xbf16, #tpu.memory_space<vmem>>, %arg15: memref<1x128xf32, #tpu.memory_space<vmem>>, %arg16: memref<8x128xf32, #tpu.memory_space<vmem>>, %arg17: memref<8x400xf32, #tpu.memory_space<vmem>>) attributes {dimension_semantics = [#tpu.dimension_semantics<parallel>], iteration_bounds = array<i64: 1>, scalar_prefetch = 0 : i64, scratch_operands = 1 : i64, tpu.core_type = #tpu.core_type<tc>, window_params = [{transform_indices = @transform_0, window_bounds = array<i64: 8, 32, 32>}, {pipeline_mode = #tpu.pipeline_mode<synchronous>, transform_indices = @transform_1, window_bounds = array<i64: 160, 168>}, {pipeline_mode = #tpu.pipeline_mode<synchronous>, transform_indices = @transform_2, window_bounds = array<i64: 1, 168>}, {pipeline_mode = #tpu.pipeline_mode<synchronous>, transform_indices = @transform_3, window_bounds = array<i64: 168, 84>}, {pipeline_mode = #tpu.pipeline_mode<synchronous>, transform_indices = @transform_4, window_bounds = array<i64: 14, 28>}, {pipeline_mode = #tpu.pipeline_mode<synchronous>, transform_indices = @transform_5, window_bounds = array<i64: 420, 160>}, {pipeline_mode = #tpu.pipeline_mode<synchronous>, transform_indices = @transform_6, window_bounds = array<i64: 1, 160>}, {pipeline_mode = #tpu.pipeline_mode<synchronous>, transform_indices = @transform_7, window_bounds = array<i64: 160, 80>}, {pipeline_mode = #tpu.pipeline_mode<synchronous>, transform_indices = @transform_8, window_bounds = array<i64: 5, 10>}, {pipeline_mode = #tpu.pipeline_mode<synchronous>, transform_indices = @transform_9, window_bounds = array<i64: 400, 120>}, {pipeline_mode = #tpu.pipeline_mode<synchronous>, transform_indices = @transform_10, window_bounds = array<i64: 1, 120>}, {pipeline_mode = #tpu.pipeline_mode<synchronous>, transform_indices = @transform_11, window_bounds = array<i64: 120, 84>}, {pipeline_mode = #tpu.pipeline_mode<synchronous>, transform_indices = @transform_12, window_bounds = array<i64: 1, 84>}, {pipeline_mode = #tpu.pipeline_mode<synchronous>, transform_indices = @transform_13, window_bounds = array<i64: 84, 128>}, {pipeline_mode = #tpu.pipeline_mode<synchronous>, transform_indices = @transform_14, window_bounds = array<i64: 1, 128>}, {transform_indices = @transform_15, window_bounds = array<i64: 8, 128>}]} {
    %c0 = arith.constant 0 : index
    %c0_0 = arith.constant 0 : index
    %0 = vector.load %arg2[%c0, %c0_0] : memref<160x168xbf16, #tpu.memory_space<vmem>>, vector<160x168xbf16>
    %c0_1 = arith.constant 0 : index
    %c0_2 = arith.constant 0 : index
    %1 = vector.load %arg4[%c0_1, %c0_2] : memref<168x84xbf16, #tpu.memory_space<vmem>>, vector<168x84xbf16>
    %c0_3 = arith.constant 0 : index
    %c0_4 = arith.constant 0 : index
    %2 = vector.load %arg5[%c0_3, %c0_4] : memref<14x28xbf16, #tpu.memory_space<vmem>>, vector<14x28xbf16>
    %c0_5 = arith.constant 0 : index
    %c0_6 = arith.constant 0 : index
    %3 = vector.load %arg6[%c0_5, %c0_6] : memref<420x160xbf16, #tpu.memory_space<vmem>>, vector<420x160xbf16>
    %c0_7 = arith.constant 0 : index
    %c0_8 = arith.constant 0 : index
    %4 = vector.load %arg8[%c0_7, %c0_8] : memref<160x80xbf16, #tpu.memory_space<vmem>>, vector<160x80xbf16>
    %c0_9 = arith.constant 0 : index
    %c0_10 = arith.constant 0 : index
    %5 = vector.load %arg9[%c0_9, %c0_10] : memref<5x10xbf16, #tpu.memory_space<vmem>>, vector<5x10xbf16>
    %c0_11 = arith.constant 0 : index
    %c0_12 = arith.constant 0 : index
    %6 = vector.load %arg3[%c0_11, %c0_12] : memref<1x168xf32, #tpu.memory_space<vmem>>, vector<1x168xf32>
    %c0_13 = arith.constant 0 : index
    %c0_14 = arith.constant 0 : index
    %7 = vector.load %arg7[%c0_13, %c0_14] : memref<1x160xf32, #tpu.memory_space<vmem>>, vector<1x160xf32>
    %c0_15 = arith.constant 0 : index
    %c0_16 = arith.constant 0 : index
    %c0_17 = arith.constant 0 : index
    %8 = vector.load %arg1[%c0_15, %c0_16, %c0_17] : memref<8x32x32xbf16, #tpu.memory_space<vmem>>, vector<1x32x32xbf16>
    %9 = vector.shape_cast %8 : vector<1x32x32xbf16> to vector<32x32xbf16>
    %10 = vector.extract_strided_slice %9 {offsets = [0, 0], sizes = [28, 32], strides = [1, 1]} : vector<32x32xbf16> to vector<28x32xbf16>
    %11 = vector.extract_strided_slice %9 {offsets = [1, 0], sizes = [28, 32], strides = [1, 1]} : vector<32x32xbf16> to vector<28x32xbf16>
    %12 = vector.extract_strided_slice %9 {offsets = [2, 0], sizes = [28, 32], strides = [1, 1]} : vector<32x32xbf16> to vector<28x32xbf16>
    %13 = vector.extract_strided_slice %9 {offsets = [3, 0], sizes = [28, 32], strides = [1, 1]} : vector<32x32xbf16> to vector<28x32xbf16>
    %14 = vector.extract_strided_slice %9 {offsets = [4, 0], sizes = [28, 32], strides = [1, 1]} : vector<32x32xbf16> to vector<28x32xbf16>
    %15 = tpu.concatenate %10, %11, %12, %13, %14 in 1 : vector<28x32xbf16>, vector<28x32xbf16>, vector<28x32xbf16>, vector<28x32xbf16>, vector<28x32xbf16> -> vector<28x160xbf16>
    %cst = arith.constant dense<0.000000e+00> : vector<28x168xf32>
    %16 = tpu.matmul %15, %0, %cst {dimension_numbers = #tpu.dot_dimension_numbers<[1], [0], [0], [1], [0, 0, 1, 1], [], []>} : vector<28x160xbf16>, vector<160x168xbf16>, vector<28x168xf32> -> vector<28x168xf32>
    %17 = vector.broadcast %6 : vector<1x168xf32> to vector<28x168xf32>
    %18 = arith.addf %16, %17 : vector<28x168xf32>
    %cst_18 = arith.constant 0.000000e+00 : f32
    %19 = vector.broadcast %cst_18 : f32 to vector<28x168xf32>
    %20 = arith.subf %19, %18 : vector<28x168xf32>
    %21 = math.exp %20 : vector<28x168xf32>
    %cst_19 = arith.constant 1.000000e+00 : f32
    %22 = vector.broadcast %cst_19 : f32 to vector<28x168xf32>
    %23 = arith.addf %22, %21 : vector<28x168xf32>
    %24 = tpu.reciprocal %23 {approx = true} : vector<28x168xf32> -> vector<28x168xf32>
    %25 = arith.truncf %24 : vector<28x168xf32> to vector<28x168xbf16>
    %cst_20 = arith.constant dense<0.000000e+00> : vector<28x84xf32>
    %26 = tpu.matmul %25, %1, %cst_20 {dimension_numbers = #tpu.dot_dimension_numbers<[1], [0], [0], [1], [0, 0, 1, 1], [], []>} : vector<28x168xbf16>, vector<168x84xbf16>, vector<28x84xf32> -> vector<28x84xf32>
    %27 = arith.truncf %26 : vector<28x84xf32> to vector<28x84xbf16>
    %cst_21 = arith.constant dense<0.000000e+00> : vector<14x84xf32>
    %28 = tpu.matmul %2, %27, %cst_21 {dimension_numbers = #tpu.dot_dimension_numbers<[1], [0], [0], [1], [0, 0, 1, 1], [], []>} : vector<14x28xbf16>, vector<28x84xbf16>, vector<14x84xf32> -> vector<14x84xf32>
    %29 = arith.truncf %28 : vector<14x84xf32> to vector<14x84xbf16>
    %30 = vector.extract_strided_slice %29 {offsets = [0, 0], sizes = [10, 84], strides = [1, 1]} : vector<14x84xbf16> to vector<10x84xbf16>
    %31 = vector.extract_strided_slice %29 {offsets = [1, 0], sizes = [10, 84], strides = [1, 1]} : vector<14x84xbf16> to vector<10x84xbf16>
    %32 = vector.extract_strided_slice %29 {offsets = [2, 0], sizes = [10, 84], strides = [1, 1]} : vector<14x84xbf16> to vector<10x84xbf16>
    %33 = vector.extract_strided_slice %29 {offsets = [3, 0], sizes = [10, 84], strides = [1, 1]} : vector<14x84xbf16> to vector<10x84xbf16>
    %34 = vector.extract_strided_slice %29 {offsets = [4, 0], sizes = [10, 84], strides = [1, 1]} : vector<14x84xbf16> to vector<10x84xbf16>
    %35 = tpu.concatenate %30, %31, %32, %33, %34 in 1 : vector<10x84xbf16>, vector<10x84xbf16>, vector<10x84xbf16>, vector<10x84xbf16>, vector<10x84xbf16> -> vector<10x420xbf16>
    %cst_22 = arith.constant dense<0.000000e+00> : vector<10x160xf32>
    %36 = tpu.matmul %35, %3, %cst_22 {dimension_numbers = #tpu.dot_dimension_numbers<[1], [0], [0], [1], [0, 0, 1, 1], [], []>} : vector<10x420xbf16>, vector<420x160xbf16>, vector<10x160xf32> -> vector<10x160xf32>
    %37 = vector.broadcast %7 : vector<1x160xf32> to vector<10x160xf32>
    %38 = arith.addf %36, %37 : vector<10x160xf32>
    %cst_23 = arith.constant 0.000000e+00 : f32
    %39 = vector.broadcast %cst_23 : f32 to vector<10x160xf32>
    %40 = arith.subf %39, %38 : vector<10x160xf32>
    %41 = math.exp %40 : vector<10x160xf32>
    %cst_24 = arith.constant 1.000000e+00 : f32
    %42 = vector.broadcast %cst_24 : f32 to vector<10x160xf32>
    %43 = arith.addf %42, %41 : vector<10x160xf32>
    %44 = tpu.reciprocal %43 {approx = true} : vector<10x160xf32> -> vector<10x160xf32>
    %45 = arith.truncf %44 : vector<10x160xf32> to vector<10x160xbf16>
    %cst_25 = arith.constant dense<0.000000e+00> : vector<10x80xf32>
    %46 = tpu.matmul %45, %4, %cst_25 {dimension_numbers = #tpu.dot_dimension_numbers<[1], [0], [0], [1], [0, 0, 1, 1], [], []>} : vector<10x160xbf16>, vector<160x80xbf16>, vector<10x80xf32> -> vector<10x80xf32>
    %47 = arith.truncf %46 : vector<10x80xf32> to vector<10x80xbf16>
    %cst_26 = arith.constant dense<0.000000e+00> : vector<5x80xf32>
    %48 = tpu.matmul %5, %47, %cst_26 {dimension_numbers = #tpu.dot_dimension_numbers<[1], [0], [0], [1], [0, 0, 1, 1], [], []>} : vector<5x10xbf16>, vector<10x80xbf16>, vector<5x80xf32> -> vector<5x80xf32>
    %49 = vector.extract_strided_slice %48 {offsets = [0, 0], sizes = [1, 80], strides = [1, 1]} : vector<5x80xf32> to vector<1x80xf32>
    %c0_27 = arith.constant 0 : index
    %c0_28 = arith.constant 0 : index
    %50 = vector.load %arg17[%c0_27, %c0_28] : memref<8x400xf32, #tpu.memory_space<vmem>>, vector<1x80xf32>
    tpu.vector_store %arg17[%c0_27, %c0_28], %49 {strides = array<i32>} : memref<8x400xf32, #tpu.memory_space<vmem>>, vector<1x80xf32>,
    %51 = vector.extract_strided_slice %48 {offsets = [1, 0], sizes = [1, 80], strides = [1, 1]} : vector<5x80xf32> to vector<1x80xf32>
    %c0_29 = arith.constant 0 : index
    %c80 = arith.constant 80 : index
    %52 = vector.load %arg17[%c0_29, %c80] : memref<8x400xf32, #tpu.memory_space<vmem>>, vector<1x80xf32>
    tpu.vector_store %arg17[%c0_29, %c80], %51 {strides = array<i32>} : memref<8x400xf32, #tpu.memory_space<vmem>>, vector<1x80xf32>,
    %53 = vector.extract_strided_slice %48 {offsets = [2, 0], sizes = [1, 80], strides = [1, 1]} : vector<5x80xf32> to vector<1x80xf32>
    %c0_30 = arith.constant 0 : index
    %c160 = arith.constant 160 : index
    %54 = vector.load %arg17[%c0_30, %c160] : memref<8x400xf32, #tpu.memory_space<vmem>>, vector<1x80xf32>
    tpu.vector_store %arg17[%c0_30, %c160], %53 {strides = array<i32>} : memref<8x400xf32, #tpu.memory_space<vmem>>, vector<1x80xf32>,
    %55 = vector.extract_strided_slice %48 {offsets = [3, 0], sizes = [1, 80], strides = [1, 1]} : vector<5x80xf32> to vector<1x80xf32>
    %c0_31 = arith.constant 0 : index
    %c240 = arith.constant 240 : index
    %56 = vector.load %arg17[%c0_31, %c240] : memref<8x400xf32, #tpu.memory_space<vmem>>, vector<1x80xf32>
    tpu.vector_store %arg17[%c0_31, %c240], %55 {strides = array<i32>} : memref<8x400xf32, #tpu.memory_space<vmem>>, vector<1x80xf32>,
    %57 = vector.extract_strided_slice %48 {offsets = [4, 0], sizes = [1, 80], strides = [1, 1]} : vector<5x80xf32> to vector<1x80xf32>
    %c0_32 = arith.constant 0 : index
    %c320 = arith.constant 320 : index
    %58 = vector.load %arg17[%c0_32, %c320] : memref<8x400xf32, #tpu.memory_space<vmem>>, vector<1x80xf32>
    tpu.vector_store %arg17[%c0_32, %c320], %57 {strides = array<i32>} : memref<8x400xf32, #tpu.memory_space<vmem>>, vector<1x80xf32>,
    %c1 = arith.constant 1 : index
    %c0_33 = arith.constant 0 : index
    %c0_34 = arith.constant 0 : index
    %59 = vector.load %arg1[%c1, %c0_33, %c0_34] : memref<8x32x32xbf16, #tpu.memory_space<vmem>>, vector<1x32x32xbf16>
    %60 = vector.shape_cast %59 : vector<1x32x32xbf16> to vector<32x32xbf16>
    %61 = vector.extract_strided_slice %60 {offsets = [0, 0], sizes = [28, 32], strides = [1, 1]} : vector<32x32xbf16> to vector<28x32xbf16>
    %62 = vector.extract_strided_slice %60 {offsets = [1, 0], sizes = [28, 32], strides = [1, 1]} : vector<32x32xbf16> to vector<28x32xbf16>
    %63 = vector.extract_strided_slice %60 {offsets = [2, 0], sizes = [28, 32], strides = [1, 1]} : vector<32x32xbf16> to vector<28x32xbf16>
    %64 = vector.extract_strided_slice %60 {offsets = [3, 0], sizes = [28, 32], strides = [1, 1]} : vector<32x32xbf16> to vector<28x32xbf16>
    %65 = vector.extract_strided_slice %60 {offsets = [4, 0], sizes = [28, 32], strides = [1, 1]} : vector<32x32xbf16> to vector<28x32xbf16>
    %66 = tpu.concatenate %61, %62, %63, %64, %65 in 1 : vector<28x32xbf16>, vector<28x32xbf16>, vector<28x32xbf16>, vector<28x32xbf16>, vector<28x32xbf16> -> vector<28x160xbf16>
    %cst_35 = arith.constant dense<0.000000e+00> : vector<28x168xf32>
    %67 = tpu.matmul %66, %0, %cst_35 {dimension_numbers = #tpu.dot_dimension_numbers<[1], [0], [0], [1], [0, 0, 1, 1], [], []>} : vector<28x160xbf16>, vector<160x168xbf16>, vector<28x168xf32> -> vector<28x168xf32>
    %68 = vector.broadcast %6 : vector<1x168xf32> to vector<28x168xf32>
    %69 = arith.addf %67, %68 : vector<28x168xf32>
    %cst_36 = arith.constant 0.000000e+00 : f32
    %70 = vector.broadcast %cst_36 : f32 to vector<28x168xf32>
    %71 = arith.subf %70, %69 : vector<28x168xf32>
    %72 = math.exp %71 : vector<28x168xf32>
    %cst_37 = arith.constant 1.000000e+00 : f32
    %73 = vector.broadcast %cst_37 : f32 to vector<28x168xf32>
    %74 = arith.addf %73, %72 : vector<28x168xf32>
    %75 = tpu.reciprocal %74 {approx = true} : vector<28x168xf32> -> vector<28x168xf32>
    %76 = arith.truncf %75 : vector<28x168xf32> to vector<28x168xbf16>
    %cst_38 = arith.constant dense<0.000000e+00> : vector<28x84xf32>
    %77 = tpu.matmul %76, %1, %cst_38 {dimension_numbers = #tpu.dot_dimension_numbers<[1], [0], [0], [1], [0, 0, 1, 1], [], []>} : vector<28x168xbf16>, vector<168x84xbf16>, vector<28x84xf32> -> vector<28x84xf32>
    %78 = arith.truncf %77 : vector<28x84xf32> to vector<28x84xbf16>
    %cst_39 = arith.constant dense<0.000000e+00> : vector<14x84xf32>
    %79 = tpu.matmul %2, %78, %cst_39 {dimension_numbers = #tpu.dot_dimension_numbers<[1], [0], [0], [1], [0, 0, 1, 1], [], []>} : vector<14x28xbf16>, vector<28x84xbf16>, vector<14x84xf32> -> vector<14x84xf32>
    %80 = arith.truncf %79 : vector<14x84xf32> to vector<14x84xbf16>
    %81 = vector.extract_strided_slice %80 {offsets = [0, 0], sizes = [10, 84], strides = [1, 1]} : vector<14x84xbf16> to vector<10x84xbf16>
    %82 = vector.extract_strided_slice %80 {offsets = [1, 0], sizes = [10, 84], strides = [1, 1]} : vector<14x84xbf16> to vector<10x84xbf16>
    %83 = vector.extract_strided_slice %80 {offsets = [2, 0], sizes = [10, 84], strides = [1, 1]} : vector<14x84xbf16> to vector<10x84xbf16>
    %84 = vector.extract_strided_slice %80 {offsets = [3, 0], sizes = [10, 84], strides = [1, 1]} : vector<14x84xbf16> to vector<10x84xbf16>
    %85 = vector.extract_strided_slice %80 {offsets = [4, 0], sizes = [10, 84], strides = [1, 1]} : vector<14x84xbf16> to vector<10x84xbf16>
    %86 = tpu.concatenate %81, %82, %83, %84, %85 in 1 : vector<10x84xbf16>, vector<10x84xbf16>, vector<10x84xbf16>, vector<10x84xbf16>, vector<10x84xbf16> -> vector<10x420xbf16>
    %cst_40 = arith.constant dense<0.000000e+00> : vector<10x160xf32>
    %87 = tpu.matmul %86, %3, %cst_40 {dimension_numbers = #tpu.dot_dimension_numbers<[1], [0], [0], [1], [0, 0, 1, 1], [], []>} : vector<10x420xbf16>, vector<420x160xbf16>, vector<10x160xf32> -> vector<10x160xf32>
    %88 = vector.broadcast %7 : vector<1x160xf32> to vector<10x160xf32>
    %89 = arith.addf %87, %88 : vector<10x160xf32>
    %cst_41 = arith.constant 0.000000e+00 : f32
    %90 = vector.broadcast %cst_41 : f32 to vector<10x160xf32>
    %91 = arith.subf %90, %89 : vector<10x160xf32>
    %92 = math.exp %91 : vector<10x160xf32>
    %cst_42 = arith.constant 1.000000e+00 : f32
    %93 = vector.broadcast %cst_42 : f32 to vector<10x160xf32>
    %94 = arith.addf %93, %92 : vector<10x160xf32>
    %95 = tpu.reciprocal %94 {approx = true} : vector<10x160xf32> -> vector<10x160xf32>
    %96 = arith.truncf %95 : vector<10x160xf32> to vector<10x160xbf16>
    %cst_43 = arith.constant dense<0.000000e+00> : vector<10x80xf32>
    %97 = tpu.matmul %96, %4, %cst_43 {dimension_numbers = #tpu.dot_dimension_numbers<[1], [0], [0], [1], [0, 0, 1, 1], [], []>} : vector<10x160xbf16>, vector<160x80xbf16>, vector<10x80xf32> -> vector<10x80xf32>
    %98 = arith.truncf %97 : vector<10x80xf32> to vector<10x80xbf16>
    %cst_44 = arith.constant dense<0.000000e+00> : vector<5x80xf32>
    %99 = tpu.matmul %5, %98, %cst_44 {dimension_numbers = #tpu.dot_dimension_numbers<[1], [0], [0], [1], [0, 0, 1, 1], [], []>} : vector<5x10xbf16>, vector<10x80xbf16>, vector<5x80xf32> -> vector<5x80xf32>
    %100 = vector.extract_strided_slice %99 {offsets = [0, 0], sizes = [1, 80], strides = [1, 1]} : vector<5x80xf32> to vector<1x80xf32>
    %c1_45 = arith.constant 1 : index
    %c0_46 = arith.constant 0 : index
    %101 = vector.load %arg17[%c1_45, %c0_46] : memref<8x400xf32, #tpu.memory_space<vmem>>, vector<1x80xf32>
    tpu.vector_store %arg17[%c1_45, %c0_46], %100 {strides = array<i32>} : memref<8x400xf32, #tpu.memory_space<vmem>>, vector<1x80xf32>,
    %102 = vector.extract_strided_slice %99 {offsets = [1, 0], sizes = [1, 80], strides = [1, 1]} : vector<5x80xf32> to vector<1x80xf32>
    %c1_47 = arith.constant 1 : index
    %c80_48 = arith.constant 80 : index
    %103 = vector.load %arg17[%c1_47, %c80_48] : memref<8x400xf32, #tpu.memory_space<vmem>>, vector<1x80xf32>
    tpu.vector_store %arg17[%c1_47, %c80_48], %102 {strides = array<i32>} : memref<8x400xf32, #tpu.memory_space<vmem>>, vector<1x80xf32>,
    %104 = vector.extract_strided_slice %99 {offsets = [2, 0], sizes = [1, 80], strides = [1, 1]} : vector<5x80xf32> to vector<1x80xf32>
    %c1_49 = arith.constant 1 : index
    %c160_50 = arith.constant 160 : index
    %105 = vector.load %arg17[%c1_49, %c160_50] : memref<8x400xf32, #tpu.memory_space<vmem>>, vector<1x80xf32>
    tpu.vector_store %arg17[%c1_49, %c160_50], %104 {strides = array<i32>} : memref<8x400xf32, #tpu.memory_space<vmem>>, vector<1x80xf32>,
    %106 = vector.extract_strided_slice %99 {offsets = [3, 0], sizes = [1, 80], strides = [1, 1]} : vector<5x80xf32> to vector<1x80xf32>
    %c1_51 = arith.constant 1 : index
    %c240_52 = arith.constant 240 : index
    %107 = vector.load %arg17[%c1_51, %c240_52] : memref<8x400xf32, #tpu.memory_space<vmem>>, vector<1x80xf32>
    tpu.vector_store %arg17[%c1_51, %c240_52], %106 {strides = array<i32>} : memref<8x400xf32, #tpu.memory_space<vmem>>, vector<1x80xf32>,
    %108 = vector.extract_strided_slice %99 {offsets = [4, 0], sizes = [1, 80], strides = [1, 1]} : vector<5x80xf32> to vector<1x80xf32>
    %c1_53 = arith.constant 1 : index
    %c320_54 = arith.constant 320 : index
    %109 = vector.load %arg17[%c1_53, %c320_54] : memref<8x400xf32, #tpu.memory_space<vmem>>, vector<1x80xf32>
    tpu.vector_store %arg17[%c1_53, %c320_54], %108 {strides = array<i32>} : memref<8x400xf32, #tpu.memory_space<vmem>>, vector<1x80xf32>,
    %c2 = arith.constant 2 : index
    %c0_55 = arith.constant 0 : index
    %c0_56 = arith.constant 0 : index
    %110 = vector.load %arg1[%c2, %c0_55, %c0_56] : memref<8x32x32xbf16, #tpu.memory_space<vmem>>, vector<1x32x32xbf16>
    %111 = vector.shape_cast %110 : vector<1x32x32xbf16> to vector<32x32xbf16>
    %112 = vector.extract_strided_slice %111 {offsets = [0, 0], sizes = [28, 32], strides = [1, 1]} : vector<32x32xbf16> to vector<28x32xbf16>
    %113 = vector.extract_strided_slice %111 {offsets = [1, 0], sizes = [28, 32], strides = [1, 1]} : vector<32x32xbf16> to vector<28x32xbf16>
    %114 = vector.extract_strided_slice %111 {offsets = [2, 0], sizes = [28, 32], strides = [1, 1]} : vector<32x32xbf16> to vector<28x32xbf16>
    %115 = vector.extract_strided_slice %111 {offsets = [3, 0], sizes = [28, 32], strides = [1, 1]} : vector<32x32xbf16> to vector<28x32xbf16>
    %116 = vector.extract_strided_slice %111 {offsets = [4, 0], sizes = [28, 32], strides = [1, 1]} : vector<32x32xbf16> to vector<28x32xbf16>
    %117 = tpu.concatenate %112, %113, %114, %115, %116 in 1 : vector<28x32xbf16>, vector<28x32xbf16>, vector<28x32xbf16>, vector<28x32xbf16>, vector<28x32xbf16> -> vector<28x160xbf16>
    %cst_57 = arith.constant dense<0.000000e+00> : vector<28x168xf32>
    %118 = tpu.matmul %117, %0, %cst_57 {dimension_numbers = #tpu.dot_dimension_numbers<[1], [0], [0], [1], [0, 0, 1, 1], [], []>} : vector<28x160xbf16>, vector<160x168xbf16>, vector<28x168xf32> -> vector<28x168xf32>
    %119 = vector.broadcast %6 : vector<1x168xf32> to vector<28x168xf32>
    %120 = arith.addf %118, %119 : vector<28x168xf32>
    %cst_58 = arith.constant 0.000000e+00 : f32
    %121 = vector.broadcast %cst_58 : f32 to vector<28x168xf32>
    %122 = arith.subf %121, %120 : vector<28x168xf32>
    %123 = math.exp %122 : vector<28x168xf32>
    %cst_59 = arith.constant 1.000000e+00 : f32
    %124 = vector.broadcast %cst_59 : f32 to vector<28x168xf32>
    %125 = arith.addf %124, %123 : vector<28x168xf32>
    %126 = tpu.reciprocal %125 {approx = true} : vector<28x168xf32> -> vector<28x168xf32>
    %127 = arith.truncf %126 : vector<28x168xf32> to vector<28x168xbf16>
    %cst_60 = arith.constant dense<0.000000e+00> : vector<28x84xf32>
    %128 = tpu.matmul %127, %1, %cst_60 {dimension_numbers = #tpu.dot_dimension_numbers<[1], [0], [0], [1], [0, 0, 1, 1], [], []>} : vector<28x168xbf16>, vector<168x84xbf16>, vector<28x84xf32> -> vector<28x84xf32>
    %129 = arith.truncf %128 : vector<28x84xf32> to vector<28x84xbf16>
    %cst_61 = arith.constant dense<0.000000e+00> : vector<14x84xf32>
    %130 = tpu.matmul %2, %129, %cst_61 {dimension_numbers = #tpu.dot_dimension_numbers<[1], [0], [0], [1], [0, 0, 1, 1], [], []>} : vector<14x28xbf16>, vector<28x84xbf16>, vector<14x84xf32> -> vector<14x84xf32>
    %131 = arith.truncf %130 : vector<14x84xf32> to vector<14x84xbf16>
    %132 = vector.extract_strided_slice %131 {offsets = [0, 0], sizes = [10, 84], strides = [1, 1]} : vector<14x84xbf16> to vector<10x84xbf16>
    %133 = vector.extract_strided_slice %131 {offsets = [1, 0], sizes = [10, 84], strides = [1, 1]} : vector<14x84xbf16> to vector<10x84xbf16>
    %134 = vector.extract_strided_slice %131 {offsets = [2, 0], sizes = [10, 84], strides = [1, 1]} : vector<14x84xbf16> to vector<10x84xbf16>
    %135 = vector.extract_strided_slice %131 {offsets = [3, 0], sizes = [10, 84], strides = [1, 1]} : vector<14x84xbf16> to vector<10x84xbf16>
    %136 = vector.extract_strided_slice %131 {offsets = [4, 0], sizes = [10, 84], strides = [1, 1]} : vector<14x84xbf16> to vector<10x84xbf16>
    %137 = tpu.concatenate %132, %133, %134, %135, %136 in 1 : vector<10x84xbf16>, vector<10x84xbf16>, vector<10x84xbf16>, vector<10x84xbf16>, vector<10x84xbf16> -> vector<10x420xbf16>
    %cst_62 = arith.constant dense<0.000000e+00> : vector<10x160xf32>
    %138 = tpu.matmul %137, %3, %cst_62 {dimension_numbers = #tpu.dot_dimension_numbers<[1], [0], [0], [1], [0, 0, 1, 1], [], []>} : vector<10x420xbf16>, vector<420x160xbf16>, vector<10x160xf32> -> vector<10x160xf32>
    %139 = vector.broadcast %7 : vector<1x160xf32> to vector<10x160xf32>
    %140 = arith.addf %138, %139 : vector<10x160xf32>
    %cst_63 = arith.constant 0.000000e+00 : f32
    %141 = vector.broadcast %cst_63 : f32 to vector<10x160xf32>
    %142 = arith.subf %141, %140 : vector<10x160xf32>
    %143 = math.exp %142 : vector<10x160xf32>
    %cst_64 = arith.constant 1.000000e+00 : f32
    %144 = vector.broadcast %cst_64 : f32 to vector<10x160xf32>
    %145 = arith.addf %144, %143 : vector<10x160xf32>
    %146 = tpu.reciprocal %145 {approx = true} : vector<10x160xf32> -> vector<10x160xf32>
    %147 = arith.truncf %146 : vector<10x160xf32> to vector<10x160xbf16>
    %cst_65 = arith.constant dense<0.000000e+00> : vector<10x80xf32>
    %148 = tpu.matmul %147, %4, %cst_65 {dimension_numbers = #tpu.dot_dimension_numbers<[1], [0], [0], [1], [0, 0, 1, 1], [], []>} : vector<10x160xbf16>, vector<160x80xbf16>, vector<10x80xf32> -> vector<10x80xf32>
    %149 = arith.truncf %148 : vector<10x80xf32> to vector<10x80xbf16>
    %cst_66 = arith.constant dense<0.000000e+00> : vector<5x80xf32>
    %150 = tpu.matmul %5, %149, %cst_66 {dimension_numbers = #tpu.dot_dimension_numbers<[1], [0], [0], [1], [0, 0, 1, 1], [], []>} : vector<5x10xbf16>, vector<10x80xbf16>, vector<5x80xf32> -> vector<5x80xf32>
    %151 = vector.extract_strided_slice %150 {offsets = [0, 0], sizes = [1, 80], strides = [1, 1]} : vector<5x80xf32> to vector<1x80xf32>
    %c2_67 = arith.constant 2 : index
    %c0_68 = arith.constant 0 : index
    %152 = vector.load %arg17[%c2_67, %c0_68] : memref<8x400xf32, #tpu.memory_space<vmem>>, vector<1x80xf32>
    tpu.vector_store %arg17[%c2_67, %c0_68], %151 {strides = array<i32>} : memref<8x400xf32, #tpu.memory_space<vmem>>, vector<1x80xf32>,
    %153 = vector.extract_strided_slice %150 {offsets = [1, 0], sizes = [1, 80], strides = [1, 1]} : vector<5x80xf32> to vector<1x80xf32>
    %c2_69 = arith.constant 2 : index
    %c80_70 = arith.constant 80 : index
    %154 = vector.load %arg17[%c2_69, %c80_70] : memref<8x400xf32, #tpu.memory_space<vmem>>, vector<1x80xf32>
    tpu.vector_store %arg17[%c2_69, %c80_70], %153 {strides = array<i32>} : memref<8x400xf32, #tpu.memory_space<vmem>>, vector<1x80xf32>,
    %155 = vector.extract_strided_slice %150 {offsets = [2, 0], sizes = [1, 80], strides = [1, 1]} : vector<5x80xf32> to vector<1x80xf32>
    %c2_71 = arith.constant 2 : index
    %c160_72 = arith.constant 160 : index
    %156 = vector.load %arg17[%c2_71, %c160_72] : memref<8x400xf32, #tpu.memory_space<vmem>>, vector<1x80xf32>
    tpu.vector_store %arg17[%c2_71, %c160_72], %155 {strides = array<i32>} : memref<8x400xf32, #tpu.memory_space<vmem>>, vector<1x80xf32>,
    %157 = vector.extract_strided_slice %150 {offsets = [3, 0], sizes = [1, 80], strides = [1, 1]} : vector<5x80xf32> to vector<1x80xf32>
    %c2_73 = arith.constant 2 : index
    %c240_74 = arith.constant 240 : index
    %158 = vector.load %arg17[%c2_73, %c240_74] : memref<8x400xf32, #tpu.memory_space<vmem>>, vector<1x80xf32>
    tpu.vector_store %arg17[%c2_73, %c240_74], %157 {strides = array<i32>} : memref<8x400xf32, #tpu.memory_space<vmem>>, vector<1x80xf32>,
    %159 = vector.extract_strided_slice %150 {offsets = [4, 0], sizes = [1, 80], strides = [1, 1]} : vector<5x80xf32> to vector<1x80xf32>
    %c2_75 = arith.constant 2 : index
    %c320_76 = arith.constant 320 : index
    %160 = vector.load %arg17[%c2_75, %c320_76] : memref<8x400xf32, #tpu.memory_space<vmem>>, vector<1x80xf32>
    tpu.vector_store %arg17[%c2_75, %c320_76], %159 {strides = array<i32>} : memref<8x400xf32, #tpu.memory_space<vmem>>, vector<1x80xf32>,
    %c3 = arith.constant 3 : index
    %c0_77 = arith.constant 0 : index
    %c0_78 = arith.constant 0 : index
    %161 = vector.load %arg1[%c3, %c0_77, %c0_78] : memref<8x32x32xbf16, #tpu.memory_space<vmem>>, vector<1x32x32xbf16>
    %162 = vector.shape_cast %161 : vector<1x32x32xbf16> to vector<32x32xbf16>
    %163 = vector.extract_strided_slice %162 {offsets = [0, 0], sizes = [28, 32], strides = [1, 1]} : vector<32x32xbf16> to vector<28x32xbf16>
    %164 = vector.extract_strided_slice %162 {offsets = [1, 0], sizes = [28, 32], strides = [1, 1]} : vector<32x32xbf16> to vector<28x32xbf16>
    %165 = vector.extract_strided_slice %162 {offsets = [2, 0], sizes = [28, 32], strides = [1, 1]} : vector<32x32xbf16> to vector<28x32xbf16>
    %166 = vector.extract_strided_slice %162 {offsets = [3, 0], sizes = [28, 32], strides = [1, 1]} : vector<32x32xbf16> to vector<28x32xbf16>
    %167 = vector.extract_strided_slice %162 {offsets = [4, 0], sizes = [28, 32], strides = [1, 1]} : vector<32x32xbf16> to vector<28x32xbf16>
    %168 = tpu.concatenate %163, %164, %165, %166, %167 in 1 : vector<28x32xbf16>, vector<28x32xbf16>, vector<28x32xbf16>, vector<28x32xbf16>, vector<28x32xbf16> -> vector<28x160xbf16>
    %cst_79 = arith.constant dense<0.000000e+00> : vector<28x168xf32>
    %169 = tpu.matmul %168, %0, %cst_79 {dimension_numbers = #tpu.dot_dimension_numbers<[1], [0], [0], [1], [0, 0, 1, 1], [], []>} : vector<28x160xbf16>, vector<160x168xbf16>, vector<28x168xf32> -> vector<28x168xf32>
    %170 = vector.broadcast %6 : vector<1x168xf32> to vector<28x168xf32>
    %171 = arith.addf %169, %170 : vector<28x168xf32>
    %cst_80 = arith.constant 0.000000e+00 : f32
    %172 = vector.broadcast %cst_80 : f32 to vector<28x168xf32>
    %173 = arith.subf %172, %171 : vector<28x168xf32>
    %174 = math.exp %173 : vector<28x168xf32>
    %cst_81 = arith.constant 1.000000e+00 : f32
    %175 = vector.broadcast %cst_81 : f32 to vector<28x168xf32>
    %176 = arith.addf %175, %174 : vector<28x168xf32>
    %177 = tpu.reciprocal %176 {approx = true} : vector<28x168xf32> -> vector<28x168xf32>
    %178 = arith.truncf %177 : vector<28x168xf32> to vector<28x168xbf16>
    %cst_82 = arith.constant dense<0.000000e+00> : vector<28x84xf32>
    %179 = tpu.matmul %178, %1, %cst_82 {dimension_numbers = #tpu.dot_dimension_numbers<[1], [0], [0], [1], [0, 0, 1, 1], [], []>} : vector<28x168xbf16>, vector<168x84xbf16>, vector<28x84xf32> -> vector<28x84xf32>
    %180 = arith.truncf %179 : vector<28x84xf32> to vector<28x84xbf16>
    %cst_83 = arith.constant dense<0.000000e+00> : vector<14x84xf32>
    %181 = tpu.matmul %2, %180, %cst_83 {dimension_numbers = #tpu.dot_dimension_numbers<[1], [0], [0], [1], [0, 0, 1, 1], [], []>} : vector<14x28xbf16>, vector<28x84xbf16>, vector<14x84xf32> -> vector<14x84xf32>
    %182 = arith.truncf %181 : vector<14x84xf32> to vector<14x84xbf16>
    %183 = vector.extract_strided_slice %182 {offsets = [0, 0], sizes = [10, 84], strides = [1, 1]} : vector<14x84xbf16> to vector<10x84xbf16>
    %184 = vector.extract_strided_slice %182 {offsets = [1, 0], sizes = [10, 84], strides = [1, 1]} : vector<14x84xbf16> to vector<10x84xbf16>
    %185 = vector.extract_strided_slice %182 {offsets = [2, 0], sizes = [10, 84], strides = [1, 1]} : vector<14x84xbf16> to vector<10x84xbf16>
    %186 = vector.extract_strided_slice %182 {offsets = [3, 0], sizes = [10, 84], strides = [1, 1]} : vector<14x84xbf16> to vector<10x84xbf16>
    %187 = vector.extract_strided_slice %182 {offsets = [4, 0], sizes = [10, 84], strides = [1, 1]} : vector<14x84xbf16> to vector<10x84xbf16>
    %188 = tpu.concatenate %183, %184, %185, %186, %187 in 1 : vector<10x84xbf16>, vector<10x84xbf16>, vector<10x84xbf16>, vector<10x84xbf16>, vector<10x84xbf16> -> vector<10x420xbf16>
    %cst_84 = arith.constant dense<0.000000e+00> : vector<10x160xf32>
    %189 = tpu.matmul %188, %3, %cst_84 {dimension_numbers = #tpu.dot_dimension_numbers<[1], [0], [0], [1], [0, 0, 1, 1], [], []>} : vector<10x420xbf16>, vector<420x160xbf16>, vector<10x160xf32> -> vector<10x160xf32>
    %190 = vector.broadcast %7 : vector<1x160xf32> to vector<10x160xf32>
    %191 = arith.addf %189, %190 : vector<10x160xf32>
    %cst_85 = arith.constant 0.000000e+00 : f32
    %192 = vector.broadcast %cst_85 : f32 to vector<10x160xf32>
    %193 = arith.subf %192, %191 : vector<10x160xf32>
    %194 = math.exp %193 : vector<10x160xf32>
    %cst_86 = arith.constant 1.000000e+00 : f32
    %195 = vector.broadcast %cst_86 : f32 to vector<10x160xf32>
    %196 = arith.addf %195, %194 : vector<10x160xf32>
    %197 = tpu.reciprocal %196 {approx = true} : vector<10x160xf32> -> vector<10x160xf32>
    %198 = arith.truncf %197 : vector<10x160xf32> to vector<10x160xbf16>
    %cst_87 = arith.constant dense<0.000000e+00> : vector<10x80xf32>
    %199 = tpu.matmul %198, %4, %cst_87 {dimension_numbers = #tpu.dot_dimension_numbers<[1], [0], [0], [1], [0, 0, 1, 1], [], []>} : vector<10x160xbf16>, vector<160x80xbf16>, vector<10x80xf32> -> vector<10x80xf32>
    %200 = arith.truncf %199 : vector<10x80xf32> to vector<10x80xbf16>
    %cst_88 = arith.constant dense<0.000000e+00> : vector<5x80xf32>
    %201 = tpu.matmul %5, %200, %cst_88 {dimension_numbers = #tpu.dot_dimension_numbers<[1], [0], [0], [1], [0, 0, 1, 1], [], []>} : vector<5x10xbf16>, vector<10x80xbf16>, vector<5x80xf32> -> vector<5x80xf32>
    %202 = vector.extract_strided_slice %201 {offsets = [0, 0], sizes = [1, 80], strides = [1, 1]} : vector<5x80xf32> to vector<1x80xf32>
    %c3_89 = arith.constant 3 : index
    %c0_90 = arith.constant 0 : index
    %203 = vector.load %arg17[%c3_89, %c0_90] : memref<8x400xf32, #tpu.memory_space<vmem>>, vector<1x80xf32>
    tpu.vector_store %arg17[%c3_89, %c0_90], %202 {strides = array<i32>} : memref<8x400xf32, #tpu.memory_space<vmem>>, vector<1x80xf32>,
    %204 = vector.extract_strided_slice %201 {offsets = [1, 0], sizes = [1, 80], strides = [1, 1]} : vector<5x80xf32> to vector<1x80xf32>
    %c3_91 = arith.constant 3 : index
    %c80_92 = arith.constant 80 : index
    %205 = vector.load %arg17[%c3_91, %c80_92] : memref<8x400xf32, #tpu.memory_space<vmem>>, vector<1x80xf32>
    tpu.vector_store %arg17[%c3_91, %c80_92], %204 {strides = array<i32>} : memref<8x400xf32, #tpu.memory_space<vmem>>, vector<1x80xf32>,
    %206 = vector.extract_strided_slice %201 {offsets = [2, 0], sizes = [1, 80], strides = [1, 1]} : vector<5x80xf32> to vector<1x80xf32>
    %c3_93 = arith.constant 3 : index
    %c160_94 = arith.constant 160 : index
    %207 = vector.load %arg17[%c3_93, %c160_94] : memref<8x400xf32, #tpu.memory_space<vmem>>, vector<1x80xf32>
    tpu.vector_store %arg17[%c3_93, %c160_94], %206 {strides = array<i32>} : memref<8x400xf32, #tpu.memory_space<vmem>>, vector<1x80xf32>,
    %208 = vector.extract_strided_slice %201 {offsets = [3, 0], sizes = [1, 80], strides = [1, 1]} : vector<5x80xf32> to vector<1x80xf32>
    %c3_95 = arith.constant 3 : index
    %c240_96 = arith.constant 240 : index
    %209 = vector.load %arg17[%c3_95, %c240_96] : memref<8x400xf32, #tpu.memory_space<vmem>>, vector<1x80xf32>
    tpu.vector_store %arg17[%c3_95, %c240_96], %208 {strides = array<i32>} : memref<8x400xf32, #tpu.memory_space<vmem>>, vector<1x80xf32>,
    %210 = vector.extract_strided_slice %201 {offsets = [4, 0], sizes = [1, 80], strides = [1, 1]} : vector<5x80xf32> to vector<1x80xf32>
    %c3_97 = arith.constant 3 : index
    %c320_98 = arith.constant 320 : index
    %211 = vector.load %arg17[%c3_97, %c320_98] : memref<8x400xf32, #tpu.memory_space<vmem>>, vector<1x80xf32>
    tpu.vector_store %arg17[%c3_97, %c320_98], %210 {strides = array<i32>} : memref<8x400xf32, #tpu.memory_space<vmem>>, vector<1x80xf32>,
    %c4 = arith.constant 4 : index
    %c0_99 = arith.constant 0 : index
    %c0_100 = arith.constant 0 : index
    %212 = vector.load %arg1[%c4, %c0_99, %c0_100] : memref<8x32x32xbf16, #tpu.memory_space<vmem>>, vector<1x32x32xbf16>
    %213 = vector.shape_cast %212 : vector<1x32x32xbf16> to vector<32x32xbf16>
    %214 = vector.extract_strided_slice %213 {offsets = [0, 0], sizes = [28, 32], strides = [1, 1]} : vector<32x32xbf16> to vector<28x32xbf16>
    %215 = vector.extract_strided_slice %213 {offsets = [1, 0], sizes = [28, 32], strides = [1, 1]} : vector<32x32xbf16> to vector<28x32xbf16>
    %216 = vector.extract_strided_slice %213 {offsets = [2, 0], sizes = [28, 32], strides = [1, 1]} : vector<32x32xbf16> to vector<28x32xbf16>
    %217 = vector.extract_strided_slice %213 {offsets = [3, 0], sizes = [28, 32], strides = [1, 1]} : vector<32x32xbf16> to vector<28x32xbf16>
    %218 = vector.extract_strided_slice %213 {offsets = [4, 0], sizes = [28, 32], strides = [1, 1]} : vector<32x32xbf16> to vector<28x32xbf16>
    %219 = tpu.concatenate %214, %215, %216, %217, %218 in 1 : vector<28x32xbf16>, vector<28x32xbf16>, vector<28x32xbf16>, vector<28x32xbf16>, vector<28x32xbf16> -> vector<28x160xbf16>
    %cst_101 = arith.constant dense<0.000000e+00> : vector<28x168xf32>
    %220 = tpu.matmul %219, %0, %cst_101 {dimension_numbers = #tpu.dot_dimension_numbers<[1], [0], [0], [1], [0, 0, 1, 1], [], []>} : vector<28x160xbf16>, vector<160x168xbf16>, vector<28x168xf32> -> vector<28x168xf32>
    %221 = vector.broadcast %6 : vector<1x168xf32> to vector<28x168xf32>
    %222 = arith.addf %220, %221 : vector<28x168xf32>
    %cst_102 = arith.constant 0.000000e+00 : f32
    %223 = vector.broadcast %cst_102 : f32 to vector<28x168xf32>
    %224 = arith.subf %223, %222 : vector<28x168xf32>
    %225 = math.exp %224 : vector<28x168xf32>
    %cst_103 = arith.constant 1.000000e+00 : f32
    %226 = vector.broadcast %cst_103 : f32 to vector<28x168xf32>
    %227 = arith.addf %226, %225 : vector<28x168xf32>
    %228 = tpu.reciprocal %227 {approx = true} : vector<28x168xf32> -> vector<28x168xf32>
    %229 = arith.truncf %228 : vector<28x168xf32> to vector<28x168xbf16>
    %cst_104 = arith.constant dense<0.000000e+00> : vector<28x84xf32>
    %230 = tpu.matmul %229, %1, %cst_104 {dimension_numbers = #tpu.dot_dimension_numbers<[1], [0], [0], [1], [0, 0, 1, 1], [], []>} : vector<28x168xbf16>, vector<168x84xbf16>, vector<28x84xf32> -> vector<28x84xf32>
    %231 = arith.truncf %230 : vector<28x84xf32> to vector<28x84xbf16>
    %cst_105 = arith.constant dense<0.000000e+00> : vector<14x84xf32>
    %232 = tpu.matmul %2, %231, %cst_105 {dimension_numbers = #tpu.dot_dimension_numbers<[1], [0], [0], [1], [0, 0, 1, 1], [], []>} : vector<14x28xbf16>, vector<28x84xbf16>, vector<14x84xf32> -> vector<14x84xf32>
    %233 = arith.truncf %232 : vector<14x84xf32> to vector<14x84xbf16>
    %234 = vector.extract_strided_slice %233 {offsets = [0, 0], sizes = [10, 84], strides = [1, 1]} : vector<14x84xbf16> to vector<10x84xbf16>
    %235 = vector.extract_strided_slice %233 {offsets = [1, 0], sizes = [10, 84], strides = [1, 1]} : vector<14x84xbf16> to vector<10x84xbf16>
    %236 = vector.extract_strided_slice %233 {offsets = [2, 0], sizes = [10, 84], strides = [1, 1]} : vector<14x84xbf16> to vector<10x84xbf16>
    %237 = vector.extract_strided_slice %233 {offsets = [3, 0], sizes = [10, 84], strides = [1, 1]} : vector<14x84xbf16> to vector<10x84xbf16>
    %238 = vector.extract_strided_slice %233 {offsets = [4, 0], sizes = [10, 84], strides = [1, 1]} : vector<14x84xbf16> to vector<10x84xbf16>
    %239 = tpu.concatenate %234, %235, %236, %237, %238 in 1 : vector<10x84xbf16>, vector<10x84xbf16>, vector<10x84xbf16>, vector<10x84xbf16>, vector<10x84xbf16> -> vector<10x420xbf16>
    %cst_106 = arith.constant dense<0.000000e+00> : vector<10x160xf32>
    %240 = tpu.matmul %239, %3, %cst_106 {dimension_numbers = #tpu.dot_dimension_numbers<[1], [0], [0], [1], [0, 0, 1, 1], [], []>} : vector<10x420xbf16>, vector<420x160xbf16>, vector<10x160xf32> -> vector<10x160xf32>
    %241 = vector.broadcast %7 : vector<1x160xf32> to vector<10x160xf32>
    %242 = arith.addf %240, %241 : vector<10x160xf32>
    %cst_107 = arith.constant 0.000000e+00 : f32
    %243 = vector.broadcast %cst_107 : f32 to vector<10x160xf32>
    %244 = arith.subf %243, %242 : vector<10x160xf32>
    %245 = math.exp %244 : vector<10x160xf32>
    %cst_108 = arith.constant 1.000000e+00 : f32
    %246 = vector.broadcast %cst_108 : f32 to vector<10x160xf32>
    %247 = arith.addf %246, %245 : vector<10x160xf32>
    %248 = tpu.reciprocal %247 {approx = true} : vector<10x160xf32> -> vector<10x160xf32>
    %249 = arith.truncf %248 : vector<10x160xf32> to vector<10x160xbf16>
    %cst_109 = arith.constant dense<0.000000e+00> : vector<10x80xf32>
    %250 = tpu.matmul %249, %4, %cst_109 {dimension_numbers = #tpu.dot_dimension_numbers<[1], [0], [0], [1], [0, 0, 1, 1], [], []>} : vector<10x160xbf16>, vector<160x80xbf16>, vector<10x80xf32> -> vector<10x80xf32>
    %251 = arith.truncf %250 : vector<10x80xf32> to vector<10x80xbf16>
    %cst_110 = arith.constant dense<0.000000e+00> : vector<5x80xf32>
    %252 = tpu.matmul %5, %251, %cst_110 {dimension_numbers = #tpu.dot_dimension_numbers<[1], [0], [0], [1], [0, 0, 1, 1], [], []>} : vector<5x10xbf16>, vector<10x80xbf16>, vector<5x80xf32> -> vector<5x80xf32>
    %253 = vector.extract_strided_slice %252 {offsets = [0, 0], sizes = [1, 80], strides = [1, 1]} : vector<5x80xf32> to vector<1x80xf32>
    %c4_111 = arith.constant 4 : index
    %c0_112 = arith.constant 0 : index
    %254 = vector.load %arg17[%c4_111, %c0_112] : memref<8x400xf32, #tpu.memory_space<vmem>>, vector<1x80xf32>
    tpu.vector_store %arg17[%c4_111, %c0_112], %253 {strides = array<i32>} : memref<8x400xf32, #tpu.memory_space<vmem>>, vector<1x80xf32>,
    %255 = vector.extract_strided_slice %252 {offsets = [1, 0], sizes = [1, 80], strides = [1, 1]} : vector<5x80xf32> to vector<1x80xf32>
    %c4_113 = arith.constant 4 : index
    %c80_114 = arith.constant 80 : index
    %256 = vector.load %arg17[%c4_113, %c80_114] : memref<8x400xf32, #tpu.memory_space<vmem>>, vector<1x80xf32>
    tpu.vector_store %arg17[%c4_113, %c80_114], %255 {strides = array<i32>} : memref<8x400xf32, #tpu.memory_space<vmem>>, vector<1x80xf32>,
    %257 = vector.extract_strided_slice %252 {offsets = [2, 0], sizes = [1, 80], strides = [1, 1]} : vector<5x80xf32> to vector<1x80xf32>
    %c4_115 = arith.constant 4 : index
    %c160_116 = arith.constant 160 : index
    %258 = vector.load %arg17[%c4_115, %c160_116] : memref<8x400xf32, #tpu.memory_space<vmem>>, vector<1x80xf32>
    tpu.vector_store %arg17[%c4_115, %c160_116], %257 {strides = array<i32>} : memref<8x400xf32, #tpu.memory_space<vmem>>, vector<1x80xf32>,
    %259 = vector.extract_strided_slice %252 {offsets = [3, 0], sizes = [1, 80], strides = [1, 1]} : vector<5x80xf32> to vector<1x80xf32>
    %c4_117 = arith.constant 4 : index
    %c240_118 = arith.constant 240 : index
    %260 = vector.load %arg17[%c4_117, %c240_118] : memref<8x400xf32, #tpu.memory_space<vmem>>, vector<1x80xf32>
    tpu.vector_store %arg17[%c4_117, %c240_118], %259 {strides = array<i32>} : memref<8x400xf32, #tpu.memory_space<vmem>>, vector<1x80xf32>,
    %261 = vector.extract_strided_slice %252 {offsets = [4, 0], sizes = [1, 80], strides = [1, 1]} : vector<5x80xf32> to vector<1x80xf32>
    %c4_119 = arith.constant 4 : index
    %c320_120 = arith.constant 320 : index
    %262 = vector.load %arg17[%c4_119, %c320_120] : memref<8x400xf32, #tpu.memory_space<vmem>>, vector<1x80xf32>
    tpu.vector_store %arg17[%c4_119, %c320_120], %261 {strides = array<i32>} : memref<8x400xf32, #tpu.memory_space<vmem>>, vector<1x80xf32>,
    %c5 = arith.constant 5 : index
    %c0_121 = arith.constant 0 : index
    %c0_122 = arith.constant 0 : index
    %263 = vector.load %arg1[%c5, %c0_121, %c0_122] : memref<8x32x32xbf16, #tpu.memory_space<vmem>>, vector<1x32x32xbf16>
    %264 = vector.shape_cast %263 : vector<1x32x32xbf16> to vector<32x32xbf16>
    %265 = vector.extract_strided_slice %264 {offsets = [0, 0], sizes = [28, 32], strides = [1, 1]} : vector<32x32xbf16> to vector<28x32xbf16>
    %266 = vector.extract_strided_slice %264 {offsets = [1, 0], sizes = [28, 32], strides = [1, 1]} : vector<32x32xbf16> to vector<28x32xbf16>
    %267 = vector.extract_strided_slice %264 {offsets = [2, 0], sizes = [28, 32], strides = [1, 1]} : vector<32x32xbf16> to vector<28x32xbf16>
    %268 = vector.extract_strided_slice %264 {offsets = [3, 0], sizes = [28, 32], strides = [1, 1]} : vector<32x32xbf16> to vector<28x32xbf16>
    %269 = vector.extract_strided_slice %264 {offsets = [4, 0], sizes = [28, 32], strides = [1, 1]} : vector<32x32xbf16> to vector<28x32xbf16>
    %270 = tpu.concatenate %265, %266, %267, %268, %269 in 1 : vector<28x32xbf16>, vector<28x32xbf16>, vector<28x32xbf16>, vector<28x32xbf16>, vector<28x32xbf16> -> vector<28x160xbf16>
    %cst_123 = arith.constant dense<0.000000e+00> : vector<28x168xf32>
    %271 = tpu.matmul %270, %0, %cst_123 {dimension_numbers = #tpu.dot_dimension_numbers<[1], [0], [0], [1], [0, 0, 1, 1], [], []>} : vector<28x160xbf16>, vector<160x168xbf16>, vector<28x168xf32> -> vector<28x168xf32>
    %272 = vector.broadcast %6 : vector<1x168xf32> to vector<28x168xf32>
    %273 = arith.addf %271, %272 : vector<28x168xf32>
    %cst_124 = arith.constant 0.000000e+00 : f32
    %274 = vector.broadcast %cst_124 : f32 to vector<28x168xf32>
    %275 = arith.subf %274, %273 : vector<28x168xf32>
    %276 = math.exp %275 : vector<28x168xf32>
    %cst_125 = arith.constant 1.000000e+00 : f32
    %277 = vector.broadcast %cst_125 : f32 to vector<28x168xf32>
    %278 = arith.addf %277, %276 : vector<28x168xf32>
    %279 = tpu.reciprocal %278 {approx = true} : vector<28x168xf32> -> vector<28x168xf32>
    %280 = arith.truncf %279 : vector<28x168xf32> to vector<28x168xbf16>
    %cst_126 = arith.constant dense<0.000000e+00> : vector<28x84xf32>
    %281 = tpu.matmul %280, %1, %cst_126 {dimension_numbers = #tpu.dot_dimension_numbers<[1], [0], [0], [1], [0, 0, 1, 1], [], []>} : vector<28x168xbf16>, vector<168x84xbf16>, vector<28x84xf32> -> vector<28x84xf32>
    %282 = arith.truncf %281 : vector<28x84xf32> to vector<28x84xbf16>
    %cst_127 = arith.constant dense<0.000000e+00> : vector<14x84xf32>
    %283 = tpu.matmul %2, %282, %cst_127 {dimension_numbers = #tpu.dot_dimension_numbers<[1], [0], [0], [1], [0, 0, 1, 1], [], []>} : vector<14x28xbf16>, vector<28x84xbf16>, vector<14x84xf32> -> vector<14x84xf32>
    %284 = arith.truncf %283 : vector<14x84xf32> to vector<14x84xbf16>
    %285 = vector.extract_strided_slice %284 {offsets = [0, 0], sizes = [10, 84], strides = [1, 1]} : vector<14x84xbf16> to vector<10x84xbf16>
    %286 = vector.extract_strided_slice %284 {offsets = [1, 0], sizes = [10, 84], strides = [1, 1]} : vector<14x84xbf16> to vector<10x84xbf16>
    %287 = vector.extract_strided_slice %284 {offsets = [2, 0], sizes = [10, 84], strides = [1, 1]} : vector<14x84xbf16> to vector<10x84xbf16>
    %288 = vector.extract_strided_slice %284 {offsets = [3, 0], sizes = [10, 84], strides = [1, 1]} : vector<14x84xbf16> to vector<10x84xbf16>
    %289 = vector.extract_strided_slice %284 {offsets = [4, 0], sizes = [10, 84], strides = [1, 1]} : vector<14x84xbf16> to vector<10x84xbf16>
    %290 = tpu.concatenate %285, %286, %287, %288, %289 in 1 : vector<10x84xbf16>, vector<10x84xbf16>, vector<10x84xbf16>, vector<10x84xbf16>, vector<10x84xbf16> -> vector<10x420xbf16>
    %cst_128 = arith.constant dense<0.000000e+00> : vector<10x160xf32>
    %291 = tpu.matmul %290, %3, %cst_128 {dimension_numbers = #tpu.dot_dimension_numbers<[1], [0], [0], [1], [0, 0, 1, 1], [], []>} : vector<10x420xbf16>, vector<420x160xbf16>, vector<10x160xf32> -> vector<10x160xf32>
    %292 = vector.broadcast %7 : vector<1x160xf32> to vector<10x160xf32>
    %293 = arith.addf %291, %292 : vector<10x160xf32>
    %cst_129 = arith.constant 0.000000e+00 : f32
    %294 = vector.broadcast %cst_129 : f32 to vector<10x160xf32>
    %295 = arith.subf %294, %293 : vector<10x160xf32>
    %296 = math.exp %295 : vector<10x160xf32>
    %cst_130 = arith.constant 1.000000e+00 : f32
    %297 = vector.broadcast %cst_130 : f32 to vector<10x160xf32>
    %298 = arith.addf %297, %296 : vector<10x160xf32>
    %299 = tpu.reciprocal %298 {approx = true} : vector<10x160xf32> -> vector<10x160xf32>
    %300 = arith.truncf %299 : vector<10x160xf32> to vector<10x160xbf16>
    %cst_131 = arith.constant dense<0.000000e+00> : vector<10x80xf32>
    %301 = tpu.matmul %300, %4, %cst_131 {dimension_numbers = #tpu.dot_dimension_numbers<[1], [0], [0], [1], [0, 0, 1, 1], [], []>} : vector<10x160xbf16>, vector<160x80xbf16>, vector<10x80xf32> -> vector<10x80xf32>
    %302 = arith.truncf %301 : vector<10x80xf32> to vector<10x80xbf16>
    %cst_132 = arith.constant dense<0.000000e+00> : vector<5x80xf32>
    %303 = tpu.matmul %5, %302, %cst_132 {dimension_numbers = #tpu.dot_dimension_numbers<[1], [0], [0], [1], [0, 0, 1, 1], [], []>} : vector<5x10xbf16>, vector<10x80xbf16>, vector<5x80xf32> -> vector<5x80xf32>
    %304 = vector.extract_strided_slice %303 {offsets = [0, 0], sizes = [1, 80], strides = [1, 1]} : vector<5x80xf32> to vector<1x80xf32>
    %c5_133 = arith.constant 5 : index
    %c0_134 = arith.constant 0 : index
    %305 = vector.load %arg17[%c5_133, %c0_134] : memref<8x400xf32, #tpu.memory_space<vmem>>, vector<1x80xf32>
    tpu.vector_store %arg17[%c5_133, %c0_134], %304 {strides = array<i32>} : memref<8x400xf32, #tpu.memory_space<vmem>>, vector<1x80xf32>,
    %306 = vector.extract_strided_slice %303 {offsets = [1, 0], sizes = [1, 80], strides = [1, 1]} : vector<5x80xf32> to vector<1x80xf32>
    %c5_135 = arith.constant 5 : index
    %c80_136 = arith.constant 80 : index
    %307 = vector.load %arg17[%c5_135, %c80_136] : memref<8x400xf32, #tpu.memory_space<vmem>>, vector<1x80xf32>
    tpu.vector_store %arg17[%c5_135, %c80_136], %306 {strides = array<i32>} : memref<8x400xf32, #tpu.memory_space<vmem>>, vector<1x80xf32>,
    %308 = vector.extract_strided_slice %303 {offsets = [2, 0], sizes = [1, 80], strides = [1, 1]} : vector<5x80xf32> to vector<1x80xf32>
    %c5_137 = arith.constant 5 : index
    %c160_138 = arith.constant 160 : index
    %309 = vector.load %arg17[%c5_137, %c160_138] : memref<8x400xf32, #tpu.memory_space<vmem>>, vector<1x80xf32>
    tpu.vector_store %arg17[%c5_137, %c160_138], %308 {strides = array<i32>} : memref<8x400xf32, #tpu.memory_space<vmem>>, vector<1x80xf32>,
    %310 = vector.extract_strided_slice %303 {offsets = [3, 0], sizes = [1, 80], strides = [1, 1]} : vector<5x80xf32> to vector<1x80xf32>
    %c5_139 = arith.constant 5 : index
    %c240_140 = arith.constant 240 : index
    %311 = vector.load %arg17[%c5_139, %c240_140] : memref<8x400xf32, #tpu.memory_space<vmem>>, vector<1x80xf32>
    tpu.vector_store %arg17[%c5_139, %c240_140], %310 {strides = array<i32>} : memref<8x400xf32, #tpu.memory_space<vmem>>, vector<1x80xf32>,
    %312 = vector.extract_strided_slice %303 {offsets = [4, 0], sizes = [1, 80], strides = [1, 1]} : vector<5x80xf32> to vector<1x80xf32>
    %c5_141 = arith.constant 5 : index
    %c320_142 = arith.constant 320 : index
    %313 = vector.load %arg17[%c5_141, %c320_142] : memref<8x400xf32, #tpu.memory_space<vmem>>, vector<1x80xf32>
    tpu.vector_store %arg17[%c5_141, %c320_142], %312 {strides = array<i32>} : memref<8x400xf32, #tpu.memory_space<vmem>>, vector<1x80xf32>,
    %c6 = arith.constant 6 : index
    %c0_143 = arith.constant 0 : index
    %c0_144 = arith.constant 0 : index
    %314 = vector.load %arg1[%c6, %c0_143, %c0_144] : memref<8x32x32xbf16, #tpu.memory_space<vmem>>, vector<1x32x32xbf16>
    %315 = vector.shape_cast %314 : vector<1x32x32xbf16> to vector<32x32xbf16>
    %316 = vector.extract_strided_slice %315 {offsets = [0, 0], sizes = [28, 32], strides = [1, 1]} : vector<32x32xbf16> to vector<28x32xbf16>
    %317 = vector.extract_strided_slice %315 {offsets = [1, 0], sizes = [28, 32], strides = [1, 1]} : vector<32x32xbf16> to vector<28x32xbf16>
    %318 = vector.extract_strided_slice %315 {offsets = [2, 0], sizes = [28, 32], strides = [1, 1]} : vector<32x32xbf16> to vector<28x32xbf16>
    %319 = vector.extract_strided_slice %315 {offsets = [3, 0], sizes = [28, 32], strides = [1, 1]} : vector<32x32xbf16> to vector<28x32xbf16>
    %320 = vector.extract_strided_slice %315 {offsets = [4, 0], sizes = [28, 32], strides = [1, 1]} : vector<32x32xbf16> to vector<28x32xbf16>
    %321 = tpu.concatenate %316, %317, %318, %319, %320 in 1 : vector<28x32xbf16>, vector<28x32xbf16>, vector<28x32xbf16>, vector<28x32xbf16>, vector<28x32xbf16> -> vector<28x160xbf16>
    %cst_145 = arith.constant dense<0.000000e+00> : vector<28x168xf32>
    %322 = tpu.matmul %321, %0, %cst_145 {dimension_numbers = #tpu.dot_dimension_numbers<[1], [0], [0], [1], [0, 0, 1, 1], [], []>} : vector<28x160xbf16>, vector<160x168xbf16>, vector<28x168xf32> -> vector<28x168xf32>
    %323 = vector.broadcast %6 : vector<1x168xf32> to vector<28x168xf32>
    %324 = arith.addf %322, %323 : vector<28x168xf32>
    %cst_146 = arith.constant 0.000000e+00 : f32
    %325 = vector.broadcast %cst_146 : f32 to vector<28x168xf32>
    %326 = arith.subf %325, %324 : vector<28x168xf32>
    %327 = math.exp %326 : vector<28x168xf32>
    %cst_147 = arith.constant 1.000000e+00 : f32
    %328 = vector.broadcast %cst_147 : f32 to vector<28x168xf32>
    %329 = arith.addf %328, %327 : vector<28x168xf32>
    %330 = tpu.reciprocal %329 {approx = true} : vector<28x168xf32> -> vector<28x168xf32>
    %331 = arith.truncf %330 : vector<28x168xf32> to vector<28x168xbf16>
    %cst_148 = arith.constant dense<0.000000e+00> : vector<28x84xf32>
    %332 = tpu.matmul %331, %1, %cst_148 {dimension_numbers = #tpu.dot_dimension_numbers<[1], [0], [0], [1], [0, 0, 1, 1], [], []>} : vector<28x168xbf16>, vector<168x84xbf16>, vector<28x84xf32> -> vector<28x84xf32>
    %333 = arith.truncf %332 : vector<28x84xf32> to vector<28x84xbf16>
    %cst_149 = arith.constant dense<0.000000e+00> : vector<14x84xf32>
    %334 = tpu.matmul %2, %333, %cst_149 {dimension_numbers = #tpu.dot_dimension_numbers<[1], [0], [0], [1], [0, 0, 1, 1], [], []>} : vector<14x28xbf16>, vector<28x84xbf16>, vector<14x84xf32> -> vector<14x84xf32>
    %335 = arith.truncf %334 : vector<14x84xf32> to vector<14x84xbf16>
    %336 = vector.extract_strided_slice %335 {offsets = [0, 0], sizes = [10, 84], strides = [1, 1]} : vector<14x84xbf16> to vector<10x84xbf16>
    %337 = vector.extract_strided_slice %335 {offsets = [1, 0], sizes = [10, 84], strides = [1, 1]} : vector<14x84xbf16> to vector<10x84xbf16>
    %338 = vector.extract_strided_slice %335 {offsets = [2, 0], sizes = [10, 84], strides = [1, 1]} : vector<14x84xbf16> to vector<10x84xbf16>
    %339 = vector.extract_strided_slice %335 {offsets = [3, 0], sizes = [10, 84], strides = [1, 1]} : vector<14x84xbf16> to vector<10x84xbf16>
    %340 = vector.extract_strided_slice %335 {offsets = [4, 0], sizes = [10, 84], strides = [1, 1]} : vector<14x84xbf16> to vector<10x84xbf16>
    %341 = tpu.concatenate %336, %337, %338, %339, %340 in 1 : vector<10x84xbf16>, vector<10x84xbf16>, vector<10x84xbf16>, vector<10x84xbf16>, vector<10x84xbf16> -> vector<10x420xbf16>
    %cst_150 = arith.constant dense<0.000000e+00> : vector<10x160xf32>
    %342 = tpu.matmul %341, %3, %cst_150 {dimension_numbers = #tpu.dot_dimension_numbers<[1], [0], [0], [1], [0, 0, 1, 1], [], []>} : vector<10x420xbf16>, vector<420x160xbf16>, vector<10x160xf32> -> vector<10x160xf32>
    %343 = vector.broadcast %7 : vector<1x160xf32> to vector<10x160xf32>
    %344 = arith.addf %342, %343 : vector<10x160xf32>
    %cst_151 = arith.constant 0.000000e+00 : f32
    %345 = vector.broadcast %cst_151 : f32 to vector<10x160xf32>
    %346 = arith.subf %345, %344 : vector<10x160xf32>
    %347 = math.exp %346 : vector<10x160xf32>
    %cst_152 = arith.constant 1.000000e+00 : f32
    %348 = vector.broadcast %cst_152 : f32 to vector<10x160xf32>
    %349 = arith.addf %348, %347 : vector<10x160xf32>
    %350 = tpu.reciprocal %349 {approx = true} : vector<10x160xf32> -> vector<10x160xf32>
    %351 = arith.truncf %350 : vector<10x160xf32> to vector<10x160xbf16>
    %cst_153 = arith.constant dense<0.000000e+00> : vector<10x80xf32>
    %352 = tpu.matmul %351, %4, %cst_153 {dimension_numbers = #tpu.dot_dimension_numbers<[1], [0], [0], [1], [0, 0, 1, 1], [], []>} : vector<10x160xbf16>, vector<160x80xbf16>, vector<10x80xf32> -> vector<10x80xf32>
    %353 = arith.truncf %352 : vector<10x80xf32> to vector<10x80xbf16>
    %cst_154 = arith.constant dense<0.000000e+00> : vector<5x80xf32>
    %354 = tpu.matmul %5, %353, %cst_154 {dimension_numbers = #tpu.dot_dimension_numbers<[1], [0], [0], [1], [0, 0, 1, 1], [], []>} : vector<5x10xbf16>, vector<10x80xbf16>, vector<5x80xf32> -> vector<5x80xf32>
    %355 = vector.extract_strided_slice %354 {offsets = [0, 0], sizes = [1, 80], strides = [1, 1]} : vector<5x80xf32> to vector<1x80xf32>
    %c6_155 = arith.constant 6 : index
    %c0_156 = arith.constant 0 : index
    %356 = vector.load %arg17[%c6_155, %c0_156] : memref<8x400xf32, #tpu.memory_space<vmem>>, vector<1x80xf32>
    tpu.vector_store %arg17[%c6_155, %c0_156], %355 {strides = array<i32>} : memref<8x400xf32, #tpu.memory_space<vmem>>, vector<1x80xf32>,
    %357 = vector.extract_strided_slice %354 {offsets = [1, 0], sizes = [1, 80], strides = [1, 1]} : vector<5x80xf32> to vector<1x80xf32>
    %c6_157 = arith.constant 6 : index
    %c80_158 = arith.constant 80 : index
    %358 = vector.load %arg17[%c6_157, %c80_158] : memref<8x400xf32, #tpu.memory_space<vmem>>, vector<1x80xf32>
    tpu.vector_store %arg17[%c6_157, %c80_158], %357 {strides = array<i32>} : memref<8x400xf32, #tpu.memory_space<vmem>>, vector<1x80xf32>,
    %359 = vector.extract_strided_slice %354 {offsets = [2, 0], sizes = [1, 80], strides = [1, 1]} : vector<5x80xf32> to vector<1x80xf32>
    %c6_159 = arith.constant 6 : index
    %c160_160 = arith.constant 160 : index
    %360 = vector.load %arg17[%c6_159, %c160_160] : memref<8x400xf32, #tpu.memory_space<vmem>>, vector<1x80xf32>
    tpu.vector_store %arg17[%c6_159, %c160_160], %359 {strides = array<i32>} : memref<8x400xf32, #tpu.memory_space<vmem>>, vector<1x80xf32>,
    %361 = vector.extract_strided_slice %354 {offsets = [3, 0], sizes = [1, 80], strides = [1, 1]} : vector<5x80xf32> to vector<1x80xf32>
    %c6_161 = arith.constant 6 : index
    %c240_162 = arith.constant 240 : index
    %362 = vector.load %arg17[%c6_161, %c240_162] : memref<8x400xf32, #tpu.memory_space<vmem>>, vector<1x80xf32>
    tpu.vector_store %arg17[%c6_161, %c240_162], %361 {strides = array<i32>} : memref<8x400xf32, #tpu.memory_space<vmem>>, vector<1x80xf32>,
    %363 = vector.extract_strided_slice %354 {offsets = [4, 0], sizes = [1, 80], strides = [1, 1]} : vector<5x80xf32> to vector<1x80xf32>
    %c6_163 = arith.constant 6 : index
    %c320_164 = arith.constant 320 : index
    %364 = vector.load %arg17[%c6_163, %c320_164] : memref<8x400xf32, #tpu.memory_space<vmem>>, vector<1x80xf32>
    tpu.vector_store %arg17[%c6_163, %c320_164], %363 {strides = array<i32>} : memref<8x400xf32, #tpu.memory_space<vmem>>, vector<1x80xf32>,
    %c7 = arith.constant 7 : index
    %c0_165 = arith.constant 0 : index
    %c0_166 = arith.constant 0 : index
    %365 = vector.load %arg1[%c7, %c0_165, %c0_166] : memref<8x32x32xbf16, #tpu.memory_space<vmem>>, vector<1x32x32xbf16>
    %366 = vector.shape_cast %365 : vector<1x32x32xbf16> to vector<32x32xbf16>
    %367 = vector.extract_strided_slice %366 {offsets = [0, 0], sizes = [28, 32], strides = [1, 1]} : vector<32x32xbf16> to vector<28x32xbf16>
    %368 = vector.extract_strided_slice %366 {offsets = [1, 0], sizes = [28, 32], strides = [1, 1]} : vector<32x32xbf16> to vector<28x32xbf16>
    %369 = vector.extract_strided_slice %366 {offsets = [2, 0], sizes = [28, 32], strides = [1, 1]} : vector<32x32xbf16> to vector<28x32xbf16>
    %370 = vector.extract_strided_slice %366 {offsets = [3, 0], sizes = [28, 32], strides = [1, 1]} : vector<32x32xbf16> to vector<28x32xbf16>
    %371 = vector.extract_strided_slice %366 {offsets = [4, 0], sizes = [28, 32], strides = [1, 1]} : vector<32x32xbf16> to vector<28x32xbf16>
    %372 = tpu.concatenate %367, %368, %369, %370, %371 in 1 : vector<28x32xbf16>, vector<28x32xbf16>, vector<28x32xbf16>, vector<28x32xbf16>, vector<28x32xbf16> -> vector<28x160xbf16>
    %cst_167 = arith.constant dense<0.000000e+00> : vector<28x168xf32>
    %373 = tpu.matmul %372, %0, %cst_167 {dimension_numbers = #tpu.dot_dimension_numbers<[1], [0], [0], [1], [0, 0, 1, 1], [], []>} : vector<28x160xbf16>, vector<160x168xbf16>, vector<28x168xf32> -> vector<28x168xf32>
    %374 = vector.broadcast %6 : vector<1x168xf32> to vector<28x168xf32>
    %375 = arith.addf %373, %374 : vector<28x168xf32>
    %cst_168 = arith.constant 0.000000e+00 : f32
    %376 = vector.broadcast %cst_168 : f32 to vector<28x168xf32>
    %377 = arith.subf %376, %375 : vector<28x168xf32>
    %378 = math.exp %377 : vector<28x168xf32>
    %cst_169 = arith.constant 1.000000e+00 : f32
    %379 = vector.broadcast %cst_169 : f32 to vector<28x168xf32>
    %380 = arith.addf %379, %378 : vector<28x168xf32>
    %381 = tpu.reciprocal %380 {approx = true} : vector<28x168xf32> -> vector<28x168xf32>
    %382 = arith.truncf %381 : vector<28x168xf32> to vector<28x168xbf16>
    %cst_170 = arith.constant dense<0.000000e+00> : vector<28x84xf32>
    %383 = tpu.matmul %382, %1, %cst_170 {dimension_numbers = #tpu.dot_dimension_numbers<[1], [0], [0], [1], [0, 0, 1, 1], [], []>} : vector<28x168xbf16>, vector<168x84xbf16>, vector<28x84xf32> -> vector<28x84xf32>
    %384 = arith.truncf %383 : vector<28x84xf32> to vector<28x84xbf16>
    %cst_171 = arith.constant dense<0.000000e+00> : vector<14x84xf32>
    %385 = tpu.matmul %2, %384, %cst_171 {dimension_numbers = #tpu.dot_dimension_numbers<[1], [0], [0], [1], [0, 0, 1, 1], [], []>} : vector<14x28xbf16>, vector<28x84xbf16>, vector<14x84xf32> -> vector<14x84xf32>
    %386 = arith.truncf %385 : vector<14x84xf32> to vector<14x84xbf16>
    %387 = vector.extract_strided_slice %386 {offsets = [0, 0], sizes = [10, 84], strides = [1, 1]} : vector<14x84xbf16> to vector<10x84xbf16>
    %388 = vector.extract_strided_slice %386 {offsets = [1, 0], sizes = [10, 84], strides = [1, 1]} : vector<14x84xbf16> to vector<10x84xbf16>
    %389 = vector.extract_strided_slice %386 {offsets = [2, 0], sizes = [10, 84], strides = [1, 1]} : vector<14x84xbf16> to vector<10x84xbf16>
    %390 = vector.extract_strided_slice %386 {offsets = [3, 0], sizes = [10, 84], strides = [1, 1]} : vector<14x84xbf16> to vector<10x84xbf16>
    %391 = vector.extract_strided_slice %386 {offsets = [4, 0], sizes = [10, 84], strides = [1, 1]} : vector<14x84xbf16> to vector<10x84xbf16>
    %392 = tpu.concatenate %387, %388, %389, %390, %391 in 1 : vector<10x84xbf16>, vector<10x84xbf16>, vector<10x84xbf16>, vector<10x84xbf16>, vector<10x84xbf16> -> vector<10x420xbf16>
    %cst_172 = arith.constant dense<0.000000e+00> : vector<10x160xf32>
    %393 = tpu.matmul %392, %3, %cst_172 {dimension_numbers = #tpu.dot_dimension_numbers<[1], [0], [0], [1], [0, 0, 1, 1], [], []>} : vector<10x420xbf16>, vector<420x160xbf16>, vector<10x160xf32> -> vector<10x160xf32>
    %394 = vector.broadcast %7 : vector<1x160xf32> to vector<10x160xf32>
    %395 = arith.addf %393, %394 : vector<10x160xf32>
    %cst_173 = arith.constant 0.000000e+00 : f32
    %396 = vector.broadcast %cst_173 : f32 to vector<10x160xf32>
    %397 = arith.subf %396, %395 : vector<10x160xf32>
    %398 = math.exp %397 : vector<10x160xf32>
    %cst_174 = arith.constant 1.000000e+00 : f32
    %399 = vector.broadcast %cst_174 : f32 to vector<10x160xf32>
    %400 = arith.addf %399, %398 : vector<10x160xf32>
    %401 = tpu.reciprocal %400 {approx = true} : vector<10x160xf32> -> vector<10x160xf32>
    %402 = arith.truncf %401 : vector<10x160xf32> to vector<10x160xbf16>
    %cst_175 = arith.constant dense<0.000000e+00> : vector<10x80xf32>
    %403 = tpu.matmul %402, %4, %cst_175 {dimension_numbers = #tpu.dot_dimension_numbers<[1], [0], [0], [1], [0, 0, 1, 1], [], []>} : vector<10x160xbf16>, vector<160x80xbf16>, vector<10x80xf32> -> vector<10x80xf32>
    %404 = arith.truncf %403 : vector<10x80xf32> to vector<10x80xbf16>
    %cst_176 = arith.constant dense<0.000000e+00> : vector<5x80xf32>
    %405 = tpu.matmul %5, %404, %cst_176 {dimension_numbers = #tpu.dot_dimension_numbers<[1], [0], [0], [1], [0, 0, 1, 1], [], []>} : vector<5x10xbf16>, vector<10x80xbf16>, vector<5x80xf32> -> vector<5x80xf32>
    %406 = vector.extract_strided_slice %405 {offsets = [0, 0], sizes = [1, 80], strides = [1, 1]} : vector<5x80xf32> to vector<1x80xf32>
    %c7_177 = arith.constant 7 : index
    %c0_178 = arith.constant 0 : index
    %407 = vector.load %arg17[%c7_177, %c0_178] : memref<8x400xf32, #tpu.memory_space<vmem>>, vector<1x80xf32>
    tpu.vector_store %arg17[%c7_177, %c0_178], %406 {strides = array<i32>} : memref<8x400xf32, #tpu.memory_space<vmem>>, vector<1x80xf32>,
    %408 = vector.extract_strided_slice %405 {offsets = [1, 0], sizes = [1, 80], strides = [1, 1]} : vector<5x80xf32> to vector<1x80xf32>
    %c7_179 = arith.constant 7 : index
    %c80_180 = arith.constant 80 : index
    %409 = vector.load %arg17[%c7_179, %c80_180] : memref<8x400xf32, #tpu.memory_space<vmem>>, vector<1x80xf32>
    tpu.vector_store %arg17[%c7_179, %c80_180], %408 {strides = array<i32>} : memref<8x400xf32, #tpu.memory_space<vmem>>, vector<1x80xf32>,
    %410 = vector.extract_strided_slice %405 {offsets = [2, 0], sizes = [1, 80], strides = [1, 1]} : vector<5x80xf32> to vector<1x80xf32>
    %c7_181 = arith.constant 7 : index
    %c160_182 = arith.constant 160 : index
    %411 = vector.load %arg17[%c7_181, %c160_182] : memref<8x400xf32, #tpu.memory_space<vmem>>, vector<1x80xf32>
    tpu.vector_store %arg17[%c7_181, %c160_182], %410 {strides = array<i32>} : memref<8x400xf32, #tpu.memory_space<vmem>>, vector<1x80xf32>,
    %412 = vector.extract_strided_slice %405 {offsets = [3, 0], sizes = [1, 80], strides = [1, 1]} : vector<5x80xf32> to vector<1x80xf32>
    %c7_183 = arith.constant 7 : index
    %c240_184 = arith.constant 240 : index
    %413 = vector.load %arg17[%c7_183, %c240_184] : memref<8x400xf32, #tpu.memory_space<vmem>>, vector<1x80xf32>
    tpu.vector_store %arg17[%c7_183, %c240_184], %412 {strides = array<i32>} : memref<8x400xf32, #tpu.memory_space<vmem>>, vector<1x80xf32>,
    %414 = vector.extract_strided_slice %405 {offsets = [4, 0], sizes = [1, 80], strides = [1, 1]} : vector<5x80xf32> to vector<1x80xf32>
    %c7_185 = arith.constant 7 : index
    %c320_186 = arith.constant 320 : index
    %415 = vector.load %arg17[%c7_185, %c320_186] : memref<8x400xf32, #tpu.memory_space<vmem>>, vector<1x80xf32>
    tpu.vector_store %arg17[%c7_185, %c320_186], %414 {strides = array<i32>} : memref<8x400xf32, #tpu.memory_space<vmem>>, vector<1x80xf32>,
    %c0_187 = arith.constant 0 : index
    %c0_188 = arith.constant 0 : index
    %416 = vector.load %arg17[%c0_187, %c0_188] : memref<8x400xf32, #tpu.memory_space<vmem>>, vector<8x400xf32>
    %417 = arith.truncf %416 : vector<8x400xf32> to vector<8x400xbf16>
    %c0_189 = arith.constant 0 : index
    %c0_190 = arith.constant 0 : index
    %418 = vector.load %arg10[%c0_189, %c0_190] : memref<400x120xbf16, #tpu.memory_space<vmem>>, vector<400x120xbf16>
    %cst_191 = arith.constant dense<0.000000e+00> : vector<8x120xf32>
    %419 = tpu.matmul %417, %418, %cst_191 {dimension_numbers = #tpu.dot_dimension_numbers<[1], [0], [0], [1], [0, 0, 1, 1], [], []>} : vector<8x400xbf16>, vector<400x120xbf16>, vector<8x120xf32> -> vector<8x120xf32>
    %c0_192 = arith.constant 0 : index
    %c0_193 = arith.constant 0 : index
    %420 = vector.load %arg11[%c0_192, %c0_193] : memref<1x120xf32, #tpu.memory_space<vmem>>, vector<1x120xf32>
    %421 = vector.broadcast %420 : vector<1x120xf32> to vector<8x120xf32>
    %422 = arith.addf %419, %421 : vector<8x120xf32>
    %cst_194 = arith.constant 0.000000e+00 : f32
    %423 = vector.broadcast %cst_194 : f32 to vector<8x120xf32>
    %424 = arith.subf %423, %422 : vector<8x120xf32>
    %425 = math.exp %424 : vector<8x120xf32>
    %cst_195 = arith.constant 1.000000e+00 : f32
    %426 = vector.broadcast %cst_195 : f32 to vector<8x120xf32>
    %427 = arith.addf %426, %425 : vector<8x120xf32>
    %428 = tpu.reciprocal %427 {approx = true} : vector<8x120xf32> -> vector<8x120xf32>
    %429 = arith.truncf %428 : vector<8x120xf32> to vector<8x120xbf16>
    %c0_196 = arith.constant 0 : index
    %c0_197 = arith.constant 0 : index
    %430 = vector.load %arg12[%c0_196, %c0_197] : memref<120x84xbf16, #tpu.memory_space<vmem>>, vector<120x84xbf16>
    %cst_198 = arith.constant dense<0.000000e+00> : vector<8x84xf32>
    %431 = tpu.matmul %429, %430, %cst_198 {dimension_numbers = #tpu.dot_dimension_numbers<[1], [0], [0], [1], [0, 0, 1, 1], [], []>} : vector<8x120xbf16>, vector<120x84xbf16>, vector<8x84xf32> -> vector<8x84xf32>
    %c0_199 = arith.constant 0 : index
    %c0_200 = arith.constant 0 : index
    %432 = vector.load %arg13[%c0_199, %c0_200] : memref<1x84xf32, #tpu.memory_space<vmem>>, vector<1x84xf32>
    %433 = vector.broadcast %432 : vector<1x84xf32> to vector<8x84xf32>
    %434 = arith.addf %431, %433 : vector<8x84xf32>
    %cst_201 = arith.constant 0.000000e+00 : f32
    %435 = vector.broadcast %cst_201 : f32 to vector<8x84xf32>
    %436 = arith.subf %435, %434 : vector<8x84xf32>
    %437 = math.exp %436 : vector<8x84xf32>
    %cst_202 = arith.constant 1.000000e+00 : f32
    %438 = vector.broadcast %cst_202 : f32 to vector<8x84xf32>
    %439 = arith.addf %438, %437 : vector<8x84xf32>
    %440 = tpu.reciprocal %439 {approx = true} : vector<8x84xf32> -> vector<8x84xf32>
    %441 = arith.truncf %440 : vector<8x84xf32> to vector<8x84xbf16>
    %c0_203 = arith.constant 0 : index
    %c0_204 = arith.constant 0 : index
    %442 = vector.load %arg14[%c0_203, %c0_204] : memref<84x128xbf16, #tpu.memory_space<vmem>>, vector<84x128xbf16>
    %cst_205 = arith.constant dense<0.000000e+00> : vector<8x128xf32>
    %443 = tpu.matmul %441, %442, %cst_205 {dimension_numbers = #tpu.dot_dimension_numbers<[1], [0], [0], [1], [0, 0, 1, 1], [], []>} : vector<8x84xbf16>, vector<84x128xbf16>, vector<8x128xf32> -> vector<8x128xf32>
    %c0_206 = arith.constant 0 : index
    %c0_207 = arith.constant 0 : index
    %444 = vector.load %arg15[%c0_206, %c0_207] : memref<1x128xf32, #tpu.memory_space<vmem>>, vector<1x128xf32>
    %445 = vector.broadcast %444 : vector<1x128xf32> to vector<8x128xf32>
    %446 = arith.addf %443, %445 : vector<8x128xf32>
    %c0_208 = arith.constant 0 : index
    %c0_209 = arith.constant 0 : index
    %447 = vector.load %arg16[%c0_208, %c0_209] : memref<8x128xf32, #tpu.memory_space<vmem>>, vector<8x128xf32>
    tpu.vector_store %arg16[%c0_208, %c0_209], %446 {strides = array<i32>} : memref<8x128xf32, #tpu.memory_space<vmem>>, vector<8x128xf32>,
    return
  }
  func.func @transform_0(%arg0: i32) -> (i32, i32, i32) {
    %c0_i32 = arith.constant 0 : i32
    %c0_i32_0 = arith.constant 0 : i32
    %c0_i32_1 = arith.constant 0 : i32
    return %arg0, %c0_i32, %c0_i32_0 : i32, i32, i32
  }
  func.func @transform_1(%arg0: i32) -> (i32, i32) {
    %c0_i32 = arith.constant 0 : i32
    %c0_i32_0 = arith.constant 0 : i32
    %c0_i32_1 = arith.constant 0 : i32
    return %c0_i32, %c0_i32_0 : i32, i32
  }
  func.func @transform_2(%arg0: i32) -> (i32, i32) {
    %c0_i32 = arith.constant 0 : i32
    %c0_i32_0 = arith.constant 0 : i32
    %c0_i32_1 = arith.constant 0 : i32
    return %c0_i32, %c0_i32_0 : i32, i32
  }
  func.func @transform_3(%arg0: i32) -> (i32, i32) {
    %c0_i32 = arith.constant 0 : i32
    %c0_i32_0 = arith.constant 0 : i32
    %c0_i32_1 = arith.constant 0 : i32
    return %c0_i32, %c0_i32_0 : i32, i32
  }
  func.func @transform_4(%arg0: i32) -> (i32, i32) {
    %c0_i32 = arith.constant 0 : i32
    %c0_i32_0 = arith.constant 0 : i32
    %c0_i32_1 = arith.constant 0 : i32
    return %c0_i32, %c0_i32_0 : i32, i32
  }
  func.func @transform_5(%arg0: i32) -> (i32, i32) {
    %c0_i32 = arith.constant 0 : i32
    %c0_i32_0 = arith.constant 0 : i32
    %c0_i32_1 = arith.constant 0 : i32
    return %c0_i32, %c0_i32_0 : i32, i32
  }
  func.func @transform_6(%arg0: i32) -> (i32, i32) {
    %c0_i32 = arith.constant 0 : i32
    %c0_i32_0 = arith.constant 0 : i32
    %c0_i32_1 = arith.constant 0 : i32
    return %c0_i32, %c0_i32_0 : i32, i32
  }
  func.func @transform_7(%arg0: i32) -> (i32, i32) {
    %c0_i32 = arith.constant 0 : i32
    %c0_i32_0 = arith.constant 0 : i32
    %c0_i32_1 = arith.constant 0 : i32
    return %c0_i32, %c0_i32_0 : i32, i32
  }
  func.func @transform_8(%arg0: i32) -> (i32, i32) {
    %c0_i32 = arith.constant 0 : i32
    %c0_i32_0 = arith.constant 0 : i32
    %c0_i32_1 = arith.constant 0 : i32
    return %c0_i32, %c0_i32_0 : i32, i32
  }
  func.func @transform_9(%arg0: i32) -> (i32, i32) {
    %c0_i32 = arith.constant 0 : i32
    %c0_i32_0 = arith.constant 0 : i32
    %c0_i32_1 = arith.constant 0 : i32
    return %c0_i32, %c0_i32_0 : i32, i32
  }
  func.func @transform_10(%arg0: i32) -> (i32, i32) {
    %c0_i32 = arith.constant 0 : i32
    %c0_i32_0 = arith.constant 0 : i32
    %c0_i32_1 = arith.constant 0 : i32
    return %c0_i32, %c0_i32_0 : i32, i32
  }
  func.func @transform_11(%arg0: i32) -> (i32, i32) {
    %c0_i32 = arith.constant 0 : i32
    %c0_i32_0 = arith.constant 0 : i32
    %c0_i32_1 = arith.constant 0 : i32
    return %c0_i32, %c0_i32_0 : i32, i32
  }
  func.func @transform_12(%arg0: i32) -> (i32, i32) {
    %c0_i32 = arith.constant 0 : i32
    %c0_i32_0 = arith.constant 0 : i32
    %c0_i32_1 = arith.constant 0 : i32
    return %c0_i32, %c0_i32_0 : i32, i32
  }
  func.func @transform_13(%arg0: i32) -> (i32, i32) {
    %c0_i32 = arith.constant 0 : i32
    %c0_i32_0 = arith.constant 0 : i32
    %c0_i32_1 = arith.constant 0 : i32
    return %c0_i32, %c0_i32_0 : i32, i32
  }
  func.func @transform_14(%arg0: i32) -> (i32, i32) {
    %c0_i32 = arith.constant 0 : i32
    %c0_i32_0 = arith.constant 0 : i32
    %c0_i32_1 = arith.constant 0 : i32
    return %c0_i32, %c0_i32_0 : i32, i32
  }
  func.func @transform_15(%arg0: i32) -> (i32, i32) {
    %c0_i32 = arith.constant 0 : i32
    %c0_i32_0 = arith.constant 0 : i32
    return %arg0, %c0_i32 : i32, i32
  }
}

</mosaic_0001>

<llo_original>
// kernel: _forward_impl.1
$region0: #{_forward_impl.1}
  #allocation0 [shape = 'u32[]', space=smem, size = 0x4, offset = 0x4, fixed_abs, tag = 'smem constant byte address 0x4 - core index']
  #allocation1 [shape = 'u32[144,128]{1,0:T(1,128)}', space=vmem, size = 0x12000, scoped, tag = 'internal scratch']
  #allocation2 [shape = 'f32[8,400]{1,0:T(8,128)}', space=vmem, size = 0x4000, scoped, tag = 'scratch operand']
  %s0 = inlined_call_operand.vmem [shape: bf16[8,32,32], index: 0, kind: input, shape index: {}]
  %s1 = inlined_call_operand.vmem [shape: bf16[160,168], index: 1, kind: input, shape index: {}]
  %s2 = inlined_call_operand.vmem [shape: f32[1,168], index: 2, kind: input, shape index: {}]
  %s3 = inlined_call_operand.vmem [shape: bf16[168,84], index: 3, kind: input, shape index: {}]
  %s4 = inlined_call_operand.vmem [shape: bf16[14,28], index: 4, kind: input, shape index: {}]
  %s5 = inlined_call_operand.vmem [shape: bf16[420,160], index: 5, kind: input, shape index: {}]
  %s6 = inlined_call_operand.vmem [shape: f32[1,160], index: 6, kind: input, shape index: {}]
  %s7 = inlined_call_operand.vmem [shape: bf16[160,80], index: 7, kind: input, shape index: {}]
  %s8 = inlined_call_operand.vmem [shape: bf16[5,10], index: 8, kind: input, shape index: {}]
  %s9 = inlined_call_operand.vmem [shape: bf16[400,120], index: 9, kind: input, shape index: {}]
  %s10 = inlined_call_operand.vmem [shape: f32[1,120], index: 10, kind: input, shape index: {}]
  %s11 = inlined_call_operand.vmem [shape: bf16[120,84], index: 11, kind: input, shape index: {}]
  %s12 = inlined_call_operand.vmem [shape: f32[1,84], index: 12, kind: input, shape index: {}]
  %s13 = inlined_call_operand.vmem [shape: bf16[84,128], index: 13, kind: input, shape index: {}]
  %s14 = inlined_call_operand.vmem [shape: f32[1,128], index: 14, kind: input, shape index: {}]
  %s15 = inlined_call_operand.vmem [shape: f32[8,128], index: 15, kind: output, shape index: {}]
  %s16 = sld [smem:[#allocation0]]
  $region70: #{_forward_impl.1} parent=0
    _
  %s18 = ssub.s32 1, %s16
  %s19 = scalar_select 0, %s18, %s16
  // Predicated region
  $region2: #{_forward_impl.1} parent=0 // pred_check
    _
  $region3: #{_forward_impl.1} parent=0 // pred_check_branch
    %21 = sbr.rel (0) target = $region5
  $region4: #{_forward_impl.1} parent=0 // pred_region
    _
  $region5: #{_forward_impl.1} parent=0 // pred_fallthru
    _
  // Predicated region
  $region6: #{_forward_impl.1} parent=0 // pred_check
    _
  $region7: #{_forward_impl.1} parent=0 // pred_check_branch
    %23 = sbr.rel (0) target = $region9
  $region8: #{_forward_impl.1} parent=0 // pred_region
    _
  $region9: #{_forward_impl.1} parent=0 // pred_fallthru
    _
  // Predicated region
  $region10: #{_forward_impl.1} parent=0 // pred_check
    _
  $region11: #{_forward_impl.1} parent=0 // pred_check_branch
    %25 = sbr.rel (0) target = $region13
  $region12: #{_forward_impl.1} parent=0 // pred_region
    _
  $region13: #{_forward_impl.1} parent=0 // pred_fallthru
    _
  // Predicated region
  $region14: #{_forward_impl.1} parent=0 // pred_check
    _
  $region15: #{_forward_impl.1} parent=0 // pred_check_branch
    %27 = sbr.rel (0) target = $region17
  $region16: #{_forward_impl.1} parent=0 // pred_region
    _
  $region17: #{_forward_impl.1} parent=0 // pred_fallthru
    _
  // Predicated region
  $region18: #{_forward_impl.1} parent=0 // pred_check
    _
  $region19: #{_forward_impl.1} parent=0 // pred_check_branch
    %29 = sbr.rel (0) target = $region21
  $region20: #{_forward_impl.1} parent=0 // pred_region
    _
  $region21: #{_forward_impl.1} parent=0 // pred_fallthru
    _
  // Predicated region
  $region22: #{_forward_impl.1} parent=0 // pred_check
    _
  $region23: #{_forward_impl.1} parent=0 // pred_check_branch
    %31 = sbr.rel (0) target = $region25
  $region24: #{_forward_impl.1} parent=0 // pred_region
    _
  $region25: #{_forward_impl.1} parent=0 // pred_fallthru
    _
  // Predicated region
  $region26: #{_forward_impl.1} parent=0 // pred_check
    _
  $region27: #{_forward_impl.1} parent=0 // pred_check_branch
    %33 = sbr.rel (0) target = $region29
  $region28: #{_forward_impl.1} parent=0 // pred_region
    _
  $region29: #{_forward_impl.1} parent=0 // pred_fallthru
    _
  // Predicated region
  $region30: #{_forward_impl.1} parent=0 // pred_check
    _
  $region31: #{_forward_impl.1} parent=0 // pred_check_branch
    %35 = sbr.rel (0) target = $region33
  $region32: #{_forward_impl.1} parent=0 // pred_region
    _
  $region33: #{_forward_impl.1} parent=0 // pred_fallthru
    _
  // Predicated region
  $region34: #{_forward_impl.1} parent=0 // pred_check
    _
  $region35: #{_forward_impl.1} parent=0 // pred_check_branch
    %37 = sbr.rel (0) target = $region37
  $region36: #{_forward_impl.1} parent=0 // pred_region
    _
  $region37: #{_forward_impl.1} parent=0 // pred_fallthru
    _
  // Predicated region
  $region38: #{_forward_impl.1} parent=0 // pred_check
    _
  $region39: #{_forward_impl.1} parent=0 // pred_check_branch
    %39 = sbr.rel (0) target = $region41
  $region40: #{_forward_impl.1} parent=0 // pred_region
    _
  $region41: #{_forward_impl.1} parent=0 // pred_fallthru
    _
  // Predicated region
  $region42: #{_forward_impl.1} parent=0 // pred_check
    _
  $region43: #{_forward_impl.1} parent=0 // pred_check_branch
    %41 = sbr.rel (0) target = $region45
  $region44: #{_forward_impl.1} parent=0 // pred_region
    _
  $region45: #{_forward_impl.1} parent=0 // pred_fallthru
    _
  // Predicated region
  $region46: #{_forward_impl.1} parent=0 // pred_check
    _
  $region47: #{_forward_impl.1} parent=0 // pred_check_branch
    %43 = sbr.rel (0) target = $region49
  $region48: #{_forward_impl.1} parent=0 // pred_region
    _
  $region49: #{_forward_impl.1} parent=0 // pred_fallthru
    _
  // Predicated region
  $region50: #{_forward_impl.1} parent=0 // pred_check
    _
  $region51: #{_forward_impl.1} parent=0 // pred_check_branch
    %45 = sbr.rel (0) target = $region53
  $region52: #{_forward_impl.1} parent=0 // pred_region
    _
  $region53: #{_forward_impl.1} parent=0 // pred_fallthru
    _
  // Predicated region
  $region54: #{_forward_impl.1} parent=0 // pred_check
    _
  $region55: #{_forward_impl.1} parent=0 // pred_check_branch
    %47 = sbr.rel (0) target = $region57
  $region56: #{_forward_impl.1} parent=0 // pred_region
    _
  $region57: #{_forward_impl.1} parent=0 // pred_fallthru
    _
  // Predicated region
  $region58: #{_forward_impl.1} parent=0 // pred_check
    _
  $region59: #{_forward_impl.1} parent=0 // pred_check_branch
    %49 = sbr.rel (0) target = $region61
  $region60: #{_forward_impl.1} parent=0 // pred_region
    _
  $region61: #{_forward_impl.1} parent=0 // pred_fallthru
    _
  %v51 = vld [vmem:[%s1] sm:$0xff]
  %v52 = vld [vmem:[%s1 + $0x8] sm:$0xff]
  %v53 = vld [vmem:[%s1 + $0x10] sm:$0xff]
  %v54 = vld [vmem:[%s1 + $0x18] sm:$0xff]
  %v55 = vld [vmem:[%s1 + $0x20] sm:$0xff]
  %v56 = vld [vmem:[%s1 + $0x28] sm:$0xff]
  %v57 = vld [vmem:[%s1 + $0x30] sm:$0xff]
  %v58 = vld [vmem:[%s1 + $0x38] sm:$0xff]
  %v59 = vld [vmem:[%s1 + $0x40] sm:$0xff]
  %v60 = vld [vmem:[%s1 + $0x48] sm:$0xff]
  %v61 = vld [vmem:[%s1 + $0x50] sm:$0xff]
  %v62 = vld [vmem:[%s1 + $0x58] sm:$0xff]
  %v63 = vld [vmem:[%s1 + $0x60] sm:$0xff]
  %v64 = vld [vmem:[%s1 + $0x68] sm:$0xff]
  %v65 = vld [vmem:[%s1 + $0x70] sm:$0xff]
  %v66 = vld [vmem:[%s1 + $0x78] sm:$0xff]
  %v67 = vld [vmem:[%s1 + $0x80] sm:$0xff]
  %v68 = vld [vmem:[%s1 + $0x88] sm:$0xff]
  %v69 = vld [vmem:[%s1 + $0x90] sm:$0xff]
  %v70 = vld [vmem:[%s1 + $0x98] sm:$0xff]
  %v71 = vld [vmem:[%s3] sm:$0xf]
  %v72 = vld [vmem:[%s3 + $0x4] sm:$0xf]
  %v73 = vld [vmem:[%s3 + $0x8] sm:$0xf]
  %v74 = vld [vmem:[%s3 + $0xc] sm:$0xf]
  %v75 = vld [vmem:[%s3 + $0x10] sm:$0xf]
  %v76 = vld [vmem:[%s3 + $0x14] sm:$0xf]
  %v77 = vld [vmem:[%s3 + $0x18] sm:$0xf]
  %v78 = vld [vmem:[%s3 + $0x1c] sm:$0xf]
  %v79 = vld [vmem:[%s3 + $0x20] sm:$0xf]
  %v80 = vld [vmem:[%s3 + $0x24] sm:$0xf]
  %v81 = vld [vmem:[%s3 + $0x28] sm:$0xf]
  %v82 = vld [vmem:[%s3 + $0x2c] sm:$0xf]
  %v83 = vld [vmem:[%s3 + $0x30] sm:$0xf]
  %v84 = vld [vmem:[%s3 + $0x34] sm:$0xf]
  %v85 = vld [vmem:[%s3 + $0x38] sm:$0xf]
  %v86 = vld [vmem:[%s3 + $0x3c] sm:$0xf]
  %v87 = vld [vmem:[%s3 + $0x40] sm:$0xf]
  %v88 = vld [vmem:[%s3 + $0x44] sm:$0xf]
  %v89 = vld [vmem:[%s3 + $0x48] sm:$0xf]
  %v90 = vld [vmem:[%s3 + $0x4c] sm:$0xf]
  %v91 = vld [vmem:[%s3 + $0x50] sm:$0xf]
  %v92 = vld [vmem:[%s4] sm:$0xf]
  %v93 = vld [vmem:[%s4 + $0x4] sm:$0x7]
  %v94 = vld [vmem:[%s5] sm:$0xff]
  %v95 = vld [vmem:[%s5 + $0x8] sm:$0xff]
  %v96 = vld [vmem:[%s5 + $0x10] sm:$0xff]
  %v97 = vld [vmem:[%s5 + $0x18] sm:$0xff]
  %v98 = vld [vmem:[%s5 + $0x20] sm:$0xff]
  %v99 = vld [vmem:[%s5 + $0x28] sm:$0xff]
  %v100 = vld [vmem:[%s5 + $0x30] sm:$0xff]
  %v101 = vld [vmem:[%s5 + $0x38] sm:$0xff]
  %v102 = vld [vmem:[%s5 + $0x40] sm:$0xff]
  %v103 = vld [vmem:[%s5 + $0x48] sm:$0xff]
  %v104 = vld [vmem:[%s5 + $0x50] sm:$0xff]
  %v105 = vld [vmem:[%s5 + $0x58] sm:$0xff]
  %v106 = vld [vmem:[%s5 + $0x60] sm:$0xff]
  %v107 = vld [vmem:[%s5 + $0x68] sm:$0xff]
  %v108 = vld [vmem:[%s5 + $0x70] sm:$0xff]
  %v109 = vld [vmem:[%s5 + $0x78] sm:$0xff]
  %v110 = vld [vmem:[%s5 + $0x80] sm:$0xff]
  %v111 = vld [vmem:[%s5 + $0x88] sm:$0xff]
  %v112 = vld [vmem:[%s5 + $0x90] sm:$0xff]
  %v113 = vld [vmem:[%s5 + $0x98] sm:$0xff]
  %v114 = vld [vmem:[%s5 + $0xa0] sm:$0xff]
  %v115 = vld [vmem:[%s5 + $0xa8] sm:$0xff]
  %v116 = vld [vmem:[%s5 + $0xb0] sm:$0xff]
  %v117 = vld [vmem:[%s5 + $0xb8] sm:$0xff]
  %v118 = vld [vmem:[%s5 + $0xc0] sm:$0xff]
  %v119 = vld [vmem:[%s5 + $0xc8] sm:$0xff]
  %v120 = vld [vmem:[%s5 + $0xd0] sm:$0xff]
  %v121 = vld [vmem:[%s5 + $0xd8] sm:$0xff]
  %v122 = vld [vmem:[%s5 + $0xe0] sm:$0xff]
  %v123 = vld [vmem:[%s5 + $0xe8] sm:$0xff]
  %v124 = vld [vmem:[%s5 + $0xf0] sm:$0xff]
  %v125 = vld [vmem:[%s5 + $0xf8] sm:$0xff]
  %v126 = vld [vmem:[%s5 + $0x100] sm:$0xff]
  %v127 = vld [vmem:[%s5 + $0x108] sm:$0xff]
  %v128 = vld [vmem:[%s5 + $0x110] sm:$0xff]
  %v129 = vld [vmem:[%s5 + $0x118] sm:$0xff]
  %v130 = vld [vmem:[%s5 + $0x120] sm:$0xff]
  %v131 = vld [vmem:[%s5 + $0x128] sm:$0xff]
  %v132 = vld [vmem:[%s5 + $0x130] sm:$0xff]
  %v133 = vld [vmem:[%s5 + $0x138] sm:$0xff]
  %v134 = vld [vmem:[%s5 + $0x140] sm:$0xff]
  %v135 = vld [vmem:[%s5 + $0x148] sm:$0xff]
  %v136 = vld [vmem:[%s5 + $0x150] sm:$0xff]
  %v137 = vld [vmem:[%s5 + $0x158] sm:$0xff]
  %v138 = vld [vmem:[%s5 + $0x160] sm:$0xff]
  %v139 = vld [vmem:[%s5 + $0x168] sm:$0xff]
  %v140 = vld [vmem:[%s5 + $0x170] sm:$0xff]
  %v141 = vld [vmem:[%s5 + $0x178] sm:$0xff]
  %v142 = vld [vmem:[%s5 + $0x180] sm:$0xff]
  %v143 = vld [vmem:[%s5 + $0x188] sm:$0xff]
  %v144 = vld [vmem:[%s5 + $0x190] sm:$0xff]
  %v145 = vld [vmem:[%s5 + $0x198] sm:$0xff]
  %v146 = vld [vmem:[%s5 + $0x1a0] sm:$0x33]
  %v147 = vld [vmem:[%s7] sm:$0xf]
  %v148 = vld [vmem:[%s7 + $0x4] sm:$0xf]
  %v149 = vld [vmem:[%s7 + $0x8] sm:$0xf]
  %v150 = vld [vmem:[%s7 + $0xc] sm:$0xf]
  %v151 = vld [vmem:[%s7 + $0x10] sm:$0xf]
  %v152 = vld [vmem:[%s7 + $0x14] sm:$0xf]
  %v153 = vld [vmem:[%s7 + $0x18] sm:$0xf]
  %v154 = vld [vmem:[%s7 + $0x1c] sm:$0xf]
  %v155 = vld [vmem:[%s7 + $0x20] sm:$0xf]
  %v156 = vld [vmem:[%s7 + $0x24] sm:$0xf]
  %v157 = vld [vmem:[%s7 + $0x28] sm:$0xf]
  %v158 = vld [vmem:[%s7 + $0x2c] sm:$0xf]
  %v159 = vld [vmem:[%s7 + $0x30] sm:$0xf]
  %v160 = vld [vmem:[%s7 + $0x34] sm:$0xf]
  %v161 = vld [vmem:[%s7 + $0x38] sm:$0xf]
  %v162 = vld [vmem:[%s7 + $0x3c] sm:$0xf]
  %v163 = vld [vmem:[%s7 + $0x40] sm:$0xf]
  %v164 = vld [vmem:[%s7 + $0x44] sm:$0xf]
  %v165 = vld [vmem:[%s7 + $0x48] sm:$0xf]
  %v166 = vld [vmem:[%s7 + $0x4c] sm:$0xf]
  %v167 = vld [vmem:[%s8] sm:$0x7]
  %v168 = vld [vmem:[%s2] sm:$0x3]
  %v169 = vld [vmem:[%s6] sm:$0x3]
  %v170 = vld [vmem:[%s0] sm:$0xf]
  %v171 = vld [vmem:[%s0 + $0x4] sm:$0xf]
  %v172 = vld [vmem:[%s0 + $0x8] sm:$0xf]
  %v173 = vld [vmem:[%s0 + $0xc] sm:$0xf]
  %v178 = vunpack.c.l.b16 %v170
  %v179 = vunpack.c.l.b16 %v171
  %v180 = vunpack.c.l.b16 %v172
  %v181 = vunpack.c.l.b16 %v173
  %v182 = vpack.c.b16 %v179, %v178
  %v183 = vpack.c.b16 %v181, %v180
  %vm184 = vsmask.f32 7424
  %v186 = vshrl.u32 %v182, 16
  %v188 = vshll.u32 %v182, 16
  %v190 = vrot.slane %v188, 1
  %v191 = vor.u32 %v186, %v190
  %v193 = vshll.u32 %v183, 16
  %v195 = vrot.slane %v193, 1
  %v196 = vsel %vm184, %v191, %v195
  %v197 = vshrl.u32 %v183, 16
  %v199 = vor.u32 %v197, %v195
  %200 = vrot.lane.b32.xlu0 %v196, 32
  %v201 = vpop.permute.xlu0 %200
  %202 = vrot.lane.b32.xlu0 %v199, 32
  %v203 = vpop.permute.xlu0 %202
  %vm204 = vcmask 1046528
  %v205 = vrot.slane %v182, 1
  %v206 = vrot.slane %v183, 1
  %v207 = vsel %vm204, %v205, %v206
  %208 = vrot.lane.b32.xlu0 %v207, 64
  %v209 = vpop.permute.xlu0 %208
  %210 = vrot.lane.b32.xlu0 %v206, 64
  %v211 = vpop.permute.xlu0 %210
  %vm212 = vsmask.f32 6400
  %v213 = vrot.slane %v186, 1
  %v214 = vrot.slane %v188, 2
  %v215 = vor.u32 %v213, %v214
  %v216 = vrot.slane %v197, 1
  %v217 = vrot.slane %v193, 2
  %v218 = vor.u32 %v216, %v217
  %v219 = vsel %vm212, %v215, %v218
  %220 = vrot.lane.b32.xlu0 %v219, 96
  %v221 = vpop.permute.xlu0 %220
  %222 = vrot.lane.b32.xlu0 %v218, 96
  %v223 = vpop.permute.xlu0 %222
  %vm224 = vcmask 1045504
  %v225 = vrot.slane %v182, 2
  %v226 = vrot.slane %v183, 2
  %v227 = vsel %vm224, %v225, %v226
  %vm228 = vcmask 261120
  %v230 = vsel %vm228, %v182, %v201
  %v232 = vsel %vm228, %v183, %v203
  %vm233 = vcmask 523264
  %v235 = vsel %vm233, %v230, %v209
  %v237 = vsel %vm233, %v232, %v211
  %vm238 = vcmask 785408
  %v240 = vsel %vm238, %v235, %v221
  %v243 = vsel %vm238, %v237, %v223
  %v246 = vlaneseq
  %v247 = vshrl.u32 %v246, 7
  %v248 = vsub.s32 0, %v247
  %v249 = vrot.slane %v168, %v248
  %v250 = vlaneseq
  %v251 = vshrl.u32 %v250, 7
  %v252 = vsub.s32 1, %v251
  %v253 = vrot.slane %v168, %v252
  %v276 = vunpack.c.l.b16 %v51
  %v277 = vunpack.c.h.b16 %v51
  %v278 = vunpack.c.l.b16 %v52
  %v279 = vunpack.c.h.b16 %v52
  %v280 = vunpack.c.l.b16 %v53
  %v281 = vunpack.c.h.b16 %v53
  %v282 = vunpack.c.l.b16 %v54
  %v283 = vunpack.c.h.b16 %v54
  %v284 = vunpack.c.l.b16 %v55
  %v285 = vunpack.c.h.b16 %v55
  %v286 = vunpack.c.l.b16 %v56
  %v287 = vunpack.c.h.b16 %v56
  %v288 = vunpack.c.l.b16 %v57
  %v289 = vunpack.c.h.b16 %v57
  %v290 = vunpack.c.l.b16 %v58
  %v291 = vunpack.c.h.b16 %v58
  %v292 = vunpack.c.l.b16 %v59
  %v293 = vunpack.c.h.b16 %v59
  %v294 = vunpack.c.l.b16 %v60
  %v295 = vunpack.c.h.b16 %v60
  %v296 = vunpack.c.l.b16 %v61
  %v297 = vunpack.c.h.b16 %v61
  %v298 = vunpack.c.l.b16 %v62
  %v299 = vunpack.c.h.b16 %v62
  %v300 = vunpack.c.l.b16 %v63
  %v301 = vunpack.c.h.b16 %v63
  %v302 = vunpack.c.l.b16 %v64
  %v303 = vunpack.c.h.b16 %v64
  %v304 = vunpack.c.l.b16 %v65
  %v305 = vunpack.c.h.b16 %v65
  %v306 = vunpack.c.l.b16 %v66
  %v307 = vunpack.c.h.b16 %v66
  %v308 = vunpack.c.l.b16 %v67
  %v309 = vunpack.c.h.b16 %v67
  %v310 = vunpack.c.l.b16 %v68
  %v311 = vunpack.c.h.b16 %v68
  %v312 = vunpack.c.l.b16 %v69
  %v313 = vunpack.c.h.b16 %v69
  %v314 = vunpack.c.l.b16 %v70
  %v315 = vunpack.c.h.b16 %v70
  %v316 = vpack.c.b16 %v278, %v276
  %v317 = vpack.c.b16 %v279, %v277
  %v318 = vpack.c.b16 %v282, %v280
  %v319 = vpack.c.b16 %v283, %v281
  %v320 = vpack.c.b16 %v286, %v284
  %v321 = vpack.c.b16 %v287, %v285
  %v322 = vpack.c.b16 %v290, %v288
  %v323 = vpack.c.b16 %v291, %v289
  %v324 = vpack.c.b16 %v294, %v292
  %v325 = vpack.c.b16 %v295, %v293
  %v326 = vpack.c.b16 %v298, %v296
  %v327 = vpack.c.b16 %v299, %v297
  %v328 = vpack.c.b16 %v302, %v300
  %v329 = vpack.c.b16 %v303, %v301
  %v330 = vpack.c.b16 %v306, %v304
  %v331 = vpack.c.b16 %v307, %v305
  %v332 = vpack.c.b16 %v310, %v308
  %v333 = vpack.c.b16 %v311, %v309
  %v334 = vpack.c.b16 %v314, %v312
  %v335 = vpack.c.b16 %v315, %v313
  %v357 = vsel %vm228, %v227, 0
  %v360 = vsel %vm228, %v226, 0
  %362 = vmatprep.subr.bf16.mxu0 %v331
  %363 = vmatpush1.bf16.msra.mxu0 %v330
  %364 = vmatprep.subr.bf16.mxu0 %v329
  %365 = vmatpush1.bf16.msra.mxu0 %v328
  %366 = vmatprep.subr.bf16.mxu0 %v327
  %367 = vmatpush1.bf16.msra.mxu0 %v326
  %368 = vmatprep.subr.bf16.mxu0 %v325
  %369 = vmatpush1.bf16.msra.mxu0 %v324
  %370 = vmatprep.subr.bf16.mxu0 %v323
  %371 = vmatpush1.bf16.msra.mxu0 %v322
  %372 = vmatprep.subr.bf16.mxu0 %v321
  %373 = vmatpush1.bf16.msra.mxu0 %v320
  %374 = vmatprep.subr.bf16.mxu0 %v319
  %375 = vmatpush1.bf16.msra.mxu0 %v318
  %376 = vmatprep.subr.bf16.mxu0 %v317
  %377 = vmatpush1.bf16.msra.mxu0 %v316
  %378 = vmatprep.subr.bf16.mxu0 0
  %379 = vmatpush2.bf16.msra.mxu0 0
  %380 = vmatprep.subr.bf16.mxu0 0
  %381 = vmatpush2.bf16.msra.mxu0 0
  %382 = vmatprep.subr.bf16.mxu0 0
  %383 = vmatpush2.bf16.msra.mxu0 0
  %384 = vmatprep.subr.bf16.mxu0 0
  %385 = vmatpush2.bf16.msra.mxu0 0
  %386 = vmatprep.subr.bf16.mxu0 0
  %387 = vmatpush2.bf16.msra.mxu0 0
  %388 = vmatprep.subr.bf16.mxu0 0
  %389 = vmatpush2.bf16.msra.mxu0 0
  %390 = vmatprep.subr.bf16.mxu0 %v335
  %391 = vmatpush2.bf16.msra.mxu0 %v334
  %392 = vmatprep.subr.bf16.mxu0 %v333
  %393 = vmatpush2.bf16.msra.mxu0 %v332
  %394 = vmatprep.mubr.bf16.mxu0 %v357
  %395 = vmatmul.mubr.bf16.gmra.mxu0 %v240
  %v396 = vpop.f32.mrf.mxu0
  %v397 = vadd.f32 %v249, %v396
  %v398 = vpop.f32.mrf.mxu0
  %v399 = vadd.f32 %v253, %v398
  %v400 = vpop.f32.mrf.mxu0
  %v401 = vadd.f32 %v249, %v400
  %v402 = vpop.f32.mrf.mxu0
  %v403 = vadd.f32 %v253, %v402
  %404 = vmatprep.mubr.bf16.mxu0 %v360
  %405 = vmatmul.mubr.bf16.gmra.mxu0 %v243
  %v406 = vpop.f32.mrf.mxu0
  %v407 = vadd.f32 %v249, %v406
  %v408 = vpop.f32.mrf.mxu0
  %v409 = vadd.f32 %v253, %v408
  %v410 = vpop.f32.mrf.mxu0
  %v411 = vadd.f32 %v249, %v410
  %v412 = vpop.f32.mrf.mxu0
  %v413 = vadd.f32 %v253, %v412
  %414 = vdwg.mxu0
  %v415 = vsub.f32 0.0, %v397
  %v416 = vsub.f32 0.0, %v399
  %v417 = vsub.f32 0.0, %v401
  %v418 = vsub.f32 0.0, %v403
  %v419 = vsub.f32 0.0, %v407
  %v420 = vsub.f32 0.0, %v409
  %v421 = vsub.f32 0.0, %v411
  %v422 = vsub.f32 0.0, %v413
  %v423 = vmul.f32 %v415, 1.442695
  %v424 = vpow.pop %v423
  %v425 = vmul.f32 %v416, 1.442695
  %v426 = vpow.pop %v425
  %v427 = vmul.f32 %v417, 1.442695
  %v428 = vpow.pop %v427
  %v429 = vmul.f32 %v418, 1.442695
  %v430 = vpow.pop %v429
  %v431 = vmul.f32 %v419, 1.442695
  %v432 = vpow.pop %v431
  %v433 = vmul.f32 %v420, 1.442695
  %v434 = vpow.pop %v433
  %v435 = vmul.f32 %v421, 1.442695
  %v436 = vpow.pop %v435
  %v437 = vmul.f32 %v422, 1.442695
  %v438 = vpow.pop %v437
  %v439 = vadd.f32 %v424, 1.0
  %v440 = vadd.f32 %v426, 1.0
  %v441 = vadd.f32 %v428, 1.0
  %v442 = vadd.f32 %v430, 1.0
  %v443 = vadd.f32 %v432, 1.0
  %v444 = vadd.f32 %v434, 1.0
  %v445 = vadd.f32 %v436, 1.0
  %v446 = vadd.f32 %v438, 1.0
  %v447 = vrcp.pop %v439
  %v448 = vrcp.pop %v440
  %v449 = vrcp.pop %v441
  %v450 = vrcp.pop %v442
  %v451 = vrcp.pop %v443
  %v452 = vrcp.pop %v444
  %v453 = vrcp.pop %v445
  %v454 = vrcp.pop %v446
  %v455 = vpack.c.bf16 %v449, %v447
  %v456 = vpack.c.bf16 %v450, %v448
  %v457 = vpack.c.bf16 %v453, %v451
  %v458 = vpack.c.bf16 %v454, %v452
  %v480 = vunpack.c.l.b16 %v71
  %v481 = vunpack.c.l.b16 %v72
  %v482 = vunpack.c.l.b16 %v73
  %v483 = vunpack.c.l.b16 %v74
  %v484 = vunpack.c.l.b16 %v75
  %v485 = vunpack.c.l.b16 %v76
  %v486 = vunpack.c.l.b16 %v77
  %v487 = vunpack.c.l.b16 %v78
  %v488 = vunpack.c.l.b16 %v79
  %v489 = vunpack.c.l.b16 %v80
  %v490 = vunpack.c.l.b16 %v81
  %v491 = vunpack.c.l.b16 %v82
  %v492 = vunpack.c.l.b16 %v83
  %v493 = vunpack.c.l.b16 %v84
  %v494 = vunpack.c.l.b16 %v85
  %v495 = vunpack.c.l.b16 %v86
  %v496 = vunpack.c.l.b16 %v87
  %v497 = vunpack.c.l.b16 %v88
  %v498 = vunpack.c.l.b16 %v89
  %v499 = vunpack.c.l.b16 %v90
  %v500 = vunpack.c.l.b16 %v91
  %v501 = vpack.c.b16 %v481, %v480
  %v502 = vpack.c.b16 %v483, %v482
  %v503 = vpack.c.b16 %v485, %v484
  %v504 = vpack.c.b16 %v487, %v486
  %v505 = vpack.c.b16 %v489, %v488
  %v506 = vpack.c.b16 %v491, %v490
  %v507 = vpack.c.b16 %v493, %v492
  %v508 = vpack.c.b16 %v495, %v494
  %v509 = vpack.c.b16 %v497, %v496
  %v510 = vpack.c.b16 %v499, %v498
  %v511 = vpack.c.b16 %v500, %v500
  %vm522 = vcmask 326656
  %v524 = vsel %vm522, %v456, 0
  %v527 = vsel %vm522, %v458, 0
  %vm529 = vcmask 1043456
  %v531 = vsel %vm529, %v511, 0
  %533 = vmatprep.subr.bf16.mxu0 0
  %534 = vmatpush1.bf16.msra.mxu0 %v508
  %535 = vmatprep.subr.bf16.mxu0 0
  %536 = vmatpush1.bf16.msra.mxu0 %v507
  %537 = vmatprep.subr.bf16.mxu0 0
  %538 = vmatpush1.bf16.msra.mxu0 %v506
  %539 = vmatprep.subr.bf16.mxu0 0
  %540 = vmatpush1.bf16.msra.mxu0 %v505
  %541 = vmatprep.subr.bf16.mxu0 0
  %542 = vmatpush1.bf16.msra.mxu0 %v504
  %543 = vmatprep.subr.bf16.mxu0 0
  %544 = vmatpush1.bf16.msra.mxu0 %v503
  %545 = vmatprep.subr.bf16.mxu0 0
  %546 = vmatpush1.bf16.msra.mxu0 %v502
  %547 = vmatprep.subr.bf16.mxu0 0
  %548 = vmatpush1.bf16.msra.mxu0 %v501
  %549 = vmatprep.subr.bf16.mxu0 0
  %550 = vmatpush2.bf16.msra.mxu0 0
  %551 = vmatprep.subr.bf16.mxu0 0
  %552 = vmatpush2.bf16.msra.mxu0 0
  %553 = vmatprep.subr.bf16.mxu0 0
  %554 = vmatpush2.bf16.msra.mxu0 0
  %555 = vmatprep.subr.bf16.mxu0 0
  %556 = vmatpush2.bf16.msra.mxu0 0
  %557 = vmatprep.subr.bf16.mxu0 0
  %558 = vmatpush2.bf16.msra.mxu0 0
  %559 = vmatprep.subr.bf16.mxu0 0
  %560 = vmatpush2.bf16.msra.mxu0 %v531
  %561 = vmatprep.subr.bf16.mxu0 0
  %562 = vmatpush2.bf16.msra.mxu0 %v510
  %563 = vmatprep.subr.bf16.mxu0 0
  %564 = vmatpush2.bf16.msra.mxu0 %v509
  %565 = vmatprep.mubr.bf16.mxu0 %v524
  %566 = vmatmul.mubr.bf16.gmra.mxu0 %v455
  %v567 = vpop.f32.mrf.mxu0
  %v568 = vadd.f32 0.0, %v567
  %v569 = vpop.f32.mrf.mxu0
  %v570 = vpop.f32.mrf.mxu0
  %v571 = vadd.f32 0.0, %v570
  %v572 = vpop.f32.mrf.mxu0
  %573 = vmatprep.mubr.bf16.mxu0 %v527
  %574 = vmatmul.mubr.bf16.gmra.mxu0 %v457
  %v575 = vpop.f32.mrf.mxu0
  %v576 = vadd.f32 0.0, %v575
  %v577 = vpop.f32.mrf.mxu0
  %v578 = vpop.f32.mrf.mxu0
  %v579 = vadd.f32 0.0, %v578
  %v580 = vpop.f32.mrf.mxu0
  %581 = vdwg.mxu0
  %v582 = vpack.c.bf16 %v571, %v568
  %v583 = vpack.c.bf16 %v579, %v576
  %v586 = vunpack.c.l.b16 %v92
  %v587 = vunpack.c.l.b16 %v93
  %v588 = vpack.c.b16 %v587, %v586
  %vm589 = vcmask 228352
  %v591 = vsel %vm589, %v588, 0
  %vm593 = vcmask 1045504
  %v595 = vsel %vm593, %v583, 0
  %597 = vmatprep.subr.bf16.mxu0 0
  %598 = vmatpush1.bf16.msra.mxu0 0
  %599 = vmatprep.subr.bf16.mxu0 0
  %600 = vmatpush1.bf16.msra.mxu0 0
  %601 = vmatprep.subr.bf16.mxu0 0
  %602 = vmatpush1.bf16.msra.mxu0 0
  %603 = vmatprep.subr.bf16.mxu0 0
  %604 = vmatpush1.bf16.msra.mxu0 0
  %605 = vmatprep.subr.bf16.mxu0 0
  %606 = vmatpush1.bf16.msra.mxu0 0
  %607 = vmatprep.subr.bf16.mxu0 0
  %608 = vmatpush1.bf16.msra.mxu0 0
  %609 = vmatprep.subr.bf16.mxu0 0
  %610 = vmatpush1.bf16.msra.mxu0 %v595
  %611 = vmatprep.subr.bf16.mxu0 0
  %612 = vmatpush1.bf16.msra.mxu0 %v582
  %613 = vmatprep.subr.bf16.mxu0 0
  %614 = vmatpush2.bf16.msra.mxu0 0
  %615 = vmatprep.subr.bf16.mxu0 0
  %616 = vmatpush2.bf16.msra.mxu0 0
  %617 = vmatprep.subr.bf16.mxu0 0
  %618 = vmatpush2.bf16.msra.mxu0 0
  %619 = vmatprep.subr.bf16.mxu0 0
  %620 = vmatpush2.bf16.msra.mxu0 0
  %621 = vmatprep.subr.bf16.mxu0 0
  %622 = vmatpush2.bf16.msra.mxu0 0
  %623 = vmatprep.subr.bf16.mxu0 0
  %624 = vmatpush2.bf16.msra.mxu0 0
  %625 = vmatprep.subr.bf16.mxu0 0
  %626 = vmatpush2.bf16.msra.mxu0 0
  %627 = vmatprep.subr.bf16.mxu0 0
  %628 = vmatpush2.bf16.msra.mxu0 0
  %629 = vmatprep.mubr.bf16.mxu0 0
  %630 = vmatmul.mubr.bf16.gmra.mxu0 %v591
  %v631 = vpop.f32.mrf.mxu0
  %v632 = vadd.f32 0.0, %v631
  %v633 = vpop.f32.mrf.mxu0
  %v634 = vpop.f32.mrf.mxu0
  %v635 = vadd.f32 0.0, %v634
  %v636 = vpop.f32.mrf.mxu0
  %637 = vdwg.mxu0
  %v638 = vpack.c.bf16 %v635, %v632
  %v640 = vshrl.u32 %v638, 16
  %v642 = vshll.u32 %v638, 16
  %v644 = vrot.slane %v642, 1
  %v645 = vor.u32 %v640, %v644
  %646 = vrot.lane.b32.xlu0 %v645, 84
  %v647 = vpop.permute.xlu0 %646
  %v649 = vrot.slane %v638, 1
  %650 = vrot.lane.b32.xlu0 %v649, 40
  %v651 = vpop.permute.xlu0 %650
  %v652 = vrot.slane %v640, 1
  %v653 = vrot.slane %v642, 2
  %v654 = vor.u32 %v652, %v653
  %655 = vrot.lane.b32.xlu0 %v654, 124
  %v656 = vpop.permute.xlu0 %655
  %v657 = vrot.slane %v638, 2
  %658 = vrot.lane.b32.xlu0 %v657, 80
  %v659 = vpop.permute.xlu0 %658
  %vm660 = vcmask 687104
  %v662 = vsel %vm660, %v638, %v647
  %v665 = vsel %vm522, %v647, %v651
  %vm666 = vcmask 1014784
  %v668 = vsel %vm666, %v665, %v656
  %vm670 = vcmask 654336
  %v672 = vsel %vm670, %v656, %v659
  %v675 = vlaneseq
  %v676 = vshrl.u32 %v675, 7
  %v677 = vsub.s32 0, %v676
  %v678 = vrot.slane %v169, %v677
  %v679 = vlaneseq
  %v680 = vshrl.u32 %v679, 7
  %v681 = vsub.s32 1, %v680
  %v682 = vrot.slane %v169, %v681
  %v738 = vunpack.c.l.b16 %v94
  %v739 = vunpack.c.h.b16 %v94
  %v740 = vunpack.c.l.b16 %v95
  %v741 = vunpack.c.h.b16 %v95
  %v742 = vunpack.c.l.b16 %v96
  %v743 = vunpack.c.h.b16 %v96
  %v744 = vunpack.c.l.b16 %v97
  %v745 = vunpack.c.h.b16 %v97
  %v746 = vunpack.c.l.b16 %v98
  %v747 = vunpack.c.h.b16 %v98
  %v748 = vunpack.c.l.b16 %v99
  %v749 = vunpack.c.h.b16 %v99
  %v750 = vunpack.c.l.b16 %v100
  %v751 = vunpack.c.h.b16 %v100
  %v752 = vunpack.c.l.b16 %v101
  %v753 = vunpack.c.h.b16 %v101
  %v754 = vunpack.c.l.b16 %v102
  %v755 = vunpack.c.h.b16 %v102
  %v756 = vunpack.c.l.b16 %v103
  %v757 = vunpack.c.h.b16 %v103
  %v758 = vunpack.c.l.b16 %v104
  %v759 = vunpack.c.h.b16 %v104
  %v760 = vunpack.c.l.b16 %v105
  %v761 = vunpack.c.h.b16 %v105
  %v762 = vunpack.c.l.b16 %v106
  %v763 = vunpack.c.h.b16 %v106
  %v764 = vunpack.c.l.b16 %v107
  %v765 = vunpack.c.h.b16 %v107
  %v766 = vunpack.c.l.b16 %v108
  %v767 = vunpack.c.h.b16 %v108
  %v768 = vunpack.c.l.b16 %v109
  %v769 = vunpack.c.h.b16 %v109
  %v770 = vunpack.c.l.b16 %v110
  %v771 = vunpack.c.h.b16 %v110
  %v772 = vunpack.c.l.b16 %v111
  %v773 = vunpack.c.h.b16 %v111
  %v774 = vunpack.c.l.b16 %v112
  %v775 = vunpack.c.h.b16 %v112
  %v776 = vunpack.c.l.b16 %v113
  %v777 = vunpack.c.h.b16 %v113
  %v778 = vunpack.c.l.b16 %v114
  %v779 = vunpack.c.h.b16 %v114
  %v780 = vunpack.c.l.b16 %v115
  %v781 = vunpack.c.h.b16 %v115
  %v782 = vunpack.c.l.b16 %v116
  %v783 = vunpack.c.h.b16 %v116
  %v784 = vunpack.c.l.b16 %v117
  %v785 = vunpack.c.h.b16 %v117
  %v786 = vunpack.c.l.b16 %v118
  %v787 = vunpack.c.h.b16 %v118
  %v788 = vunpack.c.l.b16 %v119
  %v789 = vunpack.c.h.b16 %v119
  %v790 = vunpack.c.l.b16 %v120
  %v791 = vunpack.c.h.b16 %v120
  %v792 = vunpack.c.l.b16 %v121
  %v793 = vunpack.c.h.b16 %v121
  %v794 = vunpack.c.l.b16 %v122
  %v795 = vunpack.c.h.b16 %v122
  %v796 = vunpack.c.l.b16 %v123
  %v797 = vunpack.c.h.b16 %v123
  %v798 = vunpack.c.l.b16 %v124
  %v799 = vunpack.c.h.b16 %v124
  %v800 = vunpack.c.l.b16 %v125
  %v801 = vunpack.c.h.b16 %v125
  %v802 = vunpack.c.l.b16 %v126
  %v803 = vunpack.c.h.b16 %v126
  %v804 = vunpack.c.l.b16 %v127
  %v805 = vunpack.c.h.b16 %v127
  %v806 = vunpack.c.l.b16 %v128
  %v807 = vunpack.c.h.b16 %v128
  %v808 = vunpack.c.l.b16 %v129
  %v809 = vunpack.c.h.b16 %v129
  %v810 = vunpack.c.l.b16 %v130
  %v811 = vunpack.c.h.b16 %v130
  %v812 = vunpack.c.l.b16 %v131
  %v813 = vunpack.c.h.b16 %v131
  %v814 = vunpack.c.l.b16 %v132
  %v815 = vunpack.c.h.b16 %v132
  %v816 = vunpack.c.l.b16 %v133
  %v817 = vunpack.c.h.b16 %v133
  %v818 = vunpack.c.l.b16 %v134
  %v819 = vunpack.c.h.b16 %v134
  %v820 = vunpack.c.l.b16 %v135
  %v821 = vunpack.c.h.b16 %v135
  %v822 = vunpack.c.l.b16 %v136
  %v823 = vunpack.c.h.b16 %v136
  %v824 = vunpack.c.l.b16 %v137
  %v825 = vunpack.c.h.b16 %v137
  %v826 = vunpack.c.l.b16 %v138
  %v827 = vunpack.c.h.b16 %v138
  %v828 = vunpack.c.l.b16 %v139
  %v829 = vunpack.c.h.b16 %v139
  %v830 = vunpack.c.l.b16 %v140
  %v831 = vunpack.c.h.b16 %v140
  %v832 = vunpack.c.l.b16 %v141
  %v833 = vunpack.c.h.b16 %v141
  %v834 = vunpack.c.l.b16 %v142
  %v835 = vunpack.c.h.b16 %v142
  %v836 = vunpack.c.l.b16 %v143
  %v837 = vunpack.c.h.b16 %v143
  %v838 = vunpack.c.l.b16 %v144
  %v839 = vunpack.c.h.b16 %v144
  %v840 = vunpack.c.l.b16 %v145
  %v841 = vunpack.c.h.b16 %v145
  %v842 = vunpack.c.l.b16 %v146
  %v843 = vunpack.c.h.b16 %v146
  %v844 = vpack.c.b16 %v740, %v738
  %v845 = vpack.c.b16 %v741, %v739
  %v846 = vpack.c.b16 %v744, %v742
  %v847 = vpack.c.b16 %v745, %v743
  %v848 = vpack.c.b16 %v748, %v746
  %v849 = vpack.c.b16 %v749, %v747
  %v850 = vpack.c.b16 %v752, %v750
  %v851 = vpack.c.b16 %v753, %v751
  %v852 = vpack.c.b16 %v756, %v754
  %v853 = vpack.c.b16 %v757, %v755
  %v854 = vpack.c.b16 %v760, %v758
  %v855 = vpack.c.b16 %v761, %v759
  %v856 = vpack.c.b16 %v764, %v762
  %v857 = vpack.c.b16 %v765, %v763
  %v858 = vpack.c.b16 %v768, %v766
  %v859 = vpack.c.b16 %v769, %v767
  %v860 = vpack.c.b16 %v772, %v770
  %v861 = vpack.c.b16 %v773, %v771
  %v862 = vpack.c.b16 %v776, %v774
  %v863 = vpack.c.b16 %v777, %v775
  %v864 = vpack.c.b16 %v780, %v778
  %v865 = vpack.c.b16 %v781, %v779
  %v866 = vpack.c.b16 %v784, %v782
  %v867 = vpack.c.b16 %v785, %v783
  %v868 = vpack.c.b16 %v788, %v786
  %v869 = vpack.c.b16 %v789, %v787
  %v870 = vpack.c.b16 %v792, %v790
  %v871 = vpack.c.b16 %v793, %v791
  %v872 = vpack.c.b16 %v796, %v794
  %v873 = vpack.c.b16 %v797, %v795
  %v874 = vpack.c.b16 %v800, %v798
  %v875 = vpack.c.b16 %v801, %v799
  %v876 = vpack.c.b16 %v804, %v802
  %v877 = vpack.c.b16 %v805, %v803
  %v878 = vpack.c.b16 %v808, %v806
  %v879 = vpack.c.b16 %v809, %v807
  %v880 = vpack.c.b16 %v812, %v810
  %v881 = vpack.c.b16 %v813, %v811
  %v882 = vpack.c.b16 %v816, %v814
  %v883 = vpack.c.b16 %v817, %v815
  %v884 = vpack.c.b16 %v820, %v818
  %v885 = vpack.c.b16 %v821, %v819
  %v886 = vpack.c.b16 %v824, %v822
  %v887 = vpack.c.b16 %v825, %v823
  %v888 = vpack.c.b16 %v828, %v826
  %v889 = vpack.c.b16 %v829, %v827
  %v890 = vpack.c.b16 %v832, %v830
  %v891 = vpack.c.b16 %v833, %v831
  %v892 = vpack.c.b16 %v836, %v834
  %v893 = vpack.c.b16 %v837, %v835
  %v894 = vpack.c.b16 %v840, %v838
  %v895 = vpack.c.b16 %v841, %v839
  %v896 = vpack.c.b16 %v842, %v842
  %v897 = vpack.c.b16 %v843, %v843
  %vm950 = vcmask 293888
  %v951 = vsel %vm950, %v659, 0
  %vm953 = vcmask 1041408
  %v955 = vsel %vm953, %v896, 0
  %v958 = vsel %vm953, %v897, 0
  %960 = vmatprep.subr.bf16.mxu0 %v859
  %961 = vmatpush1.bf16.msra.mxu0 %v858
  %962 = vmatprep.subr.bf16.mxu0 %v857
  %963 = vmatpush1.bf16.msra.mxu0 %v856
  %964 = vmatprep.subr.bf16.mxu0 %v855
  %965 = vmatpush1.bf16.msra.mxu0 %v854
  %966 = vmatprep.subr.bf16.mxu0 %v853
  %967 = vmatpush1.bf16.msra.mxu0 %v852
  %968 = vmatprep.subr.bf16.mxu0 %v851
  %969 = vmatpush1.bf16.msra.mxu0 %v850
  %970 = vmatprep.subr.bf16.mxu0 %v849
  %971 = vmatpush1.bf16.msra.mxu0 %v848
  %972 = vmatprep.subr.bf16.mxu0 %v847
  %973 = vmatpush1.bf16.msra.mxu0 %v846
  %974 = vmatprep.subr.bf16.mxu0 %v845
  %975 = vmatpush1.bf16.msra.mxu0 %v844
  %976 = vmatprep.subr.bf16.mxu0 %v875
  %977 = vmatpush2.bf16.msra.mxu0 %v874
  %978 = vmatprep.subr.bf16.mxu0 %v873
  %979 = vmatpush2.bf16.msra.mxu0 %v872
  %980 = vmatprep.subr.bf16.mxu0 %v871
  %981 = vmatpush2.bf16.msra.mxu0 %v870
  %982 = vmatprep.subr.bf16.mxu0 %v869
  %983 = vmatpush2.bf16.msra.mxu0 %v868
  %984 = vmatprep.subr.bf16.mxu0 %v867
  %985 = vmatpush2.bf16.msra.mxu0 %v866
  %986 = vmatprep.subr.bf16.mxu0 %v865
  %987 = vmatpush2.bf16.msra.mxu0 %v864
  %988 = vmatprep.subr.bf16.mxu0 %v863
  %989 = vmatpush2.bf16.msra.mxu0 %v862
  %990 = vmatprep.subr.bf16.mxu0 %v861
  %991 = vmatpush2.bf16.msra.mxu0 %v860
  %992 = vmatprep.mubr.bf16.mxu0 %v668
  %993 = vmatmul.mubr.bf16.gmra.mxu0 %v662
  %v994 = vpop.f32.mrf.mxu0
  %v995 = vadd.f32 %v678, %v994
  %v996 = vpop.f32.mrf.mxu0
  %v997 = vadd.f32 %v682, %v996
  %v998 = vpop.f32.mrf.mxu0
  %v999 = vadd.f32 %v678, %v998
  %v1000 = vpop.f32.mrf.mxu0
  %v1001 = vadd.f32 %v682, %v1000
  %1002 = vdwg.mxu0
  %1003 = vmatprep.subr.bf16.mxu0 %v891
  %1004 = vmatpush1.bf16.msra.mxu0 %v890
  %1005 = vmatprep.subr.bf16.mxu0 %v889
  %1006 = vmatpush1.bf16.msra.mxu0 %v888
  %1007 = vmatprep.subr.bf16.mxu0 %v887
  %1008 = vmatpush1.bf16.msra.mxu0 %v886
  %1009 = vmatprep.subr.bf16.mxu0 %v885
  %1010 = vmatpush1.bf16.msra.mxu0 %v884
  %1011 = vmatprep.subr.bf16.mxu0 %v883
  %1012 = vmatpush1.bf16.msra.mxu0 %v882
  %1013 = vmatprep.subr.bf16.mxu0 %v881
  %1014 = vmatpush1.bf16.msra.mxu0 %v880
  %1015 = vmatprep.subr.bf16.mxu0 %v879
  %1016 = vmatpush1.bf16.msra.mxu0 %v878
  %1017 = vmatprep.subr.bf16.mxu0 %v877
  %1018 = vmatpush1.bf16.msra.mxu0 %v876
  %1019 = vmatprep.subr.bf16.mxu0 0
  %1020 = vmatpush2.bf16.msra.mxu0 0
  %1021 = vmatprep.subr.bf16.mxu0 0
  %1022 = vmatpush2.bf16.msra.mxu0 0
  %1023 = vmatprep.subr.bf16.mxu0 0
  %1024 = vmatpush2.bf16.msra.mxu0 0
  %1025 = vmatprep.subr.bf16.mxu0 0
  %1026 = vmatpush2.bf16.msra.mxu0 0
  %1027 = vmatprep.subr.bf16.mxu0 0
  %1028 = vmatpush2.bf16.msra.mxu0 0
  %1029 = vmatprep.subr.bf16.mxu0 %v958
  %1030 = vmatpush2.bf16.msra.mxu0 %v955
  %1031 = vmatprep.subr.bf16.mxu0 %v895
  %1032 = vmatpush2.bf16.msra.mxu0 %v894
  %1033 = vmatprep.subr.bf16.mxu0 %v893
  %1034 = vmatpush2.bf16.msra.mxu0 %v892
  %1035 = vmatprep.mubr.bf16.mxu0 %v951
  %1036 = vmatmul.mubr.bf16.gmra.mxu0 %v672
  %v1037 = vpop.f32.mrf.mxu0
  %v1038 = vadd.f32 %v995, %v1037
  %v1039 = vpop.f32.mrf.mxu0
  %v1040 = vadd.f32 %v997, %v1039
  %v1041 = vpop.f32.mrf.mxu0
  %v1042 = vadd.f32 %v999, %v1041
  %v1043 = vpop.f32.mrf.mxu0
  %v1044 = vadd.f32 %v1001, %v1043
  %1045 = vdwg.mxu0
  %v1046 = vsub.f32 0.0, %v1038
  %v1047 = vsub.f32 0.0, %v1040
  %v1048 = vsub.f32 0.0, %v1042
  %v1049 = vsub.f32 0.0, %v1044
  %v1050 = vmul.f32 %v1046, 1.442695
  %v1051 = vpow.pop %v1050
  %v1052 = vmul.f32 %v1047, 1.442695
  %v1053 = vpow.pop %v1052
  %v1054 = vmul.f32 %v1048, 1.442695
  %v1055 = vpow.pop %v1054
  %v1056 = vmul.f32 %v1049, 1.442695
  %v1057 = vpow.pop %v1056
  %v1058 = vadd.f32 %v1051, 1.0
  %v1059 = vadd.f32 %v1053, 1.0
  %v1060 = vadd.f32 %v1055, 1.0
  %v1061 = vadd.f32 %v1057, 1.0
  %v1062 = vrcp.pop %v1058
  %v1063 = vrcp.pop %v1059
  %v1064 = vrcp.pop %v1060
  %v1065 = vrcp.pop %v1061
  %v1066 = vpack.c.bf16 %v1064, %v1062
  %v1067 = vpack.c.bf16 %v1065, %v1063
  %v1088 = vunpack.c.l.b16 %v147
  %v1089 = vunpack.c.l.b16 %v148
  %v1090 = vunpack.c.l.b16 %v149
  %v1091 = vunpack.c.l.b16 %v150
  %v1092 = vunpack.c.l.b16 %v151
  %v1093 = vunpack.c.l.b16 %v152
  %v1094 = vunpack.c.l.b16 %v153
  %v1095 = vunpack.c.l.b16 %v154
  %v1096 = vunpack.c.l.b16 %v155
  %v1097 = vunpack.c.l.b16 %v156
  %v1098 = vunpack.c.l.b16 %v157
  %v1099 = vunpack.c.l.b16 %v158
  %v1100 = vunpack.c.l.b16 %v159
  %v1101 = vunpack.c.l.b16 %v160
  %v1102 = vunpack.c.l.b16 %v161
  %v1103 = vunpack.c.l.b16 %v162
  %v1104 = vunpack.c.l.b16 %v163
  %v1105 = vunpack.c.l.b16 %v164
  %v1106 = vunpack.c.l.b16 %v165
  %v1107 = vunpack.c.l.b16 %v166
  %v1108 = vpack.c.b16 %v1089, %v1088
  %v1109 = vpack.c.b16 %v1091, %v1090
  %v1110 = vpack.c.b16 %v1093, %v1092
  %v1111 = vpack.c.b16 %v1095, %v1094
  %v1112 = vpack.c.b16 %v1097, %v1096
  %v1113 = vpack.c.b16 %v1099, %v1098
  %v1114 = vpack.c.b16 %v1101, %v1100
  %v1115 = vpack.c.b16 %v1103, %v1102
  %v1116 = vpack.c.b16 %v1105, %v1104
  %v1117 = vpack.c.b16 %v1107, %v1106
  %v1129 = vsel %vm228, %v1067, 0
  %1131 = vmatprep.subr.bf16.mxu0 0
  %1132 = vmatpush1.bf16.msra.mxu0 %v1115
  %1133 = vmatprep.subr.bf16.mxu0 0
  %1134 = vmatpush1.bf16.msra.mxu0 %v1114
  %1135 = vmatprep.subr.bf16.mxu0 0
  %1136 = vmatpush1.bf16.msra.mxu0 %v1113
  %1137 = vmatprep.subr.bf16.mxu0 0
  %1138 = vmatpush1.bf16.msra.mxu0 %v1112
  %1139 = vmatprep.subr.bf16.mxu0 0
  %1140 = vmatpush1.bf16.msra.mxu0 %v1111
  %1141 = vmatprep.subr.bf16.mxu0 0
  %1142 = vmatpush1.bf16.msra.mxu0 %v1110
  %1143 = vmatprep.subr.bf16.mxu0 0
  %1144 = vmatpush1.bf16.msra.mxu0 %v1109
  %1145 = vmatprep.subr.bf16.mxu0 0
  %1146 = vmatpush1.bf16.msra.mxu0 %v1108
  %1147 = vmatprep.subr.bf16.mxu0 0
  %1148 = vmatpush2.bf16.msra.mxu0 0
  %1149 = vmatprep.subr.bf16.mxu0 0
  %1150 = vmatpush2.bf16.msra.mxu0 0
  %1151 = vmatprep.subr.bf16.mxu0 0
  %1152 = vmatpush2.bf16.msra.mxu0 0
  %1153 = vmatprep.subr.bf16.mxu0 0
  %1154 = vmatpush2.bf16.msra.mxu0 0
  %1155 = vmatprep.subr.bf16.mxu0 0
  %1156 = vmatpush2.bf16.msra.mxu0 0
  %1157 = vmatprep.subr.bf16.mxu0 0
  %1158 = vmatpush2.bf16.msra.mxu0 0
  %1159 = vmatprep.subr.bf16.mxu0 0
  %1160 = vmatpush2.bf16.msra.mxu0 %v1117
  %1161 = vmatprep.subr.bf16.mxu0 0
  %1162 = vmatpush2.bf16.msra.mxu0 %v1116
  %1163 = vmatprep.mubr.bf16.mxu0 %v1129
  %1164 = vmatmul.mubr.bf16.gmra.mxu0 %v1066
  %v1165 = vpop.f32.mrf.mxu0
  %v1166 = vadd.f32 0.0, %v1165
  %v1167 = vpop.f32.mrf.mxu0
  %v1168 = vpop.f32.mrf.mxu0
  %v1169 = vadd.f32 0.0, %v1168
  %v1170 = vpop.f32.mrf.mxu0
  %1171 = vdwg.mxu0
  %v1172 = vpack.c.bf16 %v1169, %v1166
  %vm1173 = vcmask 80896
  %v1175 = vsel %vm1173, %v167, 0
  %vm1177 = vcmask 1044480
  %v1179 = vsel %vm1177, %v1172, 0
  %1181 = vmatprep.subr.bf16.mxu0 0
  %1182 = vmatpush1.bf16.msra.mxu0 0
  %1183 = vmatprep.subr.bf16.mxu0 0
  %1184 = vmatpush1.bf16.msra.mxu0 0
  %1185 = vmatprep.subr.bf16.mxu0 0
  %1186 = vmatpush1.bf16.msra.mxu0 0
  %1187 = vmatprep.subr.bf16.mxu0 0
  %1188 = vmatpush1.bf16.msra.mxu0 0
  %1189 = vmatprep.subr.bf16.mxu0 0
  %1190 = vmatpush1.bf16.msra.mxu0 0
  %1191 = vmatprep.subr.bf16.mxu0 0
  %1192 = vmatpush1.bf16.msra.mxu0 0
  %1193 = vmatprep.subr.bf16.mxu0 0
  %1194 = vmatpush1.bf16.msra.mxu0 0
  %1195 = vmatprep.subr.bf16.mxu0 0
  %1196 = vmatpush1.bf16.msra.mxu0 %v1179
  %1197 = vmatprep.subr.bf16.mxu0 0
  %1198 = vmatpush2.bf16.msra.mxu0 0
  %1199 = vmatprep.subr.bf16.mxu0 0
  %1200 = vmatpush2.bf16.msra.mxu0 0
  %1201 = vmatprep.subr.bf16.mxu0 0
  %1202 = vmatpush2.bf16.msra.mxu0 0
  %1203 = vmatprep.subr.bf16.mxu0 0
  %1204 = vmatpush2.bf16.msra.mxu0 0
  %1205 = vmatprep.subr.bf16.mxu0 0
  %1206 = vmatpush2.bf16.msra.mxu0 0
  %1207 = vmatprep.subr.bf16.mxu0 0
  %1208 = vmatpush2.bf16.msra.mxu0 0
  %1209 = vmatprep.subr.bf16.mxu0 0
  %1210 = vmatpush2.bf16.msra.mxu0 0
  %1211 = vmatprep.subr.bf16.mxu0 0
  %1212 = vmatpush2.bf16.msra.mxu0 0
  %1213 = vmatprep.mubr.bf16.mxu0 0
  %1214 = vmatmul.mubr.bf16.gmra.mxu0 %v1175
  %v1215 = vpop.f32.mrf.mxu0
  %v1216 = vadd.f32 0.0, %v1215
  %v1217 = vpop.f32.mrf.mxu0
  %v1218 = vpop.f32.mrf.mxu0
  %v1219 = vpop.f32.mrf.mxu0
  %1220 = vdwg.mxu0
  %vm1221 = vcmask 647168
  %1222 = vst.msk [vmem:[#allocation2] sm:$0x1] %vm1221, %v1216
  %v1224 = vrot.slane %v1216, 1
  %1225 = vrot.lane.b32.xlu0 %v1224, 80
  %v1226 = vpop.permute.xlu0 %1225
  %vm1228 = vcmask 1041024
  %1229 = vst.msk [vmem:[#allocation2] sm:$0x1] %vm1228, %v1226
  %vm1230 = vcmask 253952
  %1231 = vst.msk [vmem:[#allocation2 + $0x8] sm:$0x1] %vm1230, %v1226
  %v1232 = vrot.slane %v1216, 2
  %1233 = vrot.lane.b32.xlu0 %v1232, 32
  %v1234 = vpop.permute.xlu0 %1233
  %vm1236 = vcmask 909568
  %1237 = vst.msk [vmem:[#allocation2 + $0x8] sm:$0x1] %vm1236, %v1234
  %v1238 = vrot.slane %v1216, 3
  %1239 = vrot.lane.b32.xlu0 %v1238, 112
  %v1240 = vpop.permute.xlu0 %1239
  %vm1242 = vcmask 1041280
  %1243 = vst.msk [vmem:[#allocation2 + $0x8] sm:$0x1] %vm1242, %v1240
  %vm1244 = vcmask 516096
  %1245 = vst.msk [vmem:[#allocation2 + $0x10] sm:$0x1] %vm1244, %v1240
  %v1246 = vrot.slane %v1216, 4
  %1247 = vrot.lane.b32.xlu0 %v1246, 64
  %v1248 = vpop.permute.xlu0 %1247
  %vm1250 = vcmask 1040896
  %1251 = vst.msk [vmem:[#allocation2 + $0x10] sm:$0x1] %vm1250, %v1248
  %vm1252 = vcmask 122880
  %1253 = vst.msk [vmem:[#allocation2 + $0x18] sm:$0x1] %vm1252, %v1248
  %s1254 = scalar_lea.vmem %s0, 16
  %v1255 = vld [vmem:[%s1254] sm:$0xf]
  %v1256 = vld [vmem:[%s1254 + $0x4] sm:$0xf]
  %v1257 = vld [vmem:[%s1254 + $0x8] sm:$0xf]
  %v1258 = vld [vmem:[%s1254 + $0xc] sm:$0xf]
  %v1263 = vunpack.c.l.b16 %v1255
  %v1264 = vunpack.c.l.b16 %v1256
  %v1265 = vunpack.c.l.b16 %v1257
  %v1266 = vunpack.c.l.b16 %v1258
  %v1267 = vpack.c.b16 %v1264, %v1263
  %v1268 = vpack.c.b16 %v1266, %v1265
  %v1270 = vshrl.u32 %v1267, 16
  %v1272 = vshll.u32 %v1267, 16
  %v1274 = vrot.slane %v1272, 1
  %v1275 = vor.u32 %v1270, %v1274
  %v1277 = vshll.u32 %v1268, 16
  %v1279 = vrot.slane %v1277, 1
  %v1280 = vsel %vm184, %v1275, %v1279
  %v1281 = vshrl.u32 %v1268, 16
  %v1283 = vor.u32 %v1281, %v1279
  %1284 = vrot.lane.b32.xlu0 %v1280, 32
  %v1285 = vpop.permute.xlu0 %1284
  %1286 = vrot.lane.b32.xlu0 %v1283, 32
  %v1287 = vpop.permute.xlu0 %1286
  %v1288 = vrot.slane %v1267, 1
  %v1289 = vrot.slane %v1268, 1
  %v1290 = vsel %vm204, %v1288, %v1289
  %1291 = vrot.lane.b32.xlu0 %v1290, 64
  %v1292 = vpop.permute.xlu0 %1291
  %1293 = vrot.lane.b32.xlu0 %v1289, 64
  %v1294 = vpop.permute.xlu0 %1293
  %v1295 = vrot.slane %v1270, 1
  %v1296 = vrot.slane %v1272, 2
  %v1297 = vor.u32 %v1295, %v1296
  %v1298 = vrot.slane %v1281, 1
  %v1299 = vrot.slane %v1277, 2
  %v1300 = vor.u32 %v1298, %v1299
  %v1301 = vsel %vm212, %v1297, %v1300
  %1302 = vrot.lane.b32.xlu0 %v1301, 96
  %v1303 = vpop.permute.xlu0 %1302
  %1304 = vrot.lane.b32.xlu0 %v1300, 96
  %v1305 = vpop.permute.xlu0 %1304
  %v1306 = vrot.slane %v1267, 2
  %v1307 = vrot.slane %v1268, 2
  %v1308 = vsel %vm224, %v1306, %v1307
  %v1310 = vsel %vm228, %v1267, %v1285
  %v1312 = vsel %vm228, %v1268, %v1287
  %v1314 = vsel %vm233, %v1310, %v1292
  %v1316 = vsel %vm233, %v1312, %v1294
  %v1318 = vsel %vm238, %v1314, %v1303
  %v1321 = vsel %vm238, %v1316, %v1305
  %v1324 = vsel %vm228, %v1308, 0
  %v1327 = vsel %vm228, %v1307, 0
  %1329 = vmatprep.subr.bf16.mxu0 %v331
  %1330 = vmatpush1.bf16.msra.mxu0 %v330
  %1331 = vmatprep.subr.bf16.mxu0 %v329
  %1332 = vmatpush1.bf16.msra.mxu0 %v328
  %1333 = vmatprep.subr.bf16.mxu0 %v327
  %1334 = vmatpush1.bf16.msra.mxu0 %v326
  %1335 = vmatprep.subr.bf16.mxu0 %v325
  %1336 = vmatpush1.bf16.msra.mxu0 %v324
  %1337 = vmatprep.subr.bf16.mxu0 %v323
  %1338 = vmatpush1.bf16.msra.mxu0 %v322
  %1339 = vmatprep.subr.bf16.mxu0 %v321
  %1340 = vmatpush1.bf16.msra.mxu0 %v320
  %1341 = vmatprep.subr.bf16.mxu0 %v319
  %1342 = vmatpush1.bf16.msra.mxu0 %v318
  %1343 = vmatprep.subr.bf16.mxu0 %v317
  %1344 = vmatpush1.bf16.msra.mxu0 %v316
  %1345 = vmatprep.subr.bf16.mxu0 0
  %1346 = vmatpush2.bf16.msra.mxu0 0
  %1347 = vmatprep.subr.bf16.mxu0 0
  %1348 = vmatpush2.bf16.msra.mxu0 0
  %1349 = vmatprep.subr.bf16.mxu0 0
  %1350 = vmatpush2.bf16.msra.mxu0 0
  %1351 = vmatprep.subr.bf16.mxu0 0
  %1352 = vmatpush2.bf16.msra.mxu0 0
  %1353 = vmatprep.subr.bf16.mxu0 0
  %1354 = vmatpush2.bf16.msra.mxu0 0
  %1355 = vmatprep.subr.bf16.mxu0 0
  %1356 = vmatpush2.bf16.msra.mxu0 0
  %1357 = vmatprep.subr.bf16.mxu0 %v335
  %1358 = vmatpush2.bf16.msra.mxu0 %v334
  %1359 = vmatprep.subr.bf16.mxu0 %v333
  %1360 = vmatpush2.bf16.msra.mxu0 %v332
  %1361 = vmatprep.mubr.bf16.mxu0 %v1324
  %1362 = vmatmul.mubr.bf16.gmra.mxu0 %v1318
  %v1363 = vpop.f32.mrf.mxu0
  %v1364 = vadd.f32 %v249, %v1363
  %v1365 = vpop.f32.mrf.mxu0
  %v1366 = vadd.f32 %v253, %v1365
  %v1367 = vpop.f32.mrf.mxu0
  %v1368 = vadd.f32 %v249, %v1367
  %v1369 = vpop.f32.mrf.mxu0
  %v1370 = vadd.f32 %v253, %v1369
  %1371 = vmatprep.mubr.bf16.mxu0 %v1327
  %1372 = vmatmul.mubr.bf16.gmra.mxu0 %v1321
  %v1373 = vpop.f32.mrf.mxu0
  %v1374 = vadd.f32 %v249, %v1373
  %v1375 = vpop.f32.mrf.mxu0
  %v1376 = vadd.f32 %v253, %v1375
  %v1377 = vpop.f32.mrf.mxu0
  %v1378 = vadd.f32 %v249, %v1377
  %v1379 = vpop.f32.mrf.mxu0
  %v1380 = vadd.f32 %v253, %v1379
  %1381 = vdwg.mxu0
  %v1382 = vsub.f32 0.0, %v1364
  %v1383 = vsub.f32 0.0, %v1366
  %v1384 = vsub.f32 0.0, %v1368
  %v1385 = vsub.f32 0.0, %v1370
  %v1386 = vsub.f32 0.0, %v1374
  %v1387 = vsub.f32 0.0, %v1376
  %v1388 = vsub.f32 0.0, %v1378
  %v1389 = vsub.f32 0.0, %v1380
  %v1390 = vmul.f32 %v1382, 1.442695
  %v1391 = vpow.pop %v1390
  %v1392 = vmul.f32 %v1383, 1.442695
  %v1393 = vpow.pop %v1392
  %v1394 = vmul.f32 %v1384, 1.442695
  %v1395 = vpow.pop %v1394
  %v1396 = vmul.f32 %v1385, 1.442695
  %v1397 = vpow.pop %v1396
  %v1398 = vmul.f32 %v1386, 1.442695
  %v1399 = vpow.pop %v1398
  %v1400 = vmul.f32 %v1387, 1.442695
  %v1401 = vpow.pop %v1400
  %v1402 = vmul.f32 %v1388, 1.442695
  %v1403 = vpow.pop %v1402
  %v1404 = vmul.f32 %v1389, 1.442695
  %v1405 = vpow.pop %v1404
  %v1406 = vadd.f32 %v1391, 1.0
  %v1407 = vadd.f32 %v1393, 1.0
  %v1408 = vadd.f32 %v1395, 1.0
  %v1409 = vadd.f32 %v1397, 1.0
  %v1410 = vadd.f32 %v1399, 1.0
  %v1411 = vadd.f32 %v1401, 1.0
  %v1412 = vadd.f32 %v1403, 1.0
  %v1413 = vadd.f32 %v1405, 1.0
  %v1414 = vrcp.pop %v1406
  %v1415 = vrcp.pop %v1407
  %v1416 = vrcp.pop %v1408
  %v1417 = vrcp.pop %v1409
  %v1418 = vrcp.pop %v1410
  %v1419 = vrcp.pop %v1411
  %v1420 = vrcp.pop %v1412
  %v1421 = vrcp.pop %v1413
  %v1422 = vpack.c.bf16 %v1416, %v1414
  %v1423 = vpack.c.bf16 %v1417, %v1415
  %v1424 = vpack.c.bf16 %v1420, %v1418
  %v1425 = vpack.c.bf16 %v1421, %v1419
  %v1427 = vsel %vm522, %v1423, 0
  %v1430 = vsel %vm522, %v1425, 0
  %1432 = vmatprep.subr.bf16.mxu0 0
  %1433 = vmatpush1.bf16.msra.mxu0 %v508
  %1434 = vmatprep.subr.bf16.mxu0 0
  %1435 = vmatpush1.bf16.msra.mxu0 %v507
  %1436 = vmatprep.subr.bf16.mxu0 0
  %1437 = vmatpush1.bf16.msra.mxu0 %v506
  %1438 = vmatprep.subr.bf16.mxu0 0
  %1439 = vmatpush1.bf16.msra.mxu0 %v505
  %1440 = vmatprep.subr.bf16.mxu0 0
  %1441 = vmatpush1.bf16.msra.mxu0 %v504
  %1442 = vmatprep.subr.bf16.mxu0 0
  %1443 = vmatpush1.bf16.msra.mxu0 %v503
  %1444 = vmatprep.subr.bf16.mxu0 0
  %1445 = vmatpush1.bf16.msra.mxu0 %v502
  %1446 = vmatprep.subr.bf16.mxu0 0
  %1447 = vmatpush1.bf16.msra.mxu0 %v501
  %1448 = vmatprep.subr.bf16.mxu0 0
  %1449 = vmatpush2.bf16.msra.mxu0 0
  %1450 = vmatprep.subr.bf16.mxu0 0
  %1451 = vmatpush2.bf16.msra.mxu0 0
  %1452 = vmatprep.subr.bf16.mxu0 0
  %1453 = vmatpush2.bf16.msra.mxu0 0
  %1454 = vmatprep.subr.bf16.mxu0 0
  %1455 = vmatpush2.bf16.msra.mxu0 0
  %1456 = vmatprep.subr.bf16.mxu0 0
  %1457 = vmatpush2.bf16.msra.mxu0 0
  %1458 = vmatprep.subr.bf16.mxu0 0
  %1459 = vmatpush2.bf16.msra.mxu0 %v531
  %1460 = vmatprep.subr.bf16.mxu0 0
  %1461 = vmatpush2.bf16.msra.mxu0 %v510
  %1462 = vmatprep.subr.bf16.mxu0 0
  %1463 = vmatpush2.bf16.msra.mxu0 %v509
  %1464 = vmatprep.mubr.bf16.mxu0 %v1427
  %1465 = vmatmul.mubr.bf16.gmra.mxu0 %v1422
  %v1466 = vpop.f32.mrf.mxu0
  %v1467 = vadd.f32 0.0, %v1466
  %v1468 = vpop.f32.mrf.mxu0
  %v1469 = vpop.f32.mrf.mxu0
  %v1470 = vadd.f32 0.0, %v1469
  %v1471 = vpop.f32.mrf.mxu0
  %1472 = vmatprep.mubr.bf16.mxu0 %v1430
  %1473 = vmatmul.mubr.bf16.gmra.mxu0 %v1424
  %v1474 = vpop.f32.mrf.mxu0
  %v1475 = vadd.f32 0.0, %v1474
  %v1476 = vpop.f32.mrf.mxu0
  %v1477 = vpop.f32.mrf.mxu0
  %v1478 = vadd.f32 0.0, %v1477
  %v1479 = vpop.f32.mrf.mxu0
  %1480 = vdwg.mxu0
  %v1481 = vpack.c.bf16 %v1470, %v1467
  %v1482 = vpack.c.bf16 %v1478, %v1475
  %v1484 = vsel %vm593, %v1482, 0
  %1486 = vmatprep.subr.bf16.mxu0 0
  %1487 = vmatpush1.bf16.msra.mxu0 0
  %1488 = vmatprep.subr.bf16.mxu0 0
  %1489 = vmatpush1.bf16.msra.mxu0 0
  %1490 = vmatprep.subr.bf16.mxu0 0
  %1491 = vmatpush1.bf16.msra.mxu0 0
  %1492 = vmatprep.subr.bf16.mxu0 0
  %1493 = vmatpush1.bf16.msra.mxu0 0
  %1494 = vmatprep.subr.bf16.mxu0 0
  %1495 = vmatpush1.bf16.msra.mxu0 0
  %1496 = vmatprep.subr.bf16.mxu0 0
  %1497 = vmatpush1.bf16.msra.mxu0 0
  %1498 = vmatprep.subr.bf16.mxu0 0
  %1499 = vmatpush1.bf16.msra.mxu0 %v1484
  %1500 = vmatprep.subr.bf16.mxu0 0
  %1501 = vmatpush1.bf16.msra.mxu0 %v1481
  %1502 = vmatprep.subr.bf16.mxu0 0
  %1503 = vmatpush2.bf16.msra.mxu0 0
  %1504 = vmatprep.subr.bf16.mxu0 0
  %1505 = vmatpush2.bf16.msra.mxu0 0
  %1506 = vmatprep.subr.bf16.mxu0 0
  %1507 = vmatpush2.bf16.msra.mxu0 0
  %1508 = vmatprep.subr.bf16.mxu0 0
  %1509 = vmatpush2.bf16.msra.mxu0 0
  %1510 = vmatprep.subr.bf16.mxu0 0
  %1511 = vmatpush2.bf16.msra.mxu0 0
  %1512 = vmatprep.subr.bf16.mxu0 0
  %1513 = vmatpush2.bf16.msra.mxu0 0
  %1514 = vmatprep.subr.bf16.mxu0 0
  %1515 = vmatpush2.bf16.msra.mxu0 0
  %1516 = vmatprep.subr.bf16.mxu0 0
  %1517 = vmatpush2.bf16.msra.mxu0 0
  %1518 = vmatprep.mubr.bf16.mxu0 0
  %1519 = vmatmul.mubr.bf16.gmra.mxu0 %v591
  %v1520 = vpop.f32.mrf.mxu0
  %v1521 = vadd.f32 0.0, %v1520
  %v1522 = vpop.f32.mrf.mxu0
  %v1523 = vpop.f32.mrf.mxu0
  %v1524 = vadd.f32 0.0, %v1523
  %v1525 = vpop.f32.mrf.mxu0
  %1526 = vdwg.mxu0
  %v1527 = vpack.c.bf16 %v1524, %v1521
  %v1529 = vshrl.u32 %v1527, 16
  %v1531 = vshll.u32 %v1527, 16
  %v1533 = vrot.slane %v1531, 1
  %v1534 = vor.u32 %v1529, %v1533
  %1535 = vrot.lane.b32.xlu0 %v1534, 84
  %v1536 = vpop.permute.xlu0 %1535
  %v1538 = vrot.slane %v1527, 1
  %1539 = vrot.lane.b32.xlu0 %v1538, 40
  %v1540 = vpop.permute.xlu0 %1539
  %v1541 = vrot.slane %v1529, 1
  %v1542 = vrot.slane %v1531, 2
  %v1543 = vor.u32 %v1541, %v1542
  %1544 = vrot.lane.b32.xlu0 %v1543, 124
  %v1545 = vpop.permute.xlu0 %1544
  %v1546 = vrot.slane %v1527, 2
  %1547 = vrot.lane.b32.xlu0 %v1546, 80
  %v1548 = vpop.permute.xlu0 %1547
  %v1550 = vsel %vm660, %v1527, %v1536
  %v1553 = vsel %vm522, %v1536, %v1540
  %v1555 = vsel %vm666, %v1553, %v1545
  %v1558 = vsel %vm670, %v1545, %v1548
  %v1560 = vsel %vm950, %v1548, 0
  %1562 = vmatprep.subr.bf16.mxu0 %v859
  %1563 = vmatpush1.bf16.msra.mxu0 %v858
  %1564 = vmatprep.subr.bf16.mxu0 %v857
  %1565 = vmatpush1.bf16.msra.mxu0 %v856
  %1566 = vmatprep.subr.bf16.mxu0 %v855
  %1567 = vmatpush1.bf16.msra.mxu0 %v854
  %1568 = vmatprep.subr.bf16.mxu0 %v853
  %1569 = vmatpush1.bf16.msra.mxu0 %v852
  %1570 = vmatprep.subr.bf16.mxu0 %v851
  %1571 = vmatpush1.bf16.msra.mxu0 %v850
  %1572 = vmatprep.subr.bf16.mxu0 %v849
  %1573 = vmatpush1.bf16.msra.mxu0 %v848
  %1574 = vmatprep.subr.bf16.mxu0 %v847
  %1575 = vmatpush1.bf16.msra.mxu0 %v846
  %1576 = vmatprep.subr.bf16.mxu0 %v845
  %1577 = vmatpush1.bf16.msra.mxu0 %v844
  %1578 = vmatprep.subr.bf16.mxu0 %v875
  %1579 = vmatpush2.bf16.msra.mxu0 %v874
  %1580 = vmatprep.subr.bf16.mxu0 %v873
  %1581 = vmatpush2.bf16.msra.mxu0 %v872
  %1582 = vmatprep.subr.bf16.mxu0 %v871
  %1583 = vmatpush2.bf16.msra.mxu0 %v870
  %1584 = vmatprep.subr.bf16.mxu0 %v869
  %1585 = vmatpush2.bf16.msra.mxu0 %v868
  %1586 = vmatprep.subr.bf16.mxu0 %v867
  %1587 = vmatpush2.bf16.msra.mxu0 %v866
  %1588 = vmatprep.subr.bf16.mxu0 %v865
  %1589 = vmatpush2.bf16.msra.mxu0 %v864
  %1590 = vmatprep.subr.bf16.mxu0 %v863
  %1591 = vmatpush2.bf16.msra.mxu0 %v862
  %1592 = vmatprep.subr.bf16.mxu0 %v861
  %1593 = vmatpush2.bf16.msra.mxu0 %v860
  %1594 = vmatprep.mubr.bf16.mxu0 %v1555
  %1595 = vmatmul.mubr.bf16.gmra.mxu0 %v1550
  %v1596 = vpop.f32.mrf.mxu0
  %v1597 = vadd.f32 %v678, %v1596
  %v1598 = vpop.f32.mrf.mxu0
  %v1599 = vadd.f32 %v682, %v1598
  %v1600 = vpop.f32.mrf.mxu0
  %v1601 = vadd.f32 %v678, %v1600
  %v1602 = vpop.f32.mrf.mxu0
  %v1603 = vadd.f32 %v682, %v1602
  %1604 = vdwg.mxu0
  %1605 = vmatprep.subr.bf16.mxu0 %v891
  %1606 = vmatpush1.bf16.msra.mxu0 %v890
  %1607 = vmatprep.subr.bf16.mxu0 %v889
  %1608 = vmatpush1.bf16.msra.mxu0 %v888
  %1609 = vmatprep.subr.bf16.mxu0 %v887
  %1610 = vmatpush1.bf16.msra.mxu0 %v886
  %1611 = vmatprep.subr.bf16.mxu0 %v885
  %1612 = vmatpush1.bf16.msra.mxu0 %v884
  %1613 = vmatprep.subr.bf16.mxu0 %v883
  %1614 = vmatpush1.bf16.msra.mxu0 %v882
  %1615 = vmatprep.subr.bf16.mxu0 %v881
  %1616 = vmatpush1.bf16.msra.mxu0 %v880
  %1617 = vmatprep.subr.bf16.mxu0 %v879
  %1618 = vmatpush1.bf16.msra.mxu0 %v878
  %1619 = vmatprep.subr.bf16.mxu0 %v877
  %1620 = vmatpush1.bf16.msra.mxu0 %v876
  %1621 = vmatprep.subr.bf16.mxu0 0
  %1622 = vmatpush2.bf16.msra.mxu0 0
  %1623 = vmatprep.subr.bf16.mxu0 0
  %1624 = vmatpush2.bf16.msra.mxu0 0
  %1625 = vmatprep.subr.bf16.mxu0 0
  %1626 = vmatpush2.bf16.msra.mxu0 0
  %1627 = vmatprep.subr.bf16.mxu0 0
  %1628 = vmatpush2.bf16.msra.mxu0 0
  %1629 = vmatprep.subr.bf16.mxu0 0
  %1630 = vmatpush2.bf16.msra.mxu0 0
  %1631 = vmatprep.subr.bf16.mxu0 %v958
  %1632 = vmatpush2.bf16.msra.mxu0 %v955
  %1633 = vmatprep.subr.bf16.mxu0 %v895
  %1634 = vmatpush2.bf16.msra.mxu0 %v894
  %1635 = vmatprep.subr.bf16.mxu0 %v893
  %1636 = vmatpush2.bf16.msra.mxu0 %v892
  %1637 = vmatprep.mubr.bf16.mxu0 %v1560
  %1638 = vmatmul.mubr.bf16.gmra.mxu0 %v1558
  %v1639 = vpop.f32.mrf.mxu0
  %v1640 = vadd.f32 %v1597, %v1639
  %v1641 = vpop.f32.mrf.mxu0
  %v1642 = vadd.f32 %v1599, %v1641
  %v1643 = vpop.f32.mrf.mxu0
  %v1644 = vadd.f32 %v1601, %v1643
  %v1645 = vpop.f32.mrf.mxu0
  %v1646 = vadd.f32 %v1603, %v1645
  %1647 = vdwg.mxu0
  %v1648 = vsub.f32 0.0, %v1640
  %v1649 = vsub.f32 0.0, %v1642
  %v1650 = vsub.f32 0.0, %v1644
  %v1651 = vsub.f32 0.0, %v1646
  %v1652 = vmul.f32 %v1648, 1.442695
  %v1653 = vpow.pop %v1652
  %v1654 = vmul.f32 %v1649, 1.442695
  %v1655 = vpow.pop %v1654
  %v1656 = vmul.f32 %v1650, 1.442695
  %v1657 = vpow.pop %v1656
  %v1658 = vmul.f32 %v1651, 1.442695
  %v1659 = vpow.pop %v1658
  %v1660 = vadd.f32 %v1653, 1.0
  %v1661 = vadd.f32 %v1655, 1.0
  %v1662 = vadd.f32 %v1657, 1.0
  %v1663 = vadd.f32 %v1659, 1.0
  %v1664 = vrcp.pop %v1660
  %v1665 = vrcp.pop %v1661
  %v1666 = vrcp.pop %v1662
  %v1667 = vrcp.pop %v1663
  %v1668 = vpack.c.bf16 %v1666, %v1664
  %v1669 = vpack.c.bf16 %v1667, %v1665
  %v1671 = vsel %vm228, %v1669, 0
  %1673 = vmatprep.subr.bf16.mxu0 0
  %1674 = vmatpush1.bf16.msra.mxu0 %v1115
  %1675 = vmatprep.subr.bf16.mxu0 0
  %1676 = vmatpush1.bf16.msra.mxu0 %v1114
  %1677 = vmatprep.subr.bf16.mxu0 0
  %1678 = vmatpush1.bf16.msra.mxu0 %v1113
  %1679 = vmatprep.subr.bf16.mxu0 0
  %1680 = vmatpush1.bf16.msra.mxu0 %v1112
  %1681 = vmatprep.subr.bf16.mxu0 0
  %1682 = vmatpush1.bf16.msra.mxu0 %v1111
  %1683 = vmatprep.subr.bf16.mxu0 0
  %1684 = vmatpush1.bf16.msra.mxu0 %v1110
  %1685 = vmatprep.subr.bf16.mxu0 0
  %1686 = vmatpush1.bf16.msra.mxu0 %v1109
  %1687 = vmatprep.subr.bf16.mxu0 0
  %1688 = vmatpush1.bf16.msra.mxu0 %v1108
  %1689 = vmatprep.subr.bf16.mxu0 0
  %1690 = vmatpush2.bf16.msra.mxu0 0
  %1691 = vmatprep.subr.bf16.mxu0 0
  %1692 = vmatpush2.bf16.msra.mxu0 0
  %1693 = vmatprep.subr.bf16.mxu0 0
  %1694 = vmatpush2.bf16.msra.mxu0 0
  %1695 = vmatprep.subr.bf16.mxu0 0
  %1696 = vmatpush2.bf16.msra.mxu0 0
  %1697 = vmatprep.subr.bf16.mxu0 0
  %1698 = vmatpush2.bf16.msra.mxu0 0
  %1699 = vmatprep.subr.bf16.mxu0 0
  %1700 = vmatpush2.bf16.msra.mxu0 0
  %1701 = vmatprep.subr.bf16.mxu0 0
  %1702 = vmatpush2.bf16.msra.mxu0 %v1117
  %1703 = vmatprep.subr.bf16.mxu0 0
  %1704 = vmatpush2.bf16.msra.mxu0 %v1116
  %1705 = vmatprep.mubr.bf16.mxu0 %v1671
  %1706 = vmatmul.mubr.bf16.gmra.mxu0 %v1668
  %v1707 = vpop.f32.mrf.mxu0
  %v1708 = vadd.f32 0.0, %v1707
  %v1709 = vpop.f32.mrf.mxu0
  %v1710 = vpop.f32.mrf.mxu0
  %v1711 = vadd.f32 0.0, %v1710
  %v1712 = vpop.f32.mrf.mxu0
  %1713 = vdwg.mxu0
  %v1714 = vpack.c.bf16 %v1711, %v1708
  %v1716 = vsel %vm1177, %v1714, 0
  %1718 = vmatprep.subr.bf16.mxu0 0
  %1719 = vmatpush1.bf16.msra.mxu0 0
  %1720 = vmatprep.subr.bf16.mxu0 0
  %1721 = vmatpush1.bf16.msra.mxu0 0
  %1722 = vmatprep.subr.bf16.mxu0 0
  %1723 = vmatpush1.bf16.msra.mxu0 0
  %1724 = vmatprep.subr.bf16.mxu0 0
  %1725 = vmatpush1.bf16.msra.mxu0 0
  %1726 = vmatprep.subr.bf16.mxu0 0
  %1727 = vmatpush1.bf16.msra.mxu0 0
  %1728 = vmatprep.subr.bf16.mxu0 0
  %1729 = vmatpush1.bf16.msra.mxu0 0
  %1730 = vmatprep.subr.bf16.mxu0 0
  %1731 = vmatpush1.bf16.msra.mxu0 0
  %1732 = vmatprep.subr.bf16.mxu0 0
  %1733 = vmatpush1.bf16.msra.mxu0 %v1716
  %1734 = vmatprep.subr.bf16.mxu0 0
  %1735 = vmatpush2.bf16.msra.mxu0 0
  %1736 = vmatprep.subr.bf16.mxu0 0
  %1737 = vmatpush2.bf16.msra.mxu0 0
  %1738 = vmatprep.subr.bf16.mxu0 0
  %1739 = vmatpush2.bf16.msra.mxu0 0
  %1740 = vmatprep.subr.bf16.mxu0 0
  %1741 = vmatpush2.bf16.msra.mxu0 0
  %1742 = vmatprep.subr.bf16.mxu0 0
  %1743 = vmatpush2.bf16.msra.mxu0 0
  %1744 = vmatprep.subr.bf16.mxu0 0
  %1745 = vmatpush2.bf16.msra.mxu0 0
  %1746 = vmatprep.subr.bf16.mxu0 0
  %1747 = vmatpush2.bf16.msra.mxu0 0
  %1748 = vmatprep.subr.bf16.mxu0 0
  %1749 = vmatpush2.bf16.msra.mxu0 0
  %1750 = vmatprep.mubr.bf16.mxu0 0
  %1751 = vmatmul.mubr.bf16.gmra.mxu0 %v1175
  %v1752 = vpop.f32.mrf.mxu0
  %v1753 = vadd.f32 0.0, %v1752
  %v1754 = vpop.f32.mrf.mxu0
  %v1755 = vpop.f32.mrf.mxu0
  %v1756 = vpop.f32.mrf.mxu0
  %1757 = vdwg.mxu0
  %1758 = vst.msk [vmem:[#allocation2 + $0x1] sm:$0x1] %vm1221, %v1753
  %v1760 = vrot.slane %v1753, 1
  %1761 = vrot.lane.b32.xlu0 %v1760, 80
  %v1762 = vpop.permute.xlu0 %1761
  %1764 = vst.msk [vmem:[#allocation2 + $0x1] sm:$0x1] %vm1228, %v1762
  %1765 = vst.msk [vmem:[#allocation2 + $0x9] sm:$0x1] %vm1230, %v1762
  %v1766 = vrot.slane %v1753, 2
  %1767 = vrot.lane.b32.xlu0 %v1766, 32
  %v1768 = vpop.permute.xlu0 %1767
  %1770 = vst.msk [vmem:[#allocation2 + $0x9] sm:$0x1] %vm1236, %v1768
  %v1771 = vrot.slane %v1753, 3
  %1772 = vrot.lane.b32.xlu0 %v1771, 112
  %v1773 = vpop.permute.xlu0 %1772
  %1775 = vst.msk [vmem:[#allocation2 + $0x9] sm:$0x1] %vm1242, %v1773
  %1776 = vst.msk [vmem:[#allocation2 + $0x11] sm:$0x1] %vm1244, %v1773
  %v1777 = vrot.slane %v1753, 4
  %1778 = vrot.lane.b32.xlu0 %v1777, 64
  %v1779 = vpop.permute.xlu0 %1778
  %1781 = vst.msk [vmem:[#allocation2 + $0x11] sm:$0x1] %vm1250, %v1779
  %1782 = vst.msk [vmem:[#allocation2 + $0x19] sm:$0x1] %vm1252, %v1779
  %s1783 = scalar_lea.vmem %s0, 32
  %v1784 = vld [vmem:[%s1783] sm:$0xf]
  %v1785 = vld [vmem:[%s1783 + $0x4] sm:$0xf]
  %v1786 = vld [vmem:[%s1783 + $0x8] sm:$0xf]
  %v1787 = vld [vmem:[%s1783 + $0xc] sm:$0xf]
  %v1792 = vunpack.c.l.b16 %v1784
  %v1793 = vunpack.c.l.b16 %v1785
  %v1794 = vunpack.c.l.b16 %v1786
  %v1795 = vunpack.c.l.b16 %v1787
  %v1796 = vpack.c.b16 %v1793, %v1792
  %v1797 = vpack.c.b16 %v1795, %v1794
  %v1799 = vshrl.u32 %v1796, 16
  %v1801 = vshll.u32 %v1796, 16
  %v1803 = vrot.slane %v1801, 1
  %v1804 = vor.u32 %v1799, %v1803
  %v1806 = vshll.u32 %v1797, 16
  %v1808 = vrot.slane %v1806, 1
  %v1809 = vsel %vm184, %v1804, %v1808
  %v1810 = vshrl.u32 %v1797, 16
  %v1812 = vor.u32 %v1810, %v1808
  %1813 = vrot.lane.b32.xlu0 %v1809, 32
  %v1814 = vpop.permute.xlu0 %1813
  %1815 = vrot.lane.b32.xlu0 %v1812, 32
  %v1816 = vpop.permute.xlu0 %1815
  %v1817 = vrot.slane %v1796, 1
  %v1818 = vrot.slane %v1797, 1
  %v1819 = vsel %vm204, %v1817, %v1818
  %1820 = vrot.lane.b32.xlu0 %v1819, 64
  %v1821 = vpop.permute.xlu0 %1820
  %1822 = vrot.lane.b32.xlu0 %v1818, 64
  %v1823 = vpop.permute.xlu0 %1822
  %v1824 = vrot.slane %v1799, 1
  %v1825 = vrot.slane %v1801, 2
  %v1826 = vor.u32 %v1824, %v1825
  %v1827 = vrot.slane %v1810, 1
  %v1828 = vrot.slane %v1806, 2
  %v1829 = vor.u32 %v1827, %v1828
  %v1830 = vsel %vm212, %v1826, %v1829
  %1831 = vrot.lane.b32.xlu0 %v1830, 96
  %v1832 = vpop.permute.xlu0 %1831
  %1833 = vrot.lane.b32.xlu0 %v1829, 96
  %v1834 = vpop.permute.xlu0 %1833
  %v1835 = vrot.slane %v1796, 2
  %v1836 = vrot.slane %v1797, 2
  %v1837 = vsel %vm224, %v1835, %v1836
  %v1839 = vsel %vm228, %v1796, %v1814
  %v1841 = vsel %vm228, %v1797, %v1816
  %v1843 = vsel %vm233, %v1839, %v1821
  %v1845 = vsel %vm233, %v1841, %v1823
  %v1847 = vsel %vm238, %v1843, %v1832
  %v1850 = vsel %vm238, %v1845, %v1834
  %v1853 = vsel %vm228, %v1837, 0
  %v1856 = vsel %vm228, %v1836, 0
  %1858 = vmatprep.subr.bf16.mxu0 %v331
  %1859 = vmatpush1.bf16.msra.mxu0 %v330
  %1860 = vmatprep.subr.bf16.mxu0 %v329
  %1861 = vmatpush1.bf16.msra.mxu0 %v328
  %1862 = vmatprep.subr.bf16.mxu0 %v327
  %1863 = vmatpush1.bf16.msra.mxu0 %v326
  %1864 = vmatprep.subr.bf16.mxu0 %v325
  %1865 = vmatpush1.bf16.msra.mxu0 %v324
  %1866 = vmatprep.subr.bf16.mxu0 %v323
  %1867 = vmatpush1.bf16.msra.mxu0 %v322
  %1868 = vmatprep.subr.bf16.mxu0 %v321
  %1869 = vmatpush1.bf16.msra.mxu0 %v320
  %1870 = vmatprep.subr.bf16.mxu0 %v319
  %1871 = vmatpush1.bf16.msra.mxu0 %v318
  %1872 = vmatprep.subr.bf16.mxu0 %v317
  %1873 = vmatpush1.bf16.msra.mxu0 %v316
  %1874 = vmatprep.subr.bf16.mxu0 0
  %1875 = vmatpush2.bf16.msra.mxu0 0
  %1876 = vmatprep.subr.bf16.mxu0 0
  %1877 = vmatpush2.bf16.msra.mxu0 0
  %1878 = vmatprep.subr.bf16.mxu0 0
  %1879 = vmatpush2.bf16.msra.mxu0 0
  %1880 = vmatprep.subr.bf16.mxu0 0
  %1881 = vmatpush2.bf16.msra.mxu0 0
  %1882 = vmatprep.subr.bf16.mxu0 0
  %1883 = vmatpush2.bf16.msra.mxu0 0
  %1884 = vmatprep.subr.bf16.mxu0 0
  %1885 = vmatpush2.bf16.msra.mxu0 0
  %1886 = vmatprep.subr.bf16.mxu0 %v335
  %1887 = vmatpush2.bf16.msra.mxu0 %v334
  %1888 = vmatprep.subr.bf16.mxu0 %v333
  %1889 = vmatpush2.bf16.msra.mxu0 %v332
  %1890 = vmatprep.mubr.bf16.mxu0 %v1853
  %1891 = vmatmul.mubr.bf16.gmra.mxu0 %v1847
  %v1892 = vpop.f32.mrf.mxu0
  %v1893 = vadd.f32 %v249, %v1892
  %v1894 = vpop.f32.mrf.mxu0
  %v1895 = vadd.f32 %v253, %v1894
  %v1896 = vpop.f32.mrf.mxu0
  %v1897 = vadd.f32 %v249, %v1896
  %v1898 = vpop.f32.mrf.mxu0
  %v1899 = vadd.f32 %v253, %v1898
  %1900 = vmatprep.mubr.bf16.mxu0 %v1856
  %1901 = vmatmul.mubr.bf16.gmra.mxu0 %v1850
  %v1902 = vpop.f32.mrf.mxu0
  %v1903 = vadd.f32 %v249, %v1902
  %v1904 = vpop.f32.mrf.mxu0
  %v1905 = vadd.f32 %v253, %v1904
  %v1906 = vpop.f32.mrf.mxu0
  %v1907 = vadd.f32 %v249, %v1906
  %v1908 = vpop.f32.mrf.mxu0
  %v1909 = vadd.f32 %v253, %v1908
  %1910 = vdwg.mxu0
  %v1911 = vsub.f32 0.0, %v1893
  %v1912 = vsub.f32 0.0, %v1895
  %v1913 = vsub.f32 0.0, %v1897
  %v1914 = vsub.f32 0.0, %v1899
  %v1915 = vsub.f32 0.0, %v1903
  %v1916 = vsub.f32 0.0, %v1905
  %v1917 = vsub.f32 0.0, %v1907
  %v1918 = vsub.f32 0.0, %v1909
  %v1919 = vmul.f32 %v1911, 1.442695
  %v1920 = vpow.pop %v1919
  %v1921 = vmul.f32 %v1912, 1.442695
  %v1922 = vpow.pop %v1921
  %v1923 = vmul.f32 %v1913, 1.442695
  %v1924 = vpow.pop %v1923
  %v1925 = vmul.f32 %v1914, 1.442695
  %v1926 = vpow.pop %v1925
  %v1927 = vmul.f32 %v1915, 1.442695
  %v1928 = vpow.pop %v1927
  %v1929 = vmul.f32 %v1916, 1.442695
  %v1930 = vpow.pop %v1929
  %v1931 = vmul.f32 %v1917, 1.442695
  %v1932 = vpow.pop %v1931
  %v1933 = vmul.f32 %v1918, 1.442695
  %v1934 = vpow.pop %v1933
  %v1935 = vadd.f32 %v1920, 1.0
  %v1936 = vadd.f32 %v1922, 1.0
  %v1937 = vadd.f32 %v1924, 1.0
  %v1938 = vadd.f32 %v1926, 1.0
  %v1939 = vadd.f32 %v1928, 1.0
  %v1940 = vadd.f32 %v1930, 1.0
  %v1941 = vadd.f32 %v1932, 1.0
  %v1942 = vadd.f32 %v1934, 1.0
  %v1943 = vrcp.pop %v1935
  %v1944 = vrcp.pop %v1936
  %v1945 = vrcp.pop %v1937
  %v1946 = vrcp.pop %v1938
  %v1947 = vrcp.pop %v1939
  %v1948 = vrcp.pop %v1940
  %v1949 = vrcp.pop %v1941
  %v1950 = vrcp.pop %v1942
  %v1951 = vpack.c.bf16 %v1945, %v1943
  %v1952 = vpack.c.bf16 %v1946, %v1944
  %v1953 = vpack.c.bf16 %v1949, %v1947
  %v1954 = vpack.c.bf16 %v1950, %v1948
  %v1956 = vsel %vm522, %v1952, 0
  %v1959 = vsel %vm522, %v1954, 0
  %1961 = vmatprep.subr.bf16.mxu0 0
  %1962 = vmatpush1.bf16.msra.mxu0 %v508
  %1963 = vmatprep.subr.bf16.mxu0 0
  %1964 = vmatpush1.bf16.msra.mxu0 %v507
  %1965 = vmatprep.subr.bf16.mxu0 0
  %1966 = vmatpush1.bf16.msra.mxu0 %v506
  %1967 = vmatprep.subr.bf16.mxu0 0
  %1968 = vmatpush1.bf16.msra.mxu0 %v505
  %1969 = vmatprep.subr.bf16.mxu0 0
  %1970 = vmatpush1.bf16.msra.mxu0 %v504
  %1971 = vmatprep.subr.bf16.mxu0 0
  %1972 = vmatpush1.bf16.msra.mxu0 %v503
  %1973 = vmatprep.subr.bf16.mxu0 0
  %1974 = vmatpush1.bf16.msra.mxu0 %v502
  %1975 = vmatprep.subr.bf16.mxu0 0
  %1976 = vmatpush1.bf16.msra.mxu0 %v501
  %1977 = vmatprep.subr.bf16.mxu0 0
  %1978 = vmatpush2.bf16.msra.mxu0 0
  %1979 = vmatprep.subr.bf16.mxu0 0
  %1980 = vmatpush2.bf16.msra.mxu0 0
  %1981 = vmatprep.subr.bf16.mxu0 0
  %1982 = vmatpush2.bf16.msra.mxu0 0
  %1983 = vmatprep.subr.bf16.mxu0 0
  %1984 = vmatpush2.bf16.msra.mxu0 0
  %1985 = vmatprep.subr.bf16.mxu0 0
  %1986 = vmatpush2.bf16.msra.mxu0 0
  %1987 = vmatprep.subr.bf16.mxu0 0
  %1988 = vmatpush2.bf16.msra.mxu0 %v531
  %1989 = vmatprep.subr.bf16.mxu0 0
  %1990 = vmatpush2.bf16.msra.mxu0 %v510
  %1991 = vmatprep.subr.bf16.mxu0 0
  %1992 = vmatpush2.bf16.msra.mxu0 %v509
  %1993 = vmatprep.mubr.bf16.mxu0 %v1956
  %1994 = vmatmul.mubr.bf16.gmra.mxu0 %v1951
  %v1995 = vpop.f32.mrf.mxu0
  %v1996 = vadd.f32 0.0, %v1995
  %v1997 = vpop.f32.mrf.mxu0
  %v1998 = vpop.f32.mrf.mxu0
  %v1999 = vadd.f32 0.0, %v1998
  %v2000 = vpop.f32.mrf.mxu0
  %2001 = vmatprep.mubr.bf16.mxu0 %v1959
  %2002 = vmatmul.mubr.bf16.gmra.mxu0 %v1953
  %v2003 = vpop.f32.mrf.mxu0
  %v2004 = vadd.f32 0.0, %v2003
  %v2005 = vpop.f32.mrf.mxu0
  %v2006 = vpop.f32.mrf.mxu0
  %v2007 = vadd.f32 0.0, %v2006
  %v2008 = vpop.f32.mrf.mxu0
  %2009 = vdwg.mxu0
  %v2010 = vpack.c.bf16 %v1999, %v1996
  %v2011 = vpack.c.bf16 %v2007, %v2004
  %v2013 = vsel %vm593, %v2011, 0
  %2015 = vmatprep.subr.bf16.mxu0 0
  %2016 = vmatpush1.bf16.msra.mxu0 0
  %2017 = vmatprep.subr.bf16.mxu0 0
  %2018 = vmatpush1.bf16.msra.mxu0 0
  %2019 = vmatprep.subr.bf16.mxu0 0
  %2020 = vmatpush1.bf16.msra.mxu0 0
  %2021 = vmatprep.subr.bf16.mxu0 0
  %2022 = vmatpush1.bf16.msra.mxu0 0
  %2023 = vmatprep.subr.bf16.mxu0 0
  %2024 = vmatpush1.bf16.msra.mxu0 0
  %2025 = vmatprep.subr.bf16.mxu0 0
  %2026 = vmatpush1.bf16.msra.mxu0 0
  %2027 = vmatprep.subr.bf16.mxu0 0
  %2028 = vmatpush1.bf16.msra.mxu0 %v2013
  %2029 = vmatprep.subr.bf16.mxu0 0
  %2030 = vmatpush1.bf16.msra.mxu0 %v2010
  %2031 = vmatprep.subr.bf16.mxu0 0
  %2032 = vmatpush2.bf16.msra.mxu0 0
  %2033 = vmatprep.subr.bf16.mxu0 0
  %2034 = vmatpush2.bf16.msra.mxu0 0
  %2035 = vmatprep.subr.bf16.mxu0 0
  %2036 = vmatpush2.bf16.msra.mxu0 0
  %2037 = vmatprep.subr.bf16.mxu0 0
  %2038 = vmatpush2.bf16.msra.mxu0 0
  %2039 = vmatprep.subr.bf16.mxu0 0
  %2040 = vmatpush2.bf16.msra.mxu0 0
  %2041 = vmatprep.subr.bf16.mxu0 0
  %2042 = vmatpush2.bf16.msra.mxu0 0
  %2043 = vmatprep.subr.bf16.mxu0 0
  %2044 = vmatpush2.bf16.msra.mxu0 0
  %2045 = vmatprep.subr.bf16.mxu0 0
  %2046 = vmatpush2.bf16.msra.mxu0 0
  %2047 = vmatprep.mubr.bf16.mxu0 0
  %2048 = vmatmul.mubr.bf16.gmra.mxu0 %v591
  %v2049 = vpop.f32.mrf.mxu0
  %v2050 = vadd.f32 0.0, %v2049
  %v2051 = vpop.f32.mrf.mxu0
  %v2052 = vpop.f32.mrf.mxu0
  %v2053 = vadd.f32 0.0, %v2052
  %v2054 = vpop.f32.mrf.mxu0
  %2055 = vdwg.mxu0
  %v2056 = vpack.c.bf16 %v2053, %v2050
  %v2058 = vshrl.u32 %v2056, 16
  %v2060 = vshll.u32 %v2056, 16
  %v2062 = vrot.slane %v2060, 1
  %v2063 = vor.u32 %v2058, %v2062
  %2064 = vrot.lane.b32.xlu0 %v2063, 84
  %v2065 = vpop.permute.xlu0 %2064
  %v2067 = vrot.slane %v2056, 1
  %2068 = vrot.lane.b32.xlu0 %v2067, 40
  %v2069 = vpop.permute.xlu0 %2068
  %v2070 = vrot.slane %v2058, 1
  %v2071 = vrot.slane %v2060, 2
  %v2072 = vor.u32 %v2070, %v2071
  %2073 = vrot.lane.b32.xlu0 %v2072, 124
  %v2074 = vpop.permute.xlu0 %2073
  %v2075 = vrot.slane %v2056, 2
  %2076 = vrot.lane.b32.xlu0 %v2075, 80
  %v2077 = vpop.permute.xlu0 %2076
  %v2079 = vsel %vm660, %v2056, %v2065
  %v2082 = vsel %vm522, %v2065, %v2069
  %v2084 = vsel %vm666, %v2082, %v2074
  %v2087 = vsel %vm670, %v2074, %v2077
  %v2089 = vsel %vm950, %v2077, 0
  %2091 = vmatprep.subr.bf16.mxu0 %v859
  %2092 = vmatpush1.bf16.msra.mxu0 %v858
  %2093 = vmatprep.subr.bf16.mxu0 %v857
  %2094 = vmatpush1.bf16.msra.mxu0 %v856
  %2095 = vmatprep.subr.bf16.mxu0 %v855
  %2096 = vmatpush1.bf16.msra.mxu0 %v854
  %2097 = vmatprep.subr.bf16.mxu0 %v853
  %2098 = vmatpush1.bf16.msra.mxu0 %v852
  %2099 = vmatprep.subr.bf16.mxu0 %v851
  %2100 = vmatpush1.bf16.msra.mxu0 %v850
  %2101 = vmatprep.subr.bf16.mxu0 %v849
  %2102 = vmatpush1.bf16.msra.mxu0 %v848
  %2103 = vmatprep.subr.bf16.mxu0 %v847
  %2104 = vmatpush1.bf16.msra.mxu0 %v846
  %2105 = vmatprep.subr.bf16.mxu0 %v845
  %2106 = vmatpush1.bf16.msra.mxu0 %v844
  %2107 = vmatprep.subr.bf16.mxu0 %v875
  %2108 = vmatpush2.bf16.msra.mxu0 %v874
  %2109 = vmatprep.subr.bf16.mxu0 %v873
  %2110 = vmatpush2.bf16.msra.mxu0 %v872
  %2111 = vmatprep.subr.bf16.mxu0 %v871
  %2112 = vmatpush2.bf16.msra.mxu0 %v870
  %2113 = vmatprep.subr.bf16.mxu0 %v869
  %2114 = vmatpush2.bf16.msra.mxu0 %v868
  %2115 = vmatprep.subr.bf16.mxu0 %v867
  %2116 = vmatpush2.bf16.msra.mxu0 %v866
  %2117 = vmatprep.subr.bf16.mxu0 %v865
  %2118 = vmatpush2.bf16.msra.mxu0 %v864
  %2119 = vmatprep.subr.bf16.mxu0 %v863
  %2120 = vmatpush2.bf16.msra.mxu0 %v862
  %2121 = vmatprep.subr.bf16.mxu0 %v861
  %2122 = vmatpush2.bf16.msra.mxu0 %v860
  %2123 = vmatprep.mubr.bf16.mxu0 %v2084
  %2124 = vmatmul.mubr.bf16.gmra.mxu0 %v2079
  %v2125 = vpop.f32.mrf.mxu0
  %v2126 = vadd.f32 %v678, %v2125
  %v2127 = vpop.f32.mrf.mxu0
  %v2128 = vadd.f32 %v682, %v2127
  %v2129 = vpop.f32.mrf.mxu0
  %v2130 = vadd.f32 %v678, %v2129
  %v2131 = vpop.f32.mrf.mxu0
  %v2132 = vadd.f32 %v682, %v2131
  %2133 = vdwg.mxu0
  %2134 = vmatprep.subr.bf16.mxu0 %v891
  %2135 = vmatpush1.bf16.msra.mxu0 %v890
  %2136 = vmatprep.subr.bf16.mxu0 %v889
  %2137 = vmatpush1.bf16.msra.mxu0 %v888
  %2138 = vmatprep.subr.bf16.mxu0 %v887
  %2139 = vmatpush1.bf16.msra.mxu0 %v886
  %2140 = vmatprep.subr.bf16.mxu0 %v885
  %2141 = vmatpush1.bf16.msra.mxu0 %v884
  %2142 = vmatprep.subr.bf16.mxu0 %v883
  %2143 = vmatpush1.bf16.msra.mxu0 %v882
  %2144 = vmatprep.subr.bf16.mxu0 %v881
  %2145 = vmatpush1.bf16.msra.mxu0 %v880
  %2146 = vmatprep.subr.bf16.mxu0 %v879
  %2147 = vmatpush1.bf16.msra.mxu0 %v878
  %2148 = vmatprep.subr.bf16.mxu0 %v877
  %2149 = vmatpush1.bf16.msra.mxu0 %v876
  %2150 = vmatprep.subr.bf16.mxu0 0
  %2151 = vmatpush2.bf16.msra.mxu0 0
  %2152 = vmatprep.subr.bf16.mxu0 0
  %2153 = vmatpush2.bf16.msra.mxu0 0
  %2154 = vmatprep.subr.bf16.mxu0 0
  %2155 = vmatpush2.bf16.msra.mxu0 0
  %2156 = vmatprep.subr.bf16.mxu0 0
  %2157 = vmatpush2.bf16.msra.mxu0 0
  %2158 = vmatprep.subr.bf16.mxu0 0
  %2159 = vmatpush2.bf16.msra.mxu0 0
  %2160 = vmatprep.subr.bf16.mxu0 %v958
  %2161 = vmatpush2.bf16.msra.mxu0 %v955
  %2162 = vmatprep.subr.bf16.mxu0 %v895
  %2163 = vmatpush2.bf16.msra.mxu0 %v894
  %2164 = vmatprep.subr.bf16.mxu0 %v893
  %2165 = vmatpush2.bf16.msra.mxu0 %v892
  %2166 = vmatprep.mubr.bf16.mxu0 %v2089
  %2167 = vmatmul.mubr.bf16.gmra.mxu0 %v2087
  %v2168 = vpop.f32.mrf.mxu0
  %v2169 = vadd.f32 %v2126, %v2168
  %v2170 = vpop.f32.mrf.mxu0
  %v2171 = vadd.f32 %v2128, %v2170
  %v2172 = vpop.f32.mrf.mxu0
  %v2173 = vadd.f32 %v2130, %v2172
  %v2174 = vpop.f32.mrf.mxu0
  %v2175 = vadd.f32 %v2132, %v2174
  %2176 = vdwg.mxu0
  %v2177 = vsub.f32 0.0, %v2169
  %v2178 = vsub.f32 0.0, %v2171
  %v2179 = vsub.f32 0.0, %v2173
  %v2180 = vsub.f32 0.0, %v2175
  %v2181 = vmul.f32 %v2177, 1.442695
  %v2182 = vpow.pop %v2181
  %v2183 = vmul.f32 %v2178, 1.442695
  %v2184 = vpow.pop %v2183
  %v2185 = vmul.f32 %v2179, 1.442695
  %v2186 = vpow.pop %v2185
  %v2187 = vmul.f32 %v2180, 1.442695
  %v2188 = vpow.pop %v2187
  %v2189 = vadd.f32 %v2182, 1.0
  %v2190 = vadd.f32 %v2184, 1.0
  %v2191 = vadd.f32 %v2186, 1.0
  %v2192 = vadd.f32 %v2188, 1.0
  %v2193 = vrcp.pop %v2189
  %v2194 = vrcp.pop %v2190
  %v2195 = vrcp.pop %v2191
  %v2196 = vrcp.pop %v2192
  %v2197 = vpack.c.bf16 %v2195, %v2193
  %v2198 = vpack.c.bf16 %v2196, %v2194
  %v2200 = vsel %vm228, %v2198, 0
  %2202 = vmatprep.subr.bf16.mxu0 0
  %2203 = vmatpush1.bf16.msra.mxu0 %v1115
  %2204 = vmatprep.subr.bf16.mxu0 0
  %2205 = vmatpush1.bf16.msra.mxu0 %v1114
  %2206 = vmatprep.subr.bf16.mxu0 0
  %2207 = vmatpush1.bf16.msra.mxu0 %v1113
  %2208 = vmatprep.subr.bf16.mxu0 0
  %2209 = vmatpush1.bf16.msra.mxu0 %v1112
  %2210 = vmatprep.subr.bf16.mxu0 0
  %2211 = vmatpush1.bf16.msra.mxu0 %v1111
  %2212 = vmatprep.subr.bf16.mxu0 0
  %2213 = vmatpush1.bf16.msra.mxu0 %v1110
  %2214 = vmatprep.subr.bf16.mxu0 0
  %2215 = vmatpush1.bf16.msra.mxu0 %v1109
  %2216 = vmatprep.subr.bf16.mxu0 0
  %2217 = vmatpush1.bf16.msra.mxu0 %v1108
  %2218 = vmatprep.subr.bf16.mxu0 0
  %2219 = vmatpush2.bf16.msra.mxu0 0
  %2220 = vmatprep.subr.bf16.mxu0 0
  %2221 = vmatpush2.bf16.msra.mxu0 0
  %2222 = vmatprep.subr.bf16.mxu0 0
  %2223 = vmatpush2.bf16.msra.mxu0 0
  %2224 = vmatprep.subr.bf16.mxu0 0
  %2225 = vmatpush2.bf16.msra.mxu0 0
  %2226 = vmatprep.subr.bf16.mxu0 0
  %2227 = vmatpush2.bf16.msra.mxu0 0
  %2228 = vmatprep.subr.bf16.mxu0 0
  %2229 = vmatpush2.bf16.msra.mxu0 0
  %2230 = vmatprep.subr.bf16.mxu0 0
  %2231 = vmatpush2.bf16.msra.mxu0 %v1117
  %2232 = vmatprep.subr.bf16.mxu0 0
  %2233 = vmatpush2.bf16.msra.mxu0 %v1116
  %2234 = vmatprep.mubr.bf16.mxu0 %v2200
  %2235 = vmatmul.mubr.bf16.gmra.mxu0 %v2197
  %v2236 = vpop.f32.mrf.mxu0
  %v2237 = vadd.f32 0.0, %v2236
  %v2238 = vpop.f32.mrf.mxu0
  %v2239 = vpop.f32.mrf.mxu0
  %v2240 = vadd.f32 0.0, %v2239
  %v2241 = vpop.f32.mrf.mxu0
  %2242 = vdwg.mxu0
  %v2243 = vpack.c.bf16 %v2240, %v2237
  %v2245 = vsel %vm1177, %v2243, 0
  %2247 = vmatprep.subr.bf16.mxu0 0
  %2248 = vmatpush1.bf16.msra.mxu0 0
  %2249 = vmatprep.subr.bf16.mxu0 0
  %2250 = vmatpush1.bf16.msra.mxu0 0
  %2251 = vmatprep.subr.bf16.mxu0 0
  %2252 = vmatpush1.bf16.msra.mxu0 0
  %2253 = vmatprep.subr.bf16.mxu0 0
  %2254 = vmatpush1.bf16.msra.mxu0 0
  %2255 = vmatprep.subr.bf16.mxu0 0
  %2256 = vmatpush1.bf16.msra.mxu0 0
  %2257 = vmatprep.subr.bf16.mxu0 0
  %2258 = vmatpush1.bf16.msra.mxu0 0
  %2259 = vmatprep.subr.bf16.mxu0 0
  %2260 = vmatpush1.bf16.msra.mxu0 0
  %2261 = vmatprep.subr.bf16.mxu0 0
  %2262 = vmatpush1.bf16.msra.mxu0 %v2245
  %2263 = vmatprep.subr.bf16.mxu0 0
  %2264 = vmatpush2.bf16.msra.mxu0 0
  %2265 = vmatprep.subr.bf16.mxu0 0
  %2266 = vmatpush2.bf16.msra.mxu0 0
  %2267 = vmatprep.subr.bf16.mxu0 0
  %2268 = vmatpush2.bf16.msra.mxu0 0
  %2269 = vmatprep.subr.bf16.mxu0 0
  %2270 = vmatpush2.bf16.msra.mxu0 0
  %2271 = vmatprep.subr.bf16.mxu0 0
  %2272 = vmatpush2.bf16.msra.mxu0 0
  %2273 = vmatprep.subr.bf16.mxu0 0
  %2274 = vmatpush2.bf16.msra.mxu0 0
  %2275 = vmatprep.subr.bf16.mxu0 0
  %2276 = vmatpush2.bf16.msra.mxu0 0
  %2277 = vmatprep.subr.bf16.mxu0 0
  %2278 = vmatpush2.bf16.msra.mxu0 0
  %2279 = vmatprep.mubr.bf16.mxu0 0
  %2280 = vmatmul.mubr.bf16.gmra.mxu0 %v1175
  %v2281 = vpop.f32.mrf.mxu0
  %v2282 = vadd.f32 0.0, %v2281
  %v2283 = vpop.f32.mrf.mxu0
  %v2284 = vpop.f32.mrf.mxu0
  %v2285 = vpop.f32.mrf.mxu0
  %2286 = vdwg.mxu0
  %2287 = vst.msk [vmem:[#allocation2 + $0x2] sm:$0x1] %vm1221, %v2282
  %v2289 = vrot.slane %v2282, 1
  %2290 = vrot.lane.b32.xlu0 %v2289, 80
  %v2291 = vpop.permute.xlu0 %2290
  %2293 = vst.msk [vmem:[#allocation2 + $0x2] sm:$0x1] %vm1228, %v2291
  %2294 = vst.msk [vmem:[#allocation2 + $0xa] sm:$0x1] %vm1230, %v2291
  %v2295 = vrot.slane %v2282, 2
  %2296 = vrot.lane.b32.xlu0 %v2295, 32
  %v2297 = vpop.permute.xlu0 %2296
  %2299 = vst.msk [vmem:[#allocation2 + $0xa] sm:$0x1] %vm1236, %v2297
  %v2300 = vrot.slane %v2282, 3
  %2301 = vrot.lane.b32.xlu0 %v2300, 112
  %v2302 = vpop.permute.xlu0 %2301
  %2304 = vst.msk [vmem:[#allocation2 + $0xa] sm:$0x1] %vm1242, %v2302
  %2305 = vst.msk [vmem:[#allocation2 + $0x12] sm:$0x1] %vm1244, %v2302
  %v2306 = vrot.slane %v2282, 4
  %2307 = vrot.lane.b32.xlu0 %v2306, 64
  %v2308 = vpop.permute.xlu0 %2307
  %2310 = vst.msk [vmem:[#allocation2 + $0x12] sm:$0x1] %vm1250, %v2308
  %2311 = vst.msk [vmem:[#allocation2 + $0x1a] sm:$0x1] %vm1252, %v2308
  %s2312 = scalar_lea.vmem %s0, 48
  %v2313 = vld [vmem:[%s2312] sm:$0xf]
  %v2314 = vld [vmem:[%s2312 + $0x4] sm:$0xf]
  %v2315 = vld [vmem:[%s2312 + $0x8] sm:$0xf]
  %v2316 = vld [vmem:[%s2312 + $0xc] sm:$0xf]
  %v2321 = vunpack.c.l.b16 %v2313
  %v2322 = vunpack.c.l.b16 %v2314
  %v2323 = vunpack.c.l.b16 %v2315
  %v2324 = vunpack.c.l.b16 %v2316
  %v2325 = vpack.c.b16 %v2322, %v2321
  %v2326 = vpack.c.b16 %v2324, %v2323
  %v2328 = vshrl.u32 %v2325, 16
  %v2330 = vshll.u32 %v2325, 16
  %v2332 = vrot.slane %v2330, 1
  %v2333 = vor.u32 %v2328, %v2332
  %v2335 = vshll.u32 %v2326, 16
  %v2337 = vrot.slane %v2335, 1
  %v2338 = vsel %vm184, %v2333, %v2337
  %v2339 = vshrl.u32 %v2326, 16
  %v2341 = vor.u32 %v2339, %v2337
  %2342 = vrot.lane.b32.xlu0 %v2338, 32
  %v2343 = vpop.permute.xlu0 %2342
  %2344 = vrot.lane.b32.xlu0 %v2341, 32
  %v2345 = vpop.permute.xlu0 %2344
  %v2346 = vrot.slane %v2325, 1
  %v2347 = vrot.slane %v2326, 1
  %v2348 = vsel %vm204, %v2346, %v2347
  %2349 = vrot.lane.b32.xlu0 %v2348, 64
  %v2350 = vpop.permute.xlu0 %2349
  %2351 = vrot.lane.b32.xlu0 %v2347, 64
  %v2352 = vpop.permute.xlu0 %2351
  %v2353 = vrot.slane %v2328, 1
  %v2354 = vrot.slane %v2330, 2
  %v2355 = vor.u32 %v2353, %v2354
  %v2356 = vrot.slane %v2339, 1
  %v2357 = vrot.slane %v2335, 2
  %v2358 = vor.u32 %v2356, %v2357
  %v2359 = vsel %vm212, %v2355, %v2358
  %2360 = vrot.lane.b32.xlu0 %v2359, 96
  %v2361 = vpop.permute.xlu0 %2360
  %2362 = vrot.lane.b32.xlu0 %v2358, 96
  %v2363 = vpop.permute.xlu0 %2362
  %v2364 = vrot.slane %v2325, 2
  %v2365 = vrot.slane %v2326, 2
  %v2366 = vsel %vm224, %v2364, %v2365
  %v2368 = vsel %vm228, %v2325, %v2343
  %v2370 = vsel %vm228, %v2326, %v2345
  %v2372 = vsel %vm233, %v2368, %v2350
  %v2374 = vsel %vm233, %v2370, %v2352
  %v2376 = vsel %vm238, %v2372, %v2361
  %v2379 = vsel %vm238, %v2374, %v2363
  %v2382 = vsel %vm228, %v2366, 0
  %v2385 = vsel %vm228, %v2365, 0
  %2387 = vmatprep.subr.bf16.mxu0 %v331
  %2388 = vmatpush1.bf16.msra.mxu0 %v330
  %2389 = vmatprep.subr.bf16.mxu0 %v329
  %2390 = vmatpush1.bf16.msra.mxu0 %v328
  %2391 = vmatprep.subr.bf16.mxu0 %v327
  %2392 = vmatpush1.bf16.msra.mxu0 %v326
  %2393 = vmatprep.subr.bf16.mxu0 %v325
  %2394 = vmatpush1.bf16.msra.mxu0 %v324
  %2395 = vmatprep.subr.bf16.mxu0 %v323
  %2396 = vmatpush1.bf16.msra.mxu0 %v322
  %2397 = vmatprep.subr.bf16.mxu0 %v321
  %2398 = vmatpush1.bf16.msra.mxu0 %v320
  %2399 = vmatprep.subr.bf16.mxu0 %v319
  %2400 = vmatpush1.bf16.msra.mxu0 %v318
  %2401 = vmatprep.subr.bf16.mxu0 %v317
  %2402 = vmatpush1.bf16.msra.mxu0 %v316
  %2403 = vmatprep.subr.bf16.mxu0 0
  %2404 = vmatpush2.bf16.msra.mxu0 0
  %2405 = vmatprep.subr.bf16.mxu0 0
  %2406 = vmatpush2.bf16.msra.mxu0 0
  %2407 = vmatprep.subr.bf16.mxu0 0
  %2408 = vmatpush2.bf16.msra.mxu0 0
  %2409 = vmatprep.subr.bf16.mxu0 0
  %2410 = vmatpush2.bf16.msra.mxu0 0
  %2411 = vmatprep.subr.bf16.mxu0 0
  %2412 = vmatpush2.bf16.msra.mxu0 0
  %2413 = vmatprep.subr.bf16.mxu0 0
  %2414 = vmatpush2.bf16.msra.mxu0 0
  %2415 = vmatprep.subr.bf16.mxu0 %v335
  %2416 = vmatpush2.bf16.msra.mxu0 %v334
  %2417 = vmatprep.subr.bf16.mxu0 %v333
  %2418 = vmatpush2.bf16.msra.mxu0 %v332
  %2419 = vmatprep.mubr.bf16.mxu0 %v2382
  %2420 = vmatmul.mubr.bf16.gmra.mxu0 %v2376
  %v2421 = vpop.f32.mrf.mxu0
  %v2422 = vadd.f32 %v249, %v2421
  %v2423 = vpop.f32.mrf.mxu0
  %v2424 = vadd.f32 %v253, %v2423
  %v2425 = vpop.f32.mrf.mxu0
  %v2426 = vadd.f32 %v249, %v2425
  %v2427 = vpop.f32.mrf.mxu0
  %v2428 = vadd.f32 %v253, %v2427
  %2429 = vmatprep.mubr.bf16.mxu0 %v2385
  %2430 = vmatmul.mubr.bf16.gmra.mxu0 %v2379
  %v2431 = vpop.f32.mrf.mxu0
  %v2432 = vadd.f32 %v249, %v2431
  %v2433 = vpop.f32.mrf.mxu0
  %v2434 = vadd.f32 %v253, %v2433
  %v2435 = vpop.f32.mrf.mxu0
  %v2436 = vadd.f32 %v249, %v2435
  %v2437 = vpop.f32.mrf.mxu0
  %v2438 = vadd.f32 %v253, %v2437
  %2439 = vdwg.mxu0
  %v2440 = vsub.f32 0.0, %v2422
  %v2441 = vsub.f32 0.0, %v2424
  %v2442 = vsub.f32 0.0, %v2426
  %v2443 = vsub.f32 0.0, %v2428
  %v2444 = vsub.f32 0.0, %v2432
  %v2445 = vsub.f32 0.0, %v2434
  %v2446 = vsub.f32 0.0, %v2436
  %v2447 = vsub.f32 0.0, %v2438
  %v2448 = vmul.f32 %v2440, 1.442695
  %v2449 = vpow.pop %v2448
  %v2450 = vmul.f32 %v2441, 1.442695
  %v2451 = vpow.pop %v2450
  %v2452 = vmul.f32 %v2442, 1.442695
  %v2453 = vpow.pop %v2452
  %v2454 = vmul.f32 %v2443, 1.442695
  %v2455 = vpow.pop %v2454
  %v2456 = vmul.f32 %v2444, 1.442695
  %v2457 = vpow.pop %v2456
  %v2458 = vmul.f32 %v2445, 1.442695
  %v2459 = vpow.pop %v2458
  %v2460 = vmul.f32 %v2446, 1.442695
  %v2461 = vpow.pop %v2460
  %v2462 = vmul.f32 %v2447, 1.442695
  %v2463 = vpow.pop %v2462
  %v2464 = vadd.f32 %v2449, 1.0
  %v2465 = vadd.f32 %v2451, 1.0
  %v2466 = vadd.f32 %v2453, 1.0
  %v2467 = vadd.f32 %v2455, 1.0
  %v2468 = vadd.f32 %v2457, 1.0
  %v2469 = vadd.f32 %v2459, 1.0
  %v2470 = vadd.f32 %v2461, 1.0
  %v2471 = vadd.f32 %v2463, 1.0
  %v2472 = vrcp.pop %v2464
  %v2473 = vrcp.pop %v2465
  %v2474 = vrcp.pop %v2466
  %v2475 = vrcp.pop %v2467
  %v2476 = vrcp.pop %v2468
  %v2477 = vrcp.pop %v2469
  %v2478 = vrcp.pop %v2470
  %v2479 = vrcp.pop %v2471
  %v2480 = vpack.c.bf16 %v2474, %v2472
  %v2481 = vpack.c.bf16 %v2475, %v2473
  %v2482 = vpack.c.bf16 %v2478, %v2476
  %v2483 = vpack.c.bf16 %v2479, %v2477
  %v2485 = vsel %vm522, %v2481, 0
  %v2488 = vsel %vm522, %v2483, 0
  %2490 = vmatprep.subr.bf16.mxu0 0
  %2491 = vmatpush1.bf16.msra.mxu0 %v508
  %2492 = vmatprep.subr.bf16.mxu0 0
  %2493 = vmatpush1.bf16.msra.mxu0 %v507
  %2494 = vmatprep.subr.bf16.mxu0 0
  %2495 = vmatpush1.bf16.msra.mxu0 %v506
  %2496 = vmatprep.subr.bf16.mxu0 0
  %2497 = vmatpush1.bf16.msra.mxu0 %v505
  %2498 = vmatprep.subr.bf16.mxu0 0
  %2499 = vmatpush1.bf16.msra.mxu0 %v504
  %2500 = vmatprep.subr.bf16.mxu0 0
  %2501 = vmatpush1.bf16.msra.mxu0 %v503
  %2502 = vmatprep.subr.bf16.mxu0 0
  %2503 = vmatpush1.bf16.msra.mxu0 %v502
  %2504 = vmatprep.subr.bf16.mxu0 0
  %2505 = vmatpush1.bf16.msra.mxu0 %v501
  %2506 = vmatprep.subr.bf16.mxu0 0
  %2507 = vmatpush2.bf16.msra.mxu0 0
  %2508 = vmatprep.subr.bf16.mxu0 0
  %2509 = vmatpush2.bf16.msra.mxu0 0
  %2510 = vmatprep.subr.bf16.mxu0 0
  %2511 = vmatpush2.bf16.msra.mxu0 0
  %2512 = vmatprep.subr.bf16.mxu0 0
  %2513 = vmatpush2.bf16.msra.mxu0 0
  %2514 = vmatprep.subr.bf16.mxu0 0
  %2515 = vmatpush2.bf16.msra.mxu0 0
  %2516 = vmatprep.subr.bf16.mxu0 0
  %2517 = vmatpush2.bf16.msra.mxu0 %v531
  %2518 = vmatprep.subr.bf16.mxu0 0
  %2519 = vmatpush2.bf16.msra.mxu0 %v510
  %2520 = vmatprep.subr.bf16.mxu0 0
  %2521 = vmatpush2.bf16.msra.mxu0 %v509
  %2522 = vmatprep.mubr.bf16.mxu0 %v2485
  %2523 = vmatmul.mubr.bf16.gmra.mxu0 %v2480
  %v2524 = vpop.f32.mrf.mxu0
  %v2525 = vadd.f32 0.0, %v2524
  %v2526 = vpop.f32.mrf.mxu0
  %v2527 = vpop.f32.mrf.mxu0
  %v2528 = vadd.f32 0.0, %v2527
  %v2529 = vpop.f32.mrf.mxu0
  %2530 = vmatprep.mubr.bf16.mxu0 %v2488
  %2531 = vmatmul.mubr.bf16.gmra.mxu0 %v2482
  %v2532 = vpop.f32.mrf.mxu0
  %v2533 = vadd.f32 0.0, %v2532
  %v2534 = vpop.f32.mrf.mxu0
  %v2535 = vpop.f32.mrf.mxu0
  %v2536 = vadd.f32 0.0, %v2535
  %v2537 = vpop.f32.mrf.mxu0
  %2538 = vdwg.mxu0
  %v2539 = vpack.c.bf16 %v2528, %v2525
  %v2540 = vpack.c.bf16 %v2536, %v2533
  %v2542 = vsel %vm593, %v2540, 0
  %2544 = vmatprep.subr.bf16.mxu0 0
  %2545 = vmatpush1.bf16.msra.mxu0 0
  %2546 = vmatprep.subr.bf16.mxu0 0
  %2547 = vmatpush1.bf16.msra.mxu0 0
  %2548 = vmatprep.subr.bf16.mxu0 0
  %2549 = vmatpush1.bf16.msra.mxu0 0
  %2550 = vmatprep.subr.bf16.mxu0 0
  %2551 = vmatpush1.bf16.msra.mxu0 0
  %2552 = vmatprep.subr.bf16.mxu0 0
  %2553 = vmatpush1.bf16.msra.mxu0 0
  %2554 = vmatprep.subr.bf16.mxu0 0
  %2555 = vmatpush1.bf16.msra.mxu0 0
  %2556 = vmatprep.subr.bf16.mxu0 0
  %2557 = vmatpush1.bf16.msra.mxu0 %v2542
  %2558 = vmatprep.subr.bf16.mxu0 0
  %2559 = vmatpush1.bf16.msra.mxu0 %v2539
  %2560 = vmatprep.subr.bf16.mxu0 0
  %2561 = vmatpush2.bf16.msra.mxu0 0
  %2562 = vmatprep.subr.bf16.mxu0 0
  %2563 = vmatpush2.bf16.msra.mxu0 0
  %2564 = vmatprep.subr.bf16.mxu0 0
  %2565 = vmatpush2.bf16.msra.mxu0 0
  %2566 = vmatprep.subr.bf16.mxu0 0
  %2567 = vmatpush2.bf16.msra.mxu0 0
  %2568 = vmatprep.subr.bf16.mxu0 0
  %2569 = vmatpush2.bf16.msra.mxu0 0
  %2570 = vmatprep.subr.bf16.mxu0 0
  %2571 = vmatpush2.bf16.msra.mxu0 0
  %2572 = vmatprep.subr.bf16.mxu0 0
  %2573 = vmatpush2.bf16.msra.mxu0 0
  %2574 = vmatprep.subr.bf16.mxu0 0
  %2575 = vmatpush2.bf16.msra.mxu0 0
  %2576 = vmatprep.mubr.bf16.mxu0 0
  %2577 = vmatmul.mubr.bf16.gmra.mxu0 %v591
  %v2578 = vpop.f32.mrf.mxu0
  %v2579 = vadd.f32 0.0, %v2578
  %v2580 = vpop.f32.mrf.mxu0
  %v2581 = vpop.f32.mrf.mxu0
  %v2582 = vadd.f32 0.0, %v2581
  %v2583 = vpop.f32.mrf.mxu0
  %2584 = vdwg.mxu0
  %v2585 = vpack.c.bf16 %v2582, %v2579
  %v2587 = vshrl.u32 %v2585, 16
  %v2589 = vshll.u32 %v2585, 16
  %v2591 = vrot.slane %v2589, 1
  %v2592 = vor.u32 %v2587, %v2591
  %2593 = vrot.lane.b32.xlu0 %v2592, 84
  %v2594 = vpop.permute.xlu0 %2593
  %v2596 = vrot.slane %v2585, 1
  %2597 = vrot.lane.b32.xlu0 %v2596, 40
  %v2598 = vpop.permute.xlu0 %2597
  %v2599 = vrot.slane %v2587, 1
  %v2600 = vrot.slane %v2589, 2
  %v2601 = vor.u32 %v2599, %v2600
  %2602 = vrot.lane.b32.xlu0 %v2601, 124
  %v2603 = vpop.permute.xlu0 %2602
  %v2604 = vrot.slane %v2585, 2
  %2605 = vrot.lane.b32.xlu0 %v2604, 80
  %v2606 = vpop.permute.xlu0 %2605
  %v2608 = vsel %vm660, %v2585, %v2594
  %v2611 = vsel %vm522, %v2594, %v2598
  %v2613 = vsel %vm666, %v2611, %v2603
  %v2616 = vsel %vm670, %v2603, %v2606
  %v2618 = vsel %vm950, %v2606, 0
  %2620 = vmatprep.subr.bf16.mxu0 %v859
  %2621 = vmatpush1.bf16.msra.mxu0 %v858
  %2622 = vmatprep.subr.bf16.mxu0 %v857
  %2623 = vmatpush1.bf16.msra.mxu0 %v856
  %2624 = vmatprep.subr.bf16.mxu0 %v855
  %2625 = vmatpush1.bf16.msra.mxu0 %v854
  %2626 = vmatprep.subr.bf16.mxu0 %v853
  %2627 = vmatpush1.bf16.msra.mxu0 %v852
  %2628 = vmatprep.subr.bf16.mxu0 %v851
  %2629 = vmatpush1.bf16.msra.mxu0 %v850
  %2630 = vmatprep.subr.bf16.mxu0 %v849
  %2631 = vmatpush1.bf16.msra.mxu0 %v848
  %2632 = vmatprep.subr.bf16.mxu0 %v847
  %2633 = vmatpush1.bf16.msra.mxu0 %v846
  %2634 = vmatprep.subr.bf16.mxu0 %v845
  %2635 = vmatpush1.bf16.msra.mxu0 %v844
  %2636 = vmatprep.subr.bf16.mxu0 %v875
  %2637 = vmatpush2.bf16.msra.mxu0 %v874
  %2638 = vmatprep.subr.bf16.mxu0 %v873
  %2639 = vmatpush2.bf16.msra.mxu0 %v872
  %2640 = vmatprep.subr.bf16.mxu0 %v871
  %2641 = vmatpush2.bf16.msra.mxu0 %v870
  %2642 = vmatprep.subr.bf16.mxu0 %v869
  %2643 = vmatpush2.bf16.msra.mxu0 %v868
  %2644 = vmatprep.subr.bf16.mxu0 %v867
  %2645 = vmatpush2.bf16.msra.mxu0 %v866
  %2646 = vmatprep.subr.bf16.mxu0 %v865
  %2647 = vmatpush2.bf16.msra.mxu0 %v864
  %2648 = vmatprep.subr.bf16.mxu0 %v863
  %2649 = vmatpush2.bf16.msra.mxu0 %v862
  %2650 = vmatprep.subr.bf16.mxu0 %v861
  %2651 = vmatpush2.bf16.msra.mxu0 %v860
  %2652 = vmatprep.mubr.bf16.mxu0 %v2613
  %2653 = vmatmul.mubr.bf16.gmra.mxu0 %v2608
  %v2654 = vpop.f32.mrf.mxu0
  %v2655 = vadd.f32 %v678, %v2654
  %v2656 = vpop.f32.mrf.mxu0
  %v2657 = vadd.f32 %v682, %v2656
  %v2658 = vpop.f32.mrf.mxu0
  %v2659 = vadd.f32 %v678, %v2658
  %v2660 = vpop.f32.mrf.mxu0
  %v2661 = vadd.f32 %v682, %v2660
  %2662 = vdwg.mxu0
  %2663 = vmatprep.subr.bf16.mxu0 %v891
  %2664 = vmatpush1.bf16.msra.mxu0 %v890
  %2665 = vmatprep.subr.bf16.mxu0 %v889
  %2666 = vmatpush1.bf16.msra.mxu0 %v888
  %2667 = vmatprep.subr.bf16.mxu0 %v887
  %2668 = vmatpush1.bf16.msra.mxu0 %v886
  %2669 = vmatprep.subr.bf16.mxu0 %v885
  %2670 = vmatpush1.bf16.msra.mxu0 %v884
  %2671 = vmatprep.subr.bf16.mxu0 %v883
  %2672 = vmatpush1.bf16.msra.mxu0 %v882
  %2673 = vmatprep.subr.bf16.mxu0 %v881
  %2674 = vmatpush1.bf16.msra.mxu0 %v880
  %2675 = vmatprep.subr.bf16.mxu0 %v879
  %2676 = vmatpush1.bf16.msra.mxu0 %v878
  %2677 = vmatprep.subr.bf16.mxu0 %v877
  %2678 = vmatpush1.bf16.msra.mxu0 %v876
  %2679 = vmatprep.subr.bf16.mxu0 0
  %2680 = vmatpush2.bf16.msra.mxu0 0
  %2681 = vmatprep.subr.bf16.mxu0 0
  %2682 = vmatpush2.bf16.msra.mxu0 0
  %2683 = vmatprep.subr.bf16.mxu0 0
  %2684 = vmatpush2.bf16.msra.mxu0 0
  %2685 = vmatprep.subr.bf16.mxu0 0
  %2686 = vmatpush2.bf16.msra.mxu0 0
  %2687 = vmatprep.subr.bf16.mxu0 0
  %2688 = vmatpush2.bf16.msra.mxu0 0
  %2689 = vmatprep.subr.bf16.mxu0 %v958
  %2690 = vmatpush2.bf16.msra.mxu0 %v955
  %2691 = vmatprep.subr.bf16.mxu0 %v895
  %2692 = vmatpush2.bf16.msra.mxu0 %v894
  %2693 = vmatprep.subr.bf16.mxu0 %v893
  %2694 = vmatpush2.bf16.msra.mxu0 %v892
  %2695 = vmatprep.mubr.bf16.mxu0 %v2618
  %2696 = vmatmul.mubr.bf16.gmra.mxu0 %v2616
  %v2697 = vpop.f32.mrf.mxu0
  %v2698 = vadd.f32 %v2655, %v2697
  %v2699 = vpop.f32.mrf.mxu0
  %v2700 = vadd.f32 %v2657, %v2699
  %v2701 = vpop.f32.mrf.mxu0
  %v2702 = vadd.f32 %v2659, %v2701
  %v2703 = vpop.f32.mrf.mxu0
  %v2704 = vadd.f32 %v2661, %v2703
  %2705 = vdwg.mxu0
  %v2706 = vsub.f32 0.0, %v2698
  %v2707 = vsub.f32 0.0, %v2700
  %v2708 = vsub.f32 0.0, %v2702
  %v2709 = vsub.f32 0.0, %v2704
  %v2710 = vmul.f32 %v2706, 1.442695
  %v2711 = vpow.pop %v2710
  %v2712 = vmul.f32 %v2707, 1.442695
  %v2713 = vpow.pop %v2712
  %v2714 = vmul.f32 %v2708, 1.442695
  %v2715 = vpow.pop %v2714
  %v2716 = vmul.f32 %v2709, 1.442695
  %v2717 = vpow.pop %v2716
  %v2718 = vadd.f32 %v2711, 1.0
  %v2719 = vadd.f32 %v2713, 1.0
  %v2720 = vadd.f32 %v2715, 1.0
  %v2721 = vadd.f32 %v2717, 1.0
  %v2722 = vrcp.pop %v2718
  %v2723 = vrcp.pop %v2719
  %v2724 = vrcp.pop %v2720
  %v2725 = vrcp.pop %v2721
  %v2726 = vpack.c.bf16 %v2724, %v2722
  %v2727 = vpack.c.bf16 %v2725, %v2723
  %v2729 = vsel %vm228, %v2727, 0
  %2731 = vmatprep.subr.bf16.mxu0 0
  %2732 = vmatpush1.bf16.msra.mxu0 %v1115
  %2733 = vmatprep.subr.bf16.mxu0 0
  %2734 = vmatpush1.bf16.msra.mxu0 %v1114
  %2735 = vmatprep.subr.bf16.mxu0 0
  %2736 = vmatpush1.bf16.msra.mxu0 %v1113
  %2737 = vmatprep.subr.bf16.mxu0 0
  %2738 = vmatpush1.bf16.msra.mxu0 %v1112
  %2739 = vmatprep.subr.bf16.mxu0 0
  %2740 = vmatpush1.bf16.msra.mxu0 %v1111
  %2741 = vmatprep.subr.bf16.mxu0 0
  %2742 = vmatpush1.bf16.msra.mxu0 %v1110
  %2743 = vmatprep.subr.bf16.mxu0 0
  %2744 = vmatpush1.bf16.msra.mxu0 %v1109
  %2745 = vmatprep.subr.bf16.mxu0 0
  %2746 = vmatpush1.bf16.msra.mxu0 %v1108
  %2747 = vmatprep.subr.bf16.mxu0 0
  %2748 = vmatpush2.bf16.msra.mxu0 0
  %2749 = vmatprep.subr.bf16.mxu0 0
  %2750 = vmatpush2.bf16.msra.mxu0 0
  %2751 = vmatprep.subr.bf16.mxu0 0
  %2752 = vmatpush2.bf16.msra.mxu0 0
  %2753 = vmatprep.subr.bf16.mxu0 0
  %2754 = vmatpush2.bf16.msra.mxu0 0
  %2755 = vmatprep.subr.bf16.mxu0 0
  %2756 = vmatpush2.bf16.msra.mxu0 0
  %2757 = vmatprep.subr.bf16.mxu0 0
  %2758 = vmatpush2.bf16.msra.mxu0 0
  %2759 = vmatprep.subr.bf16.mxu0 0
  %2760 = vmatpush2.bf16.msra.mxu0 %v1117
  %2761 = vmatprep.subr.bf16.mxu0 0
  %2762 = vmatpush2.bf16.msra.mxu0 %v1116
  %2763 = vmatprep.mubr.bf16.mxu0 %v2729
  %2764 = vmatmul.mubr.bf16.gmra.mxu0 %v2726
  %v2765 = vpop.f32.mrf.mxu0
  %v2766 = vadd.f32 0.0, %v2765
  %v2767 = vpop.f32.mrf.mxu0
  %v2768 = vpop.f32.mrf.mxu0
  %v2769 = vadd.f32 0.0, %v2768
  %v2770 = vpop.f32.mrf.mxu0
  %2771 = vdwg.mxu0
  %v2772 = vpack.c.bf16 %v2769, %v2766
  %v2774 = vsel %vm1177, %v2772, 0
  %2776 = vmatprep.subr.bf16.mxu0 0
  %2777 = vmatpush1.bf16.msra.mxu0 0
  %2778 = vmatprep.subr.bf16.mxu0 0
  %2779 = vmatpush1.bf16.msra.mxu0 0
  %2780 = vmatprep.subr.bf16.mxu0 0
  %2781 = vmatpush1.bf16.msra.mxu0 0
  %2782 = vmatprep.subr.bf16.mxu0 0
  %2783 = vmatpush1.bf16.msra.mxu0 0
  %2784 = vmatprep.subr.bf16.mxu0 0
  %2785 = vmatpush1.bf16.msra.mxu0 0
  %2786 = vmatprep.subr.bf16.mxu0 0
  %2787 = vmatpush1.bf16.msra.mxu0 0
  %2788 = vmatprep.subr.bf16.mxu0 0
  %2789 = vmatpush1.bf16.msra.mxu0 0
  %2790 = vmatprep.subr.bf16.mxu0 0
  %2791 = vmatpush1.bf16.msra.mxu0 %v2774
  %2792 = vmatprep.subr.bf16.mxu0 0
  %2793 = vmatpush2.bf16.msra.mxu0 0
  %2794 = vmatprep.subr.bf16.mxu0 0
  %2795 = vmatpush2.bf16.msra.mxu0 0
  %2796 = vmatprep.subr.bf16.mxu0 0
  %2797 = vmatpush2.bf16.msra.mxu0 0
  %2798 = vmatprep.subr.bf16.mxu0 0
  %2799 = vmatpush2.bf16.msra.mxu0 0
  %2800 = vmatprep.subr.bf16.mxu0 0
  %2801 = vmatpush2.bf16.msra.mxu0 0
  %2802 = vmatprep.subr.bf16.mxu0 0
  %2803 = vmatpush2.bf16.msra.mxu0 0
  %2804 = vmatprep.subr.bf16.mxu0 0
  %2805 = vmatpush2.bf16.msra.mxu0 0
  %2806 = vmatprep.subr.bf16.mxu0 0
  %2807 = vmatpush2.bf16.msra.mxu0 0
  %2808 = vmatprep.mubr.bf16.mxu0 0
  %2809 = vmatmul.mubr.bf16.gmra.mxu0 %v1175
  %v2810 = vpop.f32.mrf.mxu0
  %v2811 = vadd.f32 0.0, %v2810
  %v2812 = vpop.f32.mrf.mxu0
  %v2813 = vpop.f32.mrf.mxu0
  %v2814 = vpop.f32.mrf.mxu0
  %2815 = vdwg.mxu0
  %2816 = vst.msk [vmem:[#allocation2 + $0x3] sm:$0x1] %vm1221, %v2811
  %v2818 = vrot.slane %v2811, 1
  %2819 = vrot.lane.b32.xlu0 %v2818, 80
  %v2820 = vpop.permute.xlu0 %2819
  %2822 = vst.msk [vmem:[#allocation2 + $0x3] sm:$0x1] %vm1228, %v2820
  %2823 = vst.msk [vmem:[#allocation2 + $0xb] sm:$0x1] %vm1230, %v2820
  %v2824 = vrot.slane %v2811, 2
  %2825 = vrot.lane.b32.xlu0 %v2824, 32
  %v2826 = vpop.permute.xlu0 %2825
  %2828 = vst.msk [vmem:[#allocation2 + $0xb] sm:$0x1] %vm1236, %v2826
  %v2829 = vrot.slane %v2811, 3
  %2830 = vrot.lane.b32.xlu0 %v2829, 112
  %v2831 = vpop.permute.xlu0 %2830
  %2833 = vst.msk [vmem:[#allocation2 + $0xb] sm:$0x1] %vm1242, %v2831
  %2834 = vst.msk [vmem:[#allocation2 + $0x13] sm:$0x1] %vm1244, %v2831
  %v2835 = vrot.slane %v2811, 4
  %2836 = vrot.lane.b32.xlu0 %v2835, 64
  %v2837 = vpop.permute.xlu0 %2836
  %2839 = vst.msk [vmem:[#allocation2 + $0x13] sm:$0x1] %vm1250, %v2837
  %2840 = vst.msk [vmem:[#allocation2 + $0x1b] sm:$0x1] %vm1252, %v2837
  %s2841 = scalar_lea.vmem %s0, 64
  %v2842 = vld [vmem:[%s2841] sm:$0xf]
  %v2843 = vld [vmem:[%s2841 + $0x4] sm:$0xf]
  %v2844 = vld [vmem:[%s2841 + $0x8] sm:$0xf]
  %v2845 = vld [vmem:[%s2841 + $0xc] sm:$0xf]
  %v2850 = vunpack.c.l.b16 %v2842
  %v2851 = vunpack.c.l.b16 %v2843
  %v2852 = vunpack.c.l.b16 %v2844
  %v2853 = vunpack.c.l.b16 %v2845
  %v2854 = vpack.c.b16 %v2851, %v2850
  %v2855 = vpack.c.b16 %v2853, %v2852
  %v2857 = vshrl.u32 %v2854, 16
  %v2859 = vshll.u32 %v2854, 16
  %v2861 = vrot.slane %v2859, 1
  %v2862 = vor.u32 %v2857, %v2861
  %v2864 = vshll.u32 %v2855, 16
  %v2866 = vrot.slane %v2864, 1
  %v2867 = vsel %vm184, %v2862, %v2866
  %v2868 = vshrl.u32 %v2855, 16
  %v2870 = vor.u32 %v2868, %v2866
  %2871 = vrot.lane.b32.xlu0 %v2867, 32
  %v2872 = vpop.permute.xlu0 %2871
  %2873 = vrot.lane.b32.xlu0 %v2870, 32
  %v2874 = vpop.permute.xlu0 %2873
  %v2875 = vrot.slane %v2854, 1
  %v2876 = vrot.slane %v2855, 1
  %v2877 = vsel %vm204, %v2875, %v2876
  %2878 = vrot.lane.b32.xlu0 %v2877, 64
  %v2879 = vpop.permute.xlu0 %2878
  %2880 = vrot.lane.b32.xlu0 %v2876, 64
  %v2881 = vpop.permute.xlu0 %2880
  %v2882 = vrot.slane %v2857, 1
  %v2883 = vrot.slane %v2859, 2
  %v2884 = vor.u32 %v2882, %v2883
  %v2885 = vrot.slane %v2868, 1
  %v2886 = vrot.slane %v2864, 2
  %v2887 = vor.u32 %v2885, %v2886
  %v2888 = vsel %vm212, %v2884, %v2887
  %2889 = vrot.lane.b32.xlu0 %v2888, 96
  %v2890 = vpop.permute.xlu0 %2889
  %2891 = vrot.lane.b32.xlu0 %v2887, 96
  %v2892 = vpop.permute.xlu0 %2891
  %v2893 = vrot.slane %v2854, 2
  %v2894 = vrot.slane %v2855, 2
  %v2895 = vsel %vm224, %v2893, %v2894
  %v2897 = vsel %vm228, %v2854, %v2872
  %v2899 = vsel %vm228, %v2855, %v2874
  %v2901 = vsel %vm233, %v2897, %v2879
  %v2903 = vsel %vm233, %v2899, %v2881
  %v2905 = vsel %vm238, %v2901, %v2890
  %v2908 = vsel %vm238, %v2903, %v2892
  %v2911 = vsel %vm228, %v2895, 0
  %v2914 = vsel %vm228, %v2894, 0
  %2916 = vmatprep.subr.bf16.mxu0 %v331
  %2917 = vmatpush1.bf16.msra.mxu0 %v330
  %2918 = vmatprep.subr.bf16.mxu0 %v329
  %2919 = vmatpush1.bf16.msra.mxu0 %v328
  %2920 = vmatprep.subr.bf16.mxu0 %v327
  %2921 = vmatpush1.bf16.msra.mxu0 %v326
  %2922 = vmatprep.subr.bf16.mxu0 %v325
  %2923 = vmatpush1.bf16.msra.mxu0 %v324
  %2924 = vmatprep.subr.bf16.mxu0 %v323
  %2925 = vmatpush1.bf16.msra.mxu0 %v322
  %2926 = vmatprep.subr.bf16.mxu0 %v321
  %2927 = vmatpush1.bf16.msra.mxu0 %v320
  %2928 = vmatprep.subr.bf16.mxu0 %v319
  %2929 = vmatpush1.bf16.msra.mxu0 %v318
  %2930 = vmatprep.subr.bf16.mxu0 %v317
  %2931 = vmatpush1.bf16.msra.mxu0 %v316
  %2932 = vmatprep.subr.bf16.mxu0 0
  %2933 = vmatpush2.bf16.msra.mxu0 0
  %2934 = vmatprep.subr.bf16.mxu0 0
  %2935 = vmatpush2.bf16.msra.mxu0 0
  %2936 = vmatprep.subr.bf16.mxu0 0
  %2937 = vmatpush2.bf16.msra.mxu0 0
  %2938 = vmatprep.subr.bf16.mxu0 0
  %2939 = vmatpush2.bf16.msra.mxu0 0
  %2940 = vmatprep.subr.bf16.mxu0 0
  %2941 = vmatpush2.bf16.msra.mxu0 0
  %2942 = vmatprep.subr.bf16.mxu0 0
  %2943 = vmatpush2.bf16.msra.mxu0 0
  %2944 = vmatprep.subr.bf16.mxu0 %v335
  %2945 = vmatpush2.bf16.msra.mxu0 %v334
  %2946 = vmatprep.subr.bf16.mxu0 %v333
  %2947 = vmatpush2.bf16.msra.mxu0 %v332
  %2948 = vmatprep.mubr.bf16.mxu0 %v2911
  %2949 = vmatmul.mubr.bf16.gmra.mxu0 %v2905
  %v2950 = vpop.f32.mrf.mxu0
  %v2951 = vadd.f32 %v249, %v2950
  %v2952 = vpop.f32.mrf.mxu0
  %v2953 = vadd.f32 %v253, %v2952
  %v2954 = vpop.f32.mrf.mxu0
  %v2955 = vadd.f32 %v249, %v2954
  %v2956 = vpop.f32.mrf.mxu0
  %v2957 = vadd.f32 %v253, %v2956
  %2958 = vmatprep.mubr.bf16.mxu0 %v2914
  %2959 = vmatmul.mubr.bf16.gmra.mxu0 %v2908
  %v2960 = vpop.f32.mrf.mxu0
  %v2961 = vadd.f32 %v249, %v2960
  %v2962 = vpop.f32.mrf.mxu0
  %v2963 = vadd.f32 %v253, %v2962
  %v2964 = vpop.f32.mrf.mxu0
  %v2965 = vadd.f32 %v249, %v2964
  %v2966 = vpop.f32.mrf.mxu0
  %v2967 = vadd.f32 %v253, %v2966
  %2968 = vdwg.mxu0
  %v2969 = vsub.f32 0.0, %v2951
  %v2970 = vsub.f32 0.0, %v2953
  %v2971 = vsub.f32 0.0, %v2955
  %v2972 = vsub.f32 0.0, %v2957
  %v2973 = vsub.f32 0.0, %v2961
  %v2974 = vsub.f32 0.0, %v2963
  %v2975 = vsub.f32 0.0, %v2965
  %v2976 = vsub.f32 0.0, %v2967
  %v2977 = vmul.f32 %v2969, 1.442695
  %v2978 = vpow.pop %v2977
  %v2979 = vmul.f32 %v2970, 1.442695
  %v2980 = vpow.pop %v2979
  %v2981 = vmul.f32 %v2971, 1.442695
  %v2982 = vpow.pop %v2981
  %v2983 = vmul.f32 %v2972, 1.442695
  %v2984 = vpow.pop %v2983
  %v2985 = vmul.f32 %v2973, 1.442695
  %v2986 = vpow.pop %v2985
  %v2987 = vmul.f32 %v2974, 1.442695
  %v2988 = vpow.pop %v2987
  %v2989 = vmul.f32 %v2975, 1.442695
  %v2990 = vpow.pop %v2989
  %v2991 = vmul.f32 %v2976, 1.442695
  %v2992 = vpow.pop %v2991
  %v2993 = vadd.f32 %v2978, 1.0
  %v2994 = vadd.f32 %v2980, 1.0
  %v2995 = vadd.f32 %v2982, 1.0
  %v2996 = vadd.f32 %v2984, 1.0
  %v2997 = vadd.f32 %v2986, 1.0
  %v2998 = vadd.f32 %v2988, 1.0
  %v2999 = vadd.f32 %v2990, 1.0
  %v3000 = vadd.f32 %v2992, 1.0
  %v3001 = vrcp.pop %v2993
  %v3002 = vrcp.pop %v2994
  %v3003 = vrcp.pop %v2995
  %v3004 = vrcp.pop %v2996
  %v3005 = vrcp.pop %v2997
  %v3006 = vrcp.pop %v2998
  %v3007 = vrcp.pop %v2999
  %v3008 = vrcp.pop %v3000
  %v3009 = vpack.c.bf16 %v3003, %v3001
  %v3010 = vpack.c.bf16 %v3004, %v3002
  %v3011 = vpack.c.bf16 %v3007, %v3005
  %v3012 = vpack.c.bf16 %v3008, %v3006
  %v3014 = vsel %vm522, %v3010, 0
  %v3017 = vsel %vm522, %v3012, 0
  %3019 = vmatprep.subr.bf16.mxu0 0
  %3020 = vmatpush1.bf16.msra.mxu0 %v508
  %3021 = vmatprep.subr.bf16.mxu0 0
  %3022 = vmatpush1.bf16.msra.mxu0 %v507
  %3023 = vmatprep.subr.bf16.mxu0 0
  %3024 = vmatpush1.bf16.msra.mxu0 %v506
  %3025 = vmatprep.subr.bf16.mxu0 0
  %3026 = vmatpush1.bf16.msra.mxu0 %v505
  %3027 = vmatprep.subr.bf16.mxu0 0
  %3028 = vmatpush1.bf16.msra.mxu0 %v504
  %3029 = vmatprep.subr.bf16.mxu0 0
  %3030 = vmatpush1.bf16.msra.mxu0 %v503
  %3031 = vmatprep.subr.bf16.mxu0 0
  %3032 = vmatpush1.bf16.msra.mxu0 %v502
  %3033 = vmatprep.subr.bf16.mxu0 0
  %3034 = vmatpush1.bf16.msra.mxu0 %v501
  %3035 = vmatprep.subr.bf16.mxu0 0
  %3036 = vmatpush2.bf16.msra.mxu0 0
  %3037 = vmatprep.subr.bf16.mxu0 0
  %3038 = vmatpush2.bf16.msra.mxu0 0
  %3039 = vmatprep.subr.bf16.mxu0 0
  %3040 = vmatpush2.bf16.msra.mxu0 0
  %3041 = vmatprep.subr.bf16.mxu0 0
  %3042 = vmatpush2.bf16.msra.mxu0 0
  %3043 = vmatprep.subr.bf16.mxu0 0
  %3044 = vmatpush2.bf16.msra.mxu0 0
  %3045 = vmatprep.subr.bf16.mxu0 0
  %3046 = vmatpush2.bf16.msra.mxu0 %v531
  %3047 = vmatprep.subr.bf16.mxu0 0
  %3048 = vmatpush2.bf16.msra.mxu0 %v510
  %3049 = vmatprep.subr.bf16.mxu0 0
  %3050 = vmatpush2.bf16.msra.mxu0 %v509
  %3051 = vmatprep.mubr.bf16.mxu0 %v3014
  %3052 = vmatmul.mubr.bf16.gmra.mxu0 %v3009
  %v3053 = vpop.f32.mrf.mxu0
  %v3054 = vadd.f32 0.0, %v3053
  %v3055 = vpop.f32.mrf.mxu0
  %v3056 = vpop.f32.mrf.mxu0
  %v3057 = vadd.f32 0.0, %v3056
  %v3058 = vpop.f32.mrf.mxu0
  %3059 = vmatprep.mubr.bf16.mxu0 %v3017
  %3060 = vmatmul.mubr.bf16.gmra.mxu0 %v3011
  %v3061 = vpop.f32.mrf.mxu0
  %v3062 = vadd.f32 0.0, %v3061
  %v3063 = vpop.f32.mrf.mxu0
  %v3064 = vpop.f32.mrf.mxu0
  %v3065 = vadd.f32 0.0, %v3064
  %v3066 = vpop.f32.mrf.mxu0
  %3067 = vdwg.mxu0
  %v3068 = vpack.c.bf16 %v3057, %v3054
  %v3069 = vpack.c.bf16 %v3065, %v3062
  %v3071 = vsel %vm593, %v3069, 0
  %3073 = vmatprep.subr.bf16.mxu0 0
  %3074 = vmatpush1.bf16.msra.mxu0 0
  %3075 = vmatprep.subr.bf16.mxu0 0
  %3076 = vmatpush1.bf16.msra.mxu0 0
  %3077 = vmatprep.subr.bf16.mxu0 0
  %3078 = vmatpush1.bf16.msra.mxu0 0
  %3079 = vmatprep.subr.bf16.mxu0 0
  %3080 = vmatpush1.bf16.msra.mxu0 0
  %3081 = vmatprep.subr.bf16.mxu0 0
  %3082 = vmatpush1.bf16.msra.mxu0 0
  %3083 = vmatprep.subr.bf16.mxu0 0
  %3084 = vmatpush1.bf16.msra.mxu0 0
  %3085 = vmatprep.subr.bf16.mxu0 0
  %3086 = vmatpush1.bf16.msra.mxu0 %v3071
  %3087 = vmatprep.subr.bf16.mxu0 0
  %3088 = vmatpush1.bf16.msra.mxu0 %v3068
  %3089 = vmatprep.subr.bf16.mxu0 0
  %3090 = vmatpush2.bf16.msra.mxu0 0
  %3091 = vmatprep.subr.bf16.mxu0 0
  %3092 = vmatpush2.bf16.msra.mxu0 0
  %3093 = vmatprep.subr.bf16.mxu0 0
  %3094 = vmatpush2.bf16.msra.mxu0 0
  %3095 = vmatprep.subr.bf16.mxu0 0
  %3096 = vmatpush2.bf16.msra.mxu0 0
  %3097 = vmatprep.subr.bf16.mxu0 0
  %3098 = vmatpush2.bf16.msra.mxu0 0
  %3099 = vmatprep.subr.bf16.mxu0 0
  %3100 = vmatpush2.bf16.msra.mxu0 0
  %3101 = vmatprep.subr.bf16.mxu0 0
  %3102 = vmatpush2.bf16.msra.mxu0 0
  %3103 = vmatprep.subr.bf16.mxu0 0
  %3104 = vmatpush2.bf16.msra.mxu0 0
  %3105 = vmatprep.mubr.bf16.mxu0 0
  %3106 = vmatmul.mubr.bf16.gmra.mxu0 %v591
  %v3107 = vpop.f32.mrf.mxu0
  %v3108 = vadd.f32 0.0, %v3107
  %v3109 = vpop.f32.mrf.mxu0
  %v3110 = vpop.f32.mrf.mxu0
  %v3111 = vadd.f32 0.0, %v3110
  %v3112 = vpop.f32.mrf.mxu0
  %3113 = vdwg.mxu0
  %v3114 = vpack.c.bf16 %v3111, %v3108
  %v3116 = vshrl.u32 %v3114, 16
  %v3118 = vshll.u32 %v3114, 16
  %v3120 = vrot.slane %v3118, 1
  %v3121 = vor.u32 %v3116, %v3120
  %3122 = vrot.lane.b32.xlu0 %v3121, 84
  %v3123 = vpop.permute.xlu0 %3122
  %v3125 = vrot.slane %v3114, 1
  %3126 = vrot.lane.b32.xlu0 %v3125, 40
  %v3127 = vpop.permute.xlu0 %3126
  %v3128 = vrot.slane %v3116, 1
  %v3129 = vrot.slane %v3118, 2
  %v3130 = vor.u32 %v3128, %v3129
  %3131 = vrot.lane.b32.xlu0 %v3130, 124
  %v3132 = vpop.permute.xlu0 %3131
  %v3133 = vrot.slane %v3114, 2
  %3134 = vrot.lane.b32.xlu0 %v3133, 80
  %v3135 = vpop.permute.xlu0 %3134
  %v3137 = vsel %vm660, %v3114, %v3123
  %v3140 = vsel %vm522, %v3123, %v3127
  %v3142 = vsel %vm666, %v3140, %v3132
  %v3145 = vsel %vm670, %v3132, %v3135
  %v3147 = vsel %vm950, %v3135, 0
  %3149 = vmatprep.subr.bf16.mxu0 %v859
  %3150 = vmatpush1.bf16.msra.mxu0 %v858
  %3151 = vmatprep.subr.bf16.mxu0 %v857
  %3152 = vmatpush1.bf16.msra.mxu0 %v856
  %3153 = vmatprep.subr.bf16.mxu0 %v855
  %3154 = vmatpush1.bf16.msra.mxu0 %v854
  %3155 = vmatprep.subr.bf16.mxu0 %v853
  %3156 = vmatpush1.bf16.msra.mxu0 %v852
  %3157 = vmatprep.subr.bf16.mxu0 %v851
  %3158 = vmatpush1.bf16.msra.mxu0 %v850
  %3159 = vmatprep.subr.bf16.mxu0 %v849
  %3160 = vmatpush1.bf16.msra.mxu0 %v848
  %3161 = vmatprep.subr.bf16.mxu0 %v847
  %3162 = vmatpush1.bf16.msra.mxu0 %v846
  %3163 = vmatprep.subr.bf16.mxu0 %v845
  %3164 = vmatpush1.bf16.msra.mxu0 %v844
  %3165 = vmatprep.subr.bf16.mxu0 %v875
  %3166 = vmatpush2.bf16.msra.mxu0 %v874
  %3167 = vmatprep.subr.bf16.mxu0 %v873
  %3168 = vmatpush2.bf16.msra.mxu0 %v872
  %3169 = vmatprep.subr.bf16.mxu0 %v871
  %3170 = vmatpush2.bf16.msra.mxu0 %v870
  %3171 = vmatprep.subr.bf16.mxu0 %v869
  %3172 = vmatpush2.bf16.msra.mxu0 %v868
  %3173 = vmatprep.subr.bf16.mxu0 %v867
  %3174 = vmatpush2.bf16.msra.mxu0 %v866
  %3175 = vmatprep.subr.bf16.mxu0 %v865
  %3176 = vmatpush2.bf16.msra.mxu0 %v864
  %3177 = vmatprep.subr.bf16.mxu0 %v863
  %3178 = vmatpush2.bf16.msra.mxu0 %v862
  %3179 = vmatprep.subr.bf16.mxu0 %v861
  %3180 = vmatpush2.bf16.msra.mxu0 %v860
  %3181 = vmatprep.mubr.bf16.mxu0 %v3142
  %3182 = vmatmul.mubr.bf16.gmra.mxu0 %v3137
  %v3183 = vpop.f32.mrf.mxu0
  %v3184 = vadd.f32 %v678, %v3183
  %v3185 = vpop.f32.mrf.mxu0
  %v3186 = vadd.f32 %v682, %v3185
  %v3187 = vpop.f32.mrf.mxu0
  %v3188 = vadd.f32 %v678, %v3187
  %v3189 = vpop.f32.mrf.mxu0
  %v3190 = vadd.f32 %v682, %v3189
  %3191 = vdwg.mxu0
  %3192 = vmatprep.subr.bf16.mxu0 %v891
  %3193 = vmatpush1.bf16.msra.mxu0 %v890
  %3194 = vmatprep.subr.bf16.mxu0 %v889
  %3195 = vmatpush1.bf16.msra.mxu0 %v888
  %3196 = vmatprep.subr.bf16.mxu0 %v887
  %3197 = vmatpush1.bf16.msra.mxu0 %v886
  %3198 = vmatprep.subr.bf16.mxu0 %v885
  %3199 = vmatpush1.bf16.msra.mxu0 %v884
  %3200 = vmatprep.subr.bf16.mxu0 %v883
  %3201 = vmatpush1.bf16.msra.mxu0 %v882
  %3202 = vmatprep.subr.bf16.mxu0 %v881
  %3203 = vmatpush1.bf16.msra.mxu0 %v880
  %3204 = vmatprep.subr.bf16.mxu0 %v879
  %3205 = vmatpush1.bf16.msra.mxu0 %v878
  %3206 = vmatprep.subr.bf16.mxu0 %v877
  %3207 = vmatpush1.bf16.msra.mxu0 %v876
  %3208 = vmatprep.subr.bf16.mxu0 0
  %3209 = vmatpush2.bf16.msra.mxu0 0
  %3210 = vmatprep.subr.bf16.mxu0 0
  %3211 = vmatpush2.bf16.msra.mxu0 0
  %3212 = vmatprep.subr.bf16.mxu0 0
  %3213 = vmatpush2.bf16.msra.mxu0 0
  %3214 = vmatprep.subr.bf16.mxu0 0
  %3215 = vmatpush2.bf16.msra.mxu0 0
  %3216 = vmatprep.subr.bf16.mxu0 0
  %3217 = vmatpush2.bf16.msra.mxu0 0
  %3218 = vmatprep.subr.bf16.mxu0 %v958
  %3219 = vmatpush2.bf16.msra.mxu0 %v955
  %3220 = vmatprep.subr.bf16.mxu0 %v895
  %3221 = vmatpush2.bf16.msra.mxu0 %v894
  %3222 = vmatprep.subr.bf16.mxu0 %v893
  %3223 = vmatpush2.bf16.msra.mxu0 %v892
  %3224 = vmatprep.mubr.bf16.mxu0 %v3147
  %3225 = vmatmul.mubr.bf16.gmra.mxu0 %v3145
  %v3226 = vpop.f32.mrf.mxu0
  %v3227 = vadd.f32 %v3184, %v3226
  %v3228 = vpop.f32.mrf.mxu0
  %v3229 = vadd.f32 %v3186, %v3228
  %v3230 = vpop.f32.mrf.mxu0
  %v3231 = vadd.f32 %v3188, %v3230
  %v3232 = vpop.f32.mrf.mxu0
  %v3233 = vadd.f32 %v3190, %v3232
  %3234 = vdwg.mxu0
  %v3235 = vsub.f32 0.0, %v3227
  %v3236 = vsub.f32 0.0, %v3229
  %v3237 = vsub.f32 0.0, %v3231
  %v3238 = vsub.f32 0.0, %v3233
  %v3239 = vmul.f32 %v3235, 1.442695
  %v3240 = vpow.pop %v3239
  %v3241 = vmul.f32 %v3236, 1.442695
  %v3242 = vpow.pop %v3241
  %v3243 = vmul.f32 %v3237, 1.442695
  %v3244 = vpow.pop %v3243
  %v3245 = vmul.f32 %v3238, 1.442695
  %v3246 = vpow.pop %v3245
  %v3247 = vadd.f32 %v3240, 1.0
  %v3248 = vadd.f32 %v3242, 1.0
  %v3249 = vadd.f32 %v3244, 1.0
  %v3250 = vadd.f32 %v3246, 1.0
  %v3251 = vrcp.pop %v3247
  %v3252 = vrcp.pop %v3248
  %v3253 = vrcp.pop %v3249
  %v3254 = vrcp.pop %v3250
  %v3255 = vpack.c.bf16 %v3253, %v3251
  %v3256 = vpack.c.bf16 %v3254, %v3252
  %v3258 = vsel %vm228, %v3256, 0
  %3260 = vmatprep.subr.bf16.mxu0 0
  %3261 = vmatpush1.bf16.msra.mxu0 %v1115
  %3262 = vmatprep.subr.bf16.mxu0 0
  %3263 = vmatpush1.bf16.msra.mxu0 %v1114
  %3264 = vmatprep.subr.bf16.mxu0 0
  %3265 = vmatpush1.bf16.msra.mxu0 %v1113
  %3266 = vmatprep.subr.bf16.mxu0 0
  %3267 = vmatpush1.bf16.msra.mxu0 %v1112
  %3268 = vmatprep.subr.bf16.mxu0 0
  %3269 = vmatpush1.bf16.msra.mxu0 %v1111
  %3270 = vmatprep.subr.bf16.mxu0 0
  %3271 = vmatpush1.bf16.msra.mxu0 %v1110
  %3272 = vmatprep.subr.bf16.mxu0 0
  %3273 = vmatpush1.bf16.msra.mxu0 %v1109
  %3274 = vmatprep.subr.bf16.mxu0 0
  %3275 = vmatpush1.bf16.msra.mxu0 %v1108
  %3276 = vmatprep.subr.bf16.mxu0 0
  %3277 = vmatpush2.bf16.msra.mxu0 0
  %3278 = vmatprep.subr.bf16.mxu0 0
  %3279 = vmatpush2.bf16.msra.mxu0 0
  %3280 = vmatprep.subr.bf16.mxu0 0
  %3281 = vmatpush2.bf16.msra.mxu0 0
  %3282 = vmatprep.subr.bf16.mxu0 0
  %3283 = vmatpush2.bf16.msra.mxu0 0
  %3284 = vmatprep.subr.bf16.mxu0 0
  %3285 = vmatpush2.bf16.msra.mxu0 0
  %3286 = vmatprep.subr.bf16.mxu0 0
  %3287 = vmatpush2.bf16.msra.mxu0 0
  %3288 = vmatprep.subr.bf16.mxu0 0
  %3289 = vmatpush2.bf16.msra.mxu0 %v1117
  %3290 = vmatprep.subr.bf16.mxu0 0
  %3291 = vmatpush2.bf16.msra.mxu0 %v1116
  %3292 = vmatprep.mubr.bf16.mxu0 %v3258
  %3293 = vmatmul.mubr.bf16.gmra.mxu0 %v3255
  %v3294 = vpop.f32.mrf.mxu0
  %v3295 = vadd.f32 0.0, %v3294
  %v3296 = vpop.f32.mrf.mxu0
  %v3297 = vpop.f32.mrf.mxu0
  %v3298 = vadd.f32 0.0, %v3297
  %v3299 = vpop.f32.mrf.mxu0
  %3300 = vdwg.mxu0
  %v3301 = vpack.c.bf16 %v3298, %v3295
  %v3303 = vsel %vm1177, %v3301, 0
  %3305 = vmatprep.subr.bf16.mxu0 0
  %3306 = vmatpush1.bf16.msra.mxu0 0
  %3307 = vmatprep.subr.bf16.mxu0 0
  %3308 = vmatpush1.bf16.msra.mxu0 0
  %3309 = vmatprep.subr.bf16.mxu0 0
  %3310 = vmatpush1.bf16.msra.mxu0 0
  %3311 = vmatprep.subr.bf16.mxu0 0
  %3312 = vmatpush1.bf16.msra.mxu0 0
  %3313 = vmatprep.subr.bf16.mxu0 0
  %3314 = vmatpush1.bf16.msra.mxu0 0
  %3315 = vmatprep.subr.bf16.mxu0 0
  %3316 = vmatpush1.bf16.msra.mxu0 0
  %3317 = vmatprep.subr.bf16.mxu0 0
  %3318 = vmatpush1.bf16.msra.mxu0 0
  %3319 = vmatprep.subr.bf16.mxu0 0
  %3320 = vmatpush1.bf16.msra.mxu0 %v3303
  %3321 = vmatprep.subr.bf16.mxu0 0
  %3322 = vmatpush2.bf16.msra.mxu0 0
  %3323 = vmatprep.subr.bf16.mxu0 0
  %3324 = vmatpush2.bf16.msra.mxu0 0
  %3325 = vmatprep.subr.bf16.mxu0 0
  %3326 = vmatpush2.bf16.msra.mxu0 0
  %3327 = vmatprep.subr.bf16.mxu0 0
  %3328 = vmatpush2.bf16.msra.mxu0 0
  %3329 = vmatprep.subr.bf16.mxu0 0
  %3330 = vmatpush2.bf16.msra.mxu0 0
  %3331 = vmatprep.subr.bf16.mxu0 0
  %3332 = vmatpush2.bf16.msra.mxu0 0
  %3333 = vmatprep.subr.bf16.mxu0 0
  %3334 = vmatpush2.bf16.msra.mxu0 0
  %3335 = vmatprep.subr.bf16.mxu0 0
  %3336 = vmatpush2.bf16.msra.mxu0 0
  %3337 = vmatprep.mubr.bf16.mxu0 0
  %3338 = vmatmul.mubr.bf16.gmra.mxu0 %v1175
  %v3339 = vpop.f32.mrf.mxu0
  %v3340 = vadd.f32 0.0, %v3339
  %v3341 = vpop.f32.mrf.mxu0
  %v3342 = vpop.f32.mrf.mxu0
  %v3343 = vpop.f32.mrf.mxu0
  %3344 = vdwg.mxu0
  %3345 = vst.msk [vmem:[#allocation2 + $0x4] sm:$0x1] %vm1221, %v3340
  %v3347 = vrot.slane %v3340, 1
  %3348 = vrot.lane.b32.xlu0 %v3347, 80
  %v3349 = vpop.permute.xlu0 %3348
  %3351 = vst.msk [vmem:[#allocation2 + $0x4] sm:$0x1] %vm1228, %v3349
  %3352 = vst.msk [vmem:[#allocation2 + $0xc] sm:$0x1] %vm1230, %v3349
  %v3353 = vrot.slane %v3340, 2
  %3354 = vrot.lane.b32.xlu0 %v3353, 32
  %v3355 = vpop.permute.xlu0 %3354
  %3357 = vst.msk [vmem:[#allocation2 + $0xc] sm:$0x1] %vm1236, %v3355
  %v3358 = vrot.slane %v3340, 3
  %3359 = vrot.lane.b32.xlu0 %v3358, 112
  %v3360 = vpop.permute.xlu0 %3359
  %3362 = vst.msk [vmem:[#allocation2 + $0xc] sm:$0x1] %vm1242, %v3360
  %3363 = vst.msk [vmem:[#allocation2 + $0x14] sm:$0x1] %vm1244, %v3360
  %v3364 = vrot.slane %v3340, 4
  %3365 = vrot.lane.b32.xlu0 %v3364, 64
  %v3366 = vpop.permute.xlu0 %3365
  %3368 = vst.msk [vmem:[#allocation2 + $0x14] sm:$0x1] %vm1250, %v3366
  %3369 = vst.msk [vmem:[#allocation2 + $0x1c] sm:$0x1] %vm1252, %v3366
  %s3370 = scalar_lea.vmem %s0, 80
  %v3371 = vld [vmem:[%s3370] sm:$0xf]
  %v3372 = vld [vmem:[%s3370 + $0x4] sm:$0xf]
  %v3373 = vld [vmem:[%s3370 + $0x8] sm:$0xf]
  %v3374 = vld [vmem:[%s3370 + $0xc] sm:$0xf]
  %v3379 = vunpack.c.l.b16 %v3371
  %v3380 = vunpack.c.l.b16 %v3372
  %v3381 = vunpack.c.l.b16 %v3373
  %v3382 = vunpack.c.l.b16 %v3374
  %v3383 = vpack.c.b16 %v3380, %v3379
  %v3384 = vpack.c.b16 %v3382, %v3381
  %v3386 = vshrl.u32 %v3383, 16
  %v3388 = vshll.u32 %v3383, 16
  %v3390 = vrot.slane %v3388, 1
  %v3391 = vor.u32 %v3386, %v3390
  %v3393 = vshll.u32 %v3384, 16
  %v3395 = vrot.slane %v3393, 1
  %v3396 = vsel %vm184, %v3391, %v3395
  %v3397 = vshrl.u32 %v3384, 16
  %v3399 = vor.u32 %v3397, %v3395
  %3400 = vrot.lane.b32.xlu0 %v3396, 32
  %v3401 = vpop.permute.xlu0 %3400
  %3402 = vrot.lane.b32.xlu0 %v3399, 32
  %v3403 = vpop.permute.xlu0 %3402
  %v3404 = vrot.slane %v3383, 1
  %v3405 = vrot.slane %v3384, 1
  %v3406 = vsel %vm204, %v3404, %v3405
  %3407 = vrot.lane.b32.xlu0 %v3406, 64
  %v3408 = vpop.permute.xlu0 %3407
  %3409 = vrot.lane.b32.xlu0 %v3405, 64
  %v3410 = vpop.permute.xlu0 %3409
  %v3411 = vrot.slane %v3386, 1
  %v3412 = vrot.slane %v3388, 2
  %v3413 = vor.u32 %v3411, %v3412
  %v3414 = vrot.slane %v3397, 1
  %v3415 = vrot.slane %v3393, 2
  %v3416 = vor.u32 %v3414, %v3415
  %v3417 = vsel %vm212, %v3413, %v3416
  %3418 = vrot.lane.b32.xlu0 %v3417, 96
  %v3419 = vpop.permute.xlu0 %3418
  %3420 = vrot.lane.b32.xlu0 %v3416, 96
  %v3421 = vpop.permute.xlu0 %3420
  %v3422 = vrot.slane %v3383, 2
  %v3423 = vrot.slane %v3384, 2
  %v3424 = vsel %vm224, %v3422, %v3423
  %v3426 = vsel %vm228, %v3383, %v3401
  %v3428 = vsel %vm228, %v3384, %v3403
  %v3430 = vsel %vm233, %v3426, %v3408
  %v3432 = vsel %vm233, %v3428, %v3410
  %v3434 = vsel %vm238, %v3430, %v3419
  %v3437 = vsel %vm238, %v3432, %v3421
  %v3440 = vsel %vm228, %v3424, 0
  %v3443 = vsel %vm228, %v3423, 0
  %3445 = vmatprep.subr.bf16.mxu0 %v331
  %3446 = vmatpush1.bf16.msra.mxu0 %v330
  %3447 = vmatprep.subr.bf16.mxu0 %v329
  %3448 = vmatpush1.bf16.msra.mxu0 %v328
  %3449 = vmatprep.subr.bf16.mxu0 %v327
  %3450 = vmatpush1.bf16.msra.mxu0 %v326
  %3451 = vmatprep.subr.bf16.mxu0 %v325
  %3452 = vmatpush1.bf16.msra.mxu0 %v324
  %3453 = vmatprep.subr.bf16.mxu0 %v323
  %3454 = vmatpush1.bf16.msra.mxu0 %v322
  %3455 = vmatprep.subr.bf16.mxu0 %v321
  %3456 = vmatpush1.bf16.msra.mxu0 %v320
  %3457 = vmatprep.subr.bf16.mxu0 %v319
  %3458 = vmatpush1.bf16.msra.mxu0 %v318
  %3459 = vmatprep.subr.bf16.mxu0 %v317
  %3460 = vmatpush1.bf16.msra.mxu0 %v316
  %3461 = vmatprep.subr.bf16.mxu0 0
  %3462 = vmatpush2.bf16.msra.mxu0 0
  %3463 = vmatprep.subr.bf16.mxu0 0
  %3464 = vmatpush2.bf16.msra.mxu0 0
  %3465 = vmatprep.subr.bf16.mxu0 0
  %3466 = vmatpush2.bf16.msra.mxu0 0
  %3467 = vmatprep.subr.bf16.mxu0 0
  %3468 = vmatpush2.bf16.msra.mxu0 0
  %3469 = vmatprep.subr.bf16.mxu0 0
  %3470 = vmatpush2.bf16.msra.mxu0 0
  %3471 = vmatprep.subr.bf16.mxu0 0
  %3472 = vmatpush2.bf16.msra.mxu0 0
  %3473 = vmatprep.subr.bf16.mxu0 %v335
  %3474 = vmatpush2.bf16.msra.mxu0 %v334
  %3475 = vmatprep.subr.bf16.mxu0 %v333
  %3476 = vmatpush2.bf16.msra.mxu0 %v332
  %3477 = vmatprep.mubr.bf16.mxu0 %v3440
  %3478 = vmatmul.mubr.bf16.gmra.mxu0 %v3434
  %v3479 = vpop.f32.mrf.mxu0
  %v3480 = vadd.f32 %v249, %v3479
  %v3481 = vpop.f32.mrf.mxu0
  %v3482 = vadd.f32 %v253, %v3481
  %v3483 = vpop.f32.mrf.mxu0
  %v3484 = vadd.f32 %v249, %v3483
  %v3485 = vpop.f32.mrf.mxu0
  %v3486 = vadd.f32 %v253, %v3485
  %3487 = vmatprep.mubr.bf16.mxu0 %v3443
  %3488 = vmatmul.mubr.bf16.gmra.mxu0 %v3437
  %v3489 = vpop.f32.mrf.mxu0
  %v3490 = vadd.f32 %v249, %v3489
  %v3491 = vpop.f32.mrf.mxu0
  %v3492 = vadd.f32 %v253, %v3491
  %v3493 = vpop.f32.mrf.mxu0
  %v3494 = vadd.f32 %v249, %v3493
  %v3495 = vpop.f32.mrf.mxu0
  %v3496 = vadd.f32 %v253, %v3495
  %3497 = vdwg.mxu0
  %v3498 = vsub.f32 0.0, %v3480
  %v3499 = vsub.f32 0.0, %v3482
  %v3500 = vsub.f32 0.0, %v3484
  %v3501 = vsub.f32 0.0, %v3486
  %v3502 = vsub.f32 0.0, %v3490
  %v3503 = vsub.f32 0.0, %v3492
  %v3504 = vsub.f32 0.0, %v3494
  %v3505 = vsub.f32 0.0, %v3496
  %v3506 = vmul.f32 %v3498, 1.442695
  %v3507 = vpow.pop %v3506
  %v3508 = vmul.f32 %v3499, 1.442695
  %v3509 = vpow.pop %v3508
  %v3510 = vmul.f32 %v3500, 1.442695
  %v3511 = vpow.pop %v3510
  %v3512 = vmul.f32 %v3501, 1.442695
  %v3513 = vpow.pop %v3512
  %v3514 = vmul.f32 %v3502, 1.442695
  %v3515 = vpow.pop %v3514
  %v3516 = vmul.f32 %v3503, 1.442695
  %v3517 = vpow.pop %v3516
  %v3518 = vmul.f32 %v3504, 1.442695
  %v3519 = vpow.pop %v3518
  %v3520 = vmul.f32 %v3505, 1.442695
  %v3521 = vpow.pop %v3520
  %v3522 = vadd.f32 %v3507, 1.0
  %v3523 = vadd.f32 %v3509, 1.0
  %v3524 = vadd.f32 %v3511, 1.0
  %v3525 = vadd.f32 %v3513, 1.0
  %v3526 = vadd.f32 %v3515, 1.0
  %v3527 = vadd.f32 %v3517, 1.0
  %v3528 = vadd.f32 %v3519, 1.0
  %v3529 = vadd.f32 %v3521, 1.0
  %v3530 = vrcp.pop %v3522
  %v3531 = vrcp.pop %v3523
  %v3532 = vrcp.pop %v3524
  %v3533 = vrcp.pop %v3525
  %v3534 = vrcp.pop %v3526
  %v3535 = vrcp.pop %v3527
  %v3536 = vrcp.pop %v3528
  %v3537 = vrcp.pop %v3529
  %v3538 = vpack.c.bf16 %v3532, %v3530
  %v3539 = vpack.c.bf16 %v3533, %v3531
  %v3540 = vpack.c.bf16 %v3536, %v3534
  %v3541 = vpack.c.bf16 %v3537, %v3535
  %v3543 = vsel %vm522, %v3539, 0
  %v3546 = vsel %vm522, %v3541, 0
  %3548 = vmatprep.subr.bf16.mxu0 0
  %3549 = vmatpush1.bf16.msra.mxu0 %v508
  %3550 = vmatprep.subr.bf16.mxu0 0
  %3551 = vmatpush1.bf16.msra.mxu0 %v507
  %3552 = vmatprep.subr.bf16.mxu0 0
  %3553 = vmatpush1.bf16.msra.mxu0 %v506
  %3554 = vmatprep.subr.bf16.mxu0 0
  %3555 = vmatpush1.bf16.msra.mxu0 %v505
  %3556 = vmatprep.subr.bf16.mxu0 0
  %3557 = vmatpush1.bf16.msra.mxu0 %v504
  %3558 = vmatprep.subr.bf16.mxu0 0
  %3559 = vmatpush1.bf16.msra.mxu0 %v503
  %3560 = vmatprep.subr.bf16.mxu0 0
  %3561 = vmatpush1.bf16.msra.mxu0 %v502
  %3562 = vmatprep.subr.bf16.mxu0 0
  %3563 = vmatpush1.bf16.msra.mxu0 %v501
  %3564 = vmatprep.subr.bf16.mxu0 0
  %3565 = vmatpush2.bf16.msra.mxu0 0
  %3566 = vmatprep.subr.bf16.mxu0 0
  %3567 = vmatpush2.bf16.msra.mxu0 0
  %3568 = vmatprep.subr.bf16.mxu0 0
  %3569 = vmatpush2.bf16.msra.mxu0 0
  %3570 = vmatprep.subr.bf16.mxu0 0
  %3571 = vmatpush2.bf16.msra.mxu0 0
  %3572 = vmatprep.subr.bf16.mxu0 0
  %3573 = vmatpush2.bf16.msra.mxu0 0
  %3574 = vmatprep.subr.bf16.mxu0 0
  %3575 = vmatpush2.bf16.msra.mxu0 %v531
  %3576 = vmatprep.subr.bf16.mxu0 0
  %3577 = vmatpush2.bf16.msra.mxu0 %v510
  %3578 = vmatprep.subr.bf16.mxu0 0
  %3579 = vmatpush2.bf16.msra.mxu0 %v509
  %3580 = vmatprep.mubr.bf16.mxu0 %v3543
  %3581 = vmatmul.mubr.bf16.gmra.mxu0 %v3538
  %v3582 = vpop.f32.mrf.mxu0
  %v3583 = vadd.f32 0.0, %v3582
  %v3584 = vpop.f32.mrf.mxu0
  %v3585 = vpop.f32.mrf.mxu0
  %v3586 = vadd.f32 0.0, %v3585
  %v3587 = vpop.f32.mrf.mxu0
  %3588 = vmatprep.mubr.bf16.mxu0 %v3546
  %3589 = vmatmul.mubr.bf16.gmra.mxu0 %v3540
  %v3590 = vpop.f32.mrf.mxu0
  %v3591 = vadd.f32 0.0, %v3590
  %v3592 = vpop.f32.mrf.mxu0
  %v3593 = vpop.f32.mrf.mxu0
  %v3594 = vadd.f32 0.0, %v3593
  %v3595 = vpop.f32.mrf.mxu0
  %3596 = vdwg.mxu0
  %v3597 = vpack.c.bf16 %v3586, %v3583
  %v3598 = vpack.c.bf16 %v3594, %v3591
  %v3600 = vsel %vm593, %v3598, 0
  %3602 = vmatprep.subr.bf16.mxu0 0
  %3603 = vmatpush1.bf16.msra.mxu0 0
  %3604 = vmatprep.subr.bf16.mxu0 0
  %3605 = vmatpush1.bf16.msra.mxu0 0
  %3606 = vmatprep.subr.bf16.mxu0 0
  %3607 = vmatpush1.bf16.msra.mxu0 0
  %3608 = vmatprep.subr.bf16.mxu0 0
  %3609 = vmatpush1.bf16.msra.mxu0 0
  %3610 = vmatprep.subr.bf16.mxu0 0
  %3611 = vmatpush1.bf16.msra.mxu0 0
  %3612 = vmatprep.subr.bf16.mxu0 0
  %3613 = vmatpush1.bf16.msra.mxu0 0
  %3614 = vmatprep.subr.bf16.mxu0 0
  %3615 = vmatpush1.bf16.msra.mxu0 %v3600
  %3616 = vmatprep.subr.bf16.mxu0 0
  %3617 = vmatpush1.bf16.msra.mxu0 %v3597
  %3618 = vmatprep.subr.bf16.mxu0 0
  %3619 = vmatpush2.bf16.msra.mxu0 0
  %3620 = vmatprep.subr.bf16.mxu0 0
  %3621 = vmatpush2.bf16.msra.mxu0 0
  %3622 = vmatprep.subr.bf16.mxu0 0
  %3623 = vmatpush2.bf16.msra.mxu0 0
  %3624 = vmatprep.subr.bf16.mxu0 0
  %3625 = vmatpush2.bf16.msra.mxu0 0
  %3626 = vmatprep.subr.bf16.mxu0 0
  %3627 = vmatpush2.bf16.msra.mxu0 0
  %3628 = vmatprep.subr.bf16.mxu0 0
  %3629 = vmatpush2.bf16.msra.mxu0 0
  %3630 = vmatprep.subr.bf16.mxu0 0
  %3631 = vmatpush2.bf16.msra.mxu0 0
  %3632 = vmatprep.subr.bf16.mxu0 0
  %3633 = vmatpush2.bf16.msra.mxu0 0
  %3634 = vmatprep.mubr.bf16.mxu0 0
  %3635 = vmatmul.mubr.bf16.gmra.mxu0 %v591
  %v3636 = vpop.f32.mrf.mxu0
  %v3637 = vadd.f32 0.0, %v3636
  %v3638 = vpop.f32.mrf.mxu0
  %v3639 = vpop.f32.mrf.mxu0
  %v3640 = vadd.f32 0.0, %v3639
  %v3641 = vpop.f32.mrf.mxu0
  %3642 = vdwg.mxu0
  %v3643 = vpack.c.bf16 %v3640, %v3637
  %v3645 = vshrl.u32 %v3643, 16
  %v3647 = vshll.u32 %v3643, 16
  %v3649 = vrot.slane %v3647, 1
  %v3650 = vor.u32 %v3645, %v3649
  %3651 = vrot.lane.b32.xlu0 %v3650, 84
  %v3652 = vpop.permute.xlu0 %3651
  %v3654 = vrot.slane %v3643, 1
  %3655 = vrot.lane.b32.xlu0 %v3654, 40
  %v3656 = vpop.permute.xlu0 %3655
  %v3657 = vrot.slane %v3645, 1
  %v3658 = vrot.slane %v3647, 2
  %v3659 = vor.u32 %v3657, %v3658
  %3660 = vrot.lane.b32.xlu0 %v3659, 124
  %v3661 = vpop.permute.xlu0 %3660
  %v3662 = vrot.slane %v3643, 2
  %3663 = vrot.lane.b32.xlu0 %v3662, 80
  %v3664 = vpop.permute.xlu0 %3663
  %v3666 = vsel %vm660, %v3643, %v3652
  %v3669 = vsel %vm522, %v3652, %v3656
  %v3671 = vsel %vm666, %v3669, %v3661
  %v3674 = vsel %vm670, %v3661, %v3664
  %v3676 = vsel %vm950, %v3664, 0
  %3678 = vmatprep.subr.bf16.mxu0 %v859
  %3679 = vmatpush1.bf16.msra.mxu0 %v858
  %3680 = vmatprep.subr.bf16.mxu0 %v857
  %3681 = vmatpush1.bf16.msra.mxu0 %v856
  %3682 = vmatprep.subr.bf16.mxu0 %v855
  %3683 = vmatpush1.bf16.msra.mxu0 %v854
  %3684 = vmatprep.subr.bf16.mxu0 %v853
  %3685 = vmatpush1.bf16.msra.mxu0 %v852
  %3686 = vmatprep.subr.bf16.mxu0 %v851
  %3687 = vmatpush1.bf16.msra.mxu0 %v850
  %3688 = vmatprep.subr.bf16.mxu0 %v849
  %3689 = vmatpush1.bf16.msra.mxu0 %v848
  %3690 = vmatprep.subr.bf16.mxu0 %v847
  %3691 = vmatpush1.bf16.msra.mxu0 %v846
  %3692 = vmatprep.subr.bf16.mxu0 %v845
  %3693 = vmatpush1.bf16.msra.mxu0 %v844
  %3694 = vmatprep.subr.bf16.mxu0 %v875
  %3695 = vmatpush2.bf16.msra.mxu0 %v874
  %3696 = vmatprep.subr.bf16.mxu0 %v873
  %3697 = vmatpush2.bf16.msra.mxu0 %v872
  %3698 = vmatprep.subr.bf16.mxu0 %v871
  %3699 = vmatpush2.bf16.msra.mxu0 %v870
  %3700 = vmatprep.subr.bf16.mxu0 %v869
  %3701 = vmatpush2.bf16.msra.mxu0 %v868
  %3702 = vmatprep.subr.bf16.mxu0 %v867
  %3703 = vmatpush2.bf16.msra.mxu0 %v866
  %3704 = vmatprep.subr.bf16.mxu0 %v865
  %3705 = vmatpush2.bf16.msra.mxu0 %v864
  %3706 = vmatprep.subr.bf16.mxu0 %v863
  %3707 = vmatpush2.bf16.msra.mxu0 %v862
  %3708 = vmatprep.subr.bf16.mxu0 %v861
  %3709 = vmatpush2.bf16.msra.mxu0 %v860
  %3710 = vmatprep.mubr.bf16.mxu0 %v3671
  %3711 = vmatmul.mubr.bf16.gmra.mxu0 %v3666
  %v3712 = vpop.f32.mrf.mxu0
  %v3713 = vadd.f32 %v678, %v3712
  %v3714 = vpop.f32.mrf.mxu0
  %v3715 = vadd.f32 %v682, %v3714
  %v3716 = vpop.f32.mrf.mxu0
  %v3717 = vadd.f32 %v678, %v3716
  %v3718 = vpop.f32.mrf.mxu0
  %v3719 = vadd.f32 %v682, %v3718
  %3720 = vdwg.mxu0
  %3721 = vmatprep.subr.bf16.mxu0 %v891
  %3722 = vmatpush1.bf16.msra.mxu0 %v890
  %3723 = vmatprep.subr.bf16.mxu0 %v889
  %3724 = vmatpush1.bf16.msra.mxu0 %v888
  %3725 = vmatprep.subr.bf16.mxu0 %v887
  %3726 = vmatpush1.bf16.msra.mxu0 %v886
  %3727 = vmatprep.subr.bf16.mxu0 %v885
  %3728 = vmatpush1.bf16.msra.mxu0 %v884
  %3729 = vmatprep.subr.bf16.mxu0 %v883
  %3730 = vmatpush1.bf16.msra.mxu0 %v882
  %3731 = vmatprep.subr.bf16.mxu0 %v881
  %3732 = vmatpush1.bf16.msra.mxu0 %v880
  %3733 = vmatprep.subr.bf16.mxu0 %v879
  %3734 = vmatpush1.bf16.msra.mxu0 %v878
  %3735 = vmatprep.subr.bf16.mxu0 %v877
  %3736 = vmatpush1.bf16.msra.mxu0 %v876
  %3737 = vmatprep.subr.bf16.mxu0 0
  %3738 = vmatpush2.bf16.msra.mxu0 0
  %3739 = vmatprep.subr.bf16.mxu0 0
  %3740 = vmatpush2.bf16.msra.mxu0 0
  %3741 = vmatprep.subr.bf16.mxu0 0
  %3742 = vmatpush2.bf16.msra.mxu0 0
  %3743 = vmatprep.subr.bf16.mxu0 0
  %3744 = vmatpush2.bf16.msra.mxu0 0
  %3745 = vmatprep.subr.bf16.mxu0 0
  %3746 = vmatpush2.bf16.msra.mxu0 0
  %3747 = vmatprep.subr.bf16.mxu0 %v958
  %3748 = vmatpush2.bf16.msra.mxu0 %v955
  %3749 = vmatprep.subr.bf16.mxu0 %v895
  %3750 = vmatpush2.bf16.msra.mxu0 %v894
  %3751 = vmatprep.subr.bf16.mxu0 %v893
  %3752 = vmatpush2.bf16.msra.mxu0 %v892
  %3753 = vmatprep.mubr.bf16.mxu0 %v3676
  %3754 = vmatmul.mubr.bf16.gmra.mxu0 %v3674
  %v3755 = vpop.f32.mrf.mxu0
  %v3756 = vadd.f32 %v3713, %v3755
  %v3757 = vpop.f32.mrf.mxu0
  %v3758 = vadd.f32 %v3715, %v3757
  %v3759 = vpop.f32.mrf.mxu0
  %v3760 = vadd.f32 %v3717, %v3759
  %v3761 = vpop.f32.mrf.mxu0
  %v3762 = vadd.f32 %v3719, %v3761
  %3763 = vdwg.mxu0
  %v3764 = vsub.f32 0.0, %v3756
  %v3765 = vsub.f32 0.0, %v3758
  %v3766 = vsub.f32 0.0, %v3760
  %v3767 = vsub.f32 0.0, %v3762
  %v3768 = vmul.f32 %v3764, 1.442695
  %v3769 = vpow.pop %v3768
  %v3770 = vmul.f32 %v3765, 1.442695
  %v3771 = vpow.pop %v3770
  %v3772 = vmul.f32 %v3766, 1.442695
  %v3773 = vpow.pop %v3772
  %v3774 = vmul.f32 %v3767, 1.442695
  %v3775 = vpow.pop %v3774
  %v3776 = vadd.f32 %v3769, 1.0
  %v3777 = vadd.f32 %v3771, 1.0
  %v3778 = vadd.f32 %v3773, 1.0
  %v3779 = vadd.f32 %v3775, 1.0
  %v3780 = vrcp.pop %v3776
  %v3781 = vrcp.pop %v3777
  %v3782 = vrcp.pop %v3778
  %v3783 = vrcp.pop %v3779
  %v3784 = vpack.c.bf16 %v3782, %v3780
  %v3785 = vpack.c.bf16 %v3783, %v3781
  %v3787 = vsel %vm228, %v3785, 0
  %3789 = vmatprep.subr.bf16.mxu0 0
  %3790 = vmatpush1.bf16.msra.mxu0 %v1115
  %3791 = vmatprep.subr.bf16.mxu0 0
  %3792 = vmatpush1.bf16.msra.mxu0 %v1114
  %3793 = vmatprep.subr.bf16.mxu0 0
  %3794 = vmatpush1.bf16.msra.mxu0 %v1113
  %3795 = vmatprep.subr.bf16.mxu0 0
  %3796 = vmatpush1.bf16.msra.mxu0 %v1112
  %3797 = vmatprep.subr.bf16.mxu0 0
  %3798 = vmatpush1.bf16.msra.mxu0 %v1111
  %3799 = vmatprep.subr.bf16.mxu0 0
  %3800 = vmatpush1.bf16.msra.mxu0 %v1110
  %3801 = vmatprep.subr.bf16.mxu0 0
  %3802 = vmatpush1.bf16.msra.mxu0 %v1109
  %3803 = vmatprep.subr.bf16.mxu0 0
  %3804 = vmatpush1.bf16.msra.mxu0 %v1108
  %3805 = vmatprep.subr.bf16.mxu0 0
  %3806 = vmatpush2.bf16.msra.mxu0 0
  %3807 = vmatprep.subr.bf16.mxu0 0
  %3808 = vmatpush2.bf16.msra.mxu0 0
  %3809 = vmatprep.subr.bf16.mxu0 0
  %3810 = vmatpush2.bf16.msra.mxu0 0
  %3811 = vmatprep.subr.bf16.mxu0 0
  %3812 = vmatpush2.bf16.msra.mxu0 0
  %3813 = vmatprep.subr.bf16.mxu0 0
  %3814 = vmatpush2.bf16.msra.mxu0 0
  %3815 = vmatprep.subr.bf16.mxu0 0
  %3816 = vmatpush2.bf16.msra.mxu0 0
  %3817 = vmatprep.subr.bf16.mxu0 0
  %3818 = vmatpush2.bf16.msra.mxu0 %v1117
  %3819 = vmatprep.subr.bf16.mxu0 0
  %3820 = vmatpush2.bf16.msra.mxu0 %v1116
  %3821 = vmatprep.mubr.bf16.mxu0 %v3787
  %3822 = vmatmul.mubr.bf16.gmra.mxu0 %v3784
  %v3823 = vpop.f32.mrf.mxu0
  %v3824 = vadd.f32 0.0, %v3823
  %v3825 = vpop.f32.mrf.mxu0
  %v3826 = vpop.f32.mrf.mxu0
  %v3827 = vadd.f32 0.0, %v3826
  %v3828 = vpop.f32.mrf.mxu0
  %3829 = vdwg.mxu0
  %v3830 = vpack.c.bf16 %v3827, %v3824
  %v3832 = vsel %vm1177, %v3830, 0
  %3834 = vmatprep.subr.bf16.mxu0 0
  %3835 = vmatpush1.bf16.msra.mxu0 0
  %3836 = vmatprep.subr.bf16.mxu0 0
  %3837 = vmatpush1.bf16.msra.mxu0 0
  %3838 = vmatprep.subr.bf16.mxu0 0
  %3839 = vmatpush1.bf16.msra.mxu0 0
  %3840 = vmatprep.subr.bf16.mxu0 0
  %3841 = vmatpush1.bf16.msra.mxu0 0
  %3842 = vmatprep.subr.bf16.mxu0 0
  %3843 = vmatpush1.bf16.msra.mxu0 0
  %3844 = vmatprep.subr.bf16.mxu0 0
  %3845 = vmatpush1.bf16.msra.mxu0 0
  %3846 = vmatprep.subr.bf16.mxu0 0
  %3847 = vmatpush1.bf16.msra.mxu0 0
  %3848 = vmatprep.subr.bf16.mxu0 0
  %3849 = vmatpush1.bf16.msra.mxu0 %v3832
  %3850 = vmatprep.subr.bf16.mxu0 0
  %3851 = vmatpush2.bf16.msra.mxu0 0
  %3852 = vmatprep.subr.bf16.mxu0 0
  %3853 = vmatpush2.bf16.msra.mxu0 0
  %3854 = vmatprep.subr.bf16.mxu0 0
  %3855 = vmatpush2.bf16.msra.mxu0 0
  %3856 = vmatprep.subr.bf16.mxu0 0
  %3857 = vmatpush2.bf16.msra.mxu0 0
  %3858 = vmatprep.subr.bf16.mxu0 0
  %3859 = vmatpush2.bf16.msra.mxu0 0
  %3860 = vmatprep.subr.bf16.mxu0 0
  %3861 = vmatpush2.bf16.msra.mxu0 0
  %3862 = vmatprep.subr.bf16.mxu0 0
  %3863 = vmatpush2.bf16.msra.mxu0 0
  %3864 = vmatprep.subr.bf16.mxu0 0
  %3865 = vmatpush2.bf16.msra.mxu0 0
  %3866 = vmatprep.mubr.bf16.mxu0 0
  %3867 = vmatmul.mubr.bf16.gmra.mxu0 %v1175
  %v3868 = vpop.f32.mrf.mxu0
  %v3869 = vadd.f32 0.0, %v3868
  %v3870 = vpop.f32.mrf.mxu0
  %v3871 = vpop.f32.mrf.mxu0
  %v3872 = vpop.f32.mrf.mxu0
  %3873 = vdwg.mxu0
  %3874 = vst.msk [vmem:[#allocation2 + $0x5] sm:$0x1] %vm1221, %v3869
  %v3876 = vrot.slane %v3869, 1
  %3877 = vrot.lane.b32.xlu0 %v3876, 80
  %v3878 = vpop.permute.xlu0 %3877
  %3880 = vst.msk [vmem:[#allocation2 + $0x5] sm:$0x1] %vm1228, %v3878
  %3881 = vst.msk [vmem:[#allocation2 + $0xd] sm:$0x1] %vm1230, %v3878
  %v3882 = vrot.slane %v3869, 2
  %3883 = vrot.lane.b32.xlu0 %v3882, 32
  %v3884 = vpop.permute.xlu0 %3883
  %3886 = vst.msk [vmem:[#allocation2 + $0xd] sm:$0x1] %vm1236, %v3884
  %v3887 = vrot.slane %v3869, 3
  %3888 = vrot.lane.b32.xlu0 %v3887, 112
  %v3889 = vpop.permute.xlu0 %3888
  %3891 = vst.msk [vmem:[#allocation2 + $0xd] sm:$0x1] %vm1242, %v3889
  %3892 = vst.msk [vmem:[#allocation2 + $0x15] sm:$0x1] %vm1244, %v3889
  %v3893 = vrot.slane %v3869, 4
  %3894 = vrot.lane.b32.xlu0 %v3893, 64
  %v3895 = vpop.permute.xlu0 %3894
  %3897 = vst.msk [vmem:[#allocation2 + $0x15] sm:$0x1] %vm1250, %v3895
  %3898 = vst.msk [vmem:[#allocation2 + $0x1d] sm:$0x1] %vm1252, %v3895
  %s3899 = scalar_lea.vmem %s0, 96
  %v3900 = vld [vmem:[%s3899] sm:$0xf]
  %v3901 = vld [vmem:[%s3899 + $0x4] sm:$0xf]
  %v3902 = vld [vmem:[%s3899 + $0x8] sm:$0xf]
  %v3903 = vld [vmem:[%s3899 + $0xc] sm:$0xf]
  %v3908 = vunpack.c.l.b16 %v3900
  %v3909 = vunpack.c.l.b16 %v3901
  %v3910 = vunpack.c.l.b16 %v3902
  %v3911 = vunpack.c.l.b16 %v3903
  %v3912 = vpack.c.b16 %v3909, %v3908
  %v3913 = vpack.c.b16 %v3911, %v3910
  %v3915 = vshrl.u32 %v3912, 16
  %v3917 = vshll.u32 %v3912, 16
  %v3919 = vrot.slane %v3917, 1
  %v3920 = vor.u32 %v3915, %v3919
  %v3922 = vshll.u32 %v3913, 16
  %v3924 = vrot.slane %v3922, 1
  %v3925 = vsel %vm184, %v3920, %v3924
  %v3926 = vshrl.u32 %v3913, 16
  %v3928 = vor.u32 %v3926, %v3924
  %3929 = vrot.lane.b32.xlu0 %v3925, 32
  %v3930 = vpop.permute.xlu0 %3929
  %3931 = vrot.lane.b32.xlu0 %v3928, 32
  %v3932 = vpop.permute.xlu0 %3931
  %v3933 = vrot.slane %v3912, 1
  %v3934 = vrot.slane %v3913, 1
  %v3935 = vsel %vm204, %v3933, %v3934
  %3936 = vrot.lane.b32.xlu0 %v3935, 64
  %v3937 = vpop.permute.xlu0 %3936
  %3938 = vrot.lane.b32.xlu0 %v3934, 64
  %v3939 = vpop.permute.xlu0 %3938
  %v3940 = vrot.slane %v3915, 1
  %v3941 = vrot.slane %v3917, 2
  %v3942 = vor.u32 %v3940, %v3941
  %v3943 = vrot.slane %v3926, 1
  %v3944 = vrot.slane %v3922, 2
  %v3945 = vor.u32 %v3943, %v3944
  %v3946 = vsel %vm212, %v3942, %v3945
  %3947 = vrot.lane.b32.xlu0 %v3946, 96
  %v3948 = vpop.permute.xlu0 %3947
  %3949 = vrot.lane.b32.xlu0 %v3945, 96
  %v3950 = vpop.permute.xlu0 %3949
  %v3951 = vrot.slane %v3912, 2
  %v3952 = vrot.slane %v3913, 2
  %v3953 = vsel %vm224, %v3951, %v3952
  %v3955 = vsel %vm228, %v3912, %v3930
  %v3957 = vsel %vm228, %v3913, %v3932
  %v3959 = vsel %vm233, %v3955, %v3937
  %v3961 = vsel %vm233, %v3957, %v3939
  %v3963 = vsel %vm238, %v3959, %v3948
  %v3966 = vsel %vm238, %v3961, %v3950
  %v3969 = vsel %vm228, %v3953, 0
  %v3972 = vsel %vm228, %v3952, 0
  %3974 = vmatprep.subr.bf16.mxu0 %v331
  %3975 = vmatpush1.bf16.msra.mxu0 %v330
  %3976 = vmatprep.subr.bf16.mxu0 %v329
  %3977 = vmatpush1.bf16.msra.mxu0 %v328
  %3978 = vmatprep.subr.bf16.mxu0 %v327
  %3979 = vmatpush1.bf16.msra.mxu0 %v326
  %3980 = vmatprep.subr.bf16.mxu0 %v325
  %3981 = vmatpush1.bf16.msra.mxu0 %v324
  %3982 = vmatprep.subr.bf16.mxu0 %v323
  %3983 = vmatpush1.bf16.msra.mxu0 %v322
  %3984 = vmatprep.subr.bf16.mxu0 %v321
  %3985 = vmatpush1.bf16.msra.mxu0 %v320
  %3986 = vmatprep.subr.bf16.mxu0 %v319
  %3987 = vmatpush1.bf16.msra.mxu0 %v318
  %3988 = vmatprep.subr.bf16.mxu0 %v317
  %3989 = vmatpush1.bf16.msra.mxu0 %v316
  %3990 = vmatprep.subr.bf16.mxu0 0
  %3991 = vmatpush2.bf16.msra.mxu0 0
  %3992 = vmatprep.subr.bf16.mxu0 0
  %3993 = vmatpush2.bf16.msra.mxu0 0
  %3994 = vmatprep.subr.bf16.mxu0 0
  %3995 = vmatpush2.bf16.msra.mxu0 0
  %3996 = vmatprep.subr.bf16.mxu0 0
  %3997 = vmatpush2.bf16.msra.mxu0 0
  %3998 = vmatprep.subr.bf16.mxu0 0
  %3999 = vmatpush2.bf16.msra.mxu0 0
  %4000 = vmatprep.subr.bf16.mxu0 0
  %4001 = vmatpush2.bf16.msra.mxu0 0
  %4002 = vmatprep.subr.bf16.mxu0 %v335
  %4003 = vmatpush2.bf16.msra.mxu0 %v334
  %4004 = vmatprep.subr.bf16.mxu0 %v333
  %4005 = vmatpush2.bf16.msra.mxu0 %v332
  %4006 = vmatprep.mubr.bf16.mxu0 %v3969
  %4007 = vmatmul.mubr.bf16.gmra.mxu0 %v3963
  %v4008 = vpop.f32.mrf.mxu0
  %v4009 = vadd.f32 %v249, %v4008
  %v4010 = vpop.f32.mrf.mxu0
  %v4011 = vadd.f32 %v253, %v4010
  %v4012 = vpop.f32.mrf.mxu0
  %v4013 = vadd.f32 %v249, %v4012
  %v4014 = vpop.f32.mrf.mxu0
  %v4015 = vadd.f32 %v253, %v4014
  %4016 = vmatprep.mubr.bf16.mxu0 %v3972
  %4017 = vmatmul.mubr.bf16.gmra.mxu0 %v3966
  %v4018 = vpop.f32.mrf.mxu0
  %v4019 = vadd.f32 %v249, %v4018
  %v4020 = vpop.f32.mrf.mxu0
  %v4021 = vadd.f32 %v253, %v4020
  %v4022 = vpop.f32.mrf.mxu0
  %v4023 = vadd.f32 %v249, %v4022
  %v4024 = vpop.f32.mrf.mxu0
  %v4025 = vadd.f32 %v253, %v4024
  %4026 = vdwg.mxu0
  %v4027 = vsub.f32 0.0, %v4009
  %v4028 = vsub.f32 0.0, %v4011
  %v4029 = vsub.f32 0.0, %v4013
  %v4030 = vsub.f32 0.0, %v4015
  %v4031 = vsub.f32 0.0, %v4019
  %v4032 = vsub.f32 0.0, %v4021
  %v4033 = vsub.f32 0.0, %v4023
  %v4034 = vsub.f32 0.0, %v4025
  %v4035 = vmul.f32 %v4027, 1.442695
  %v4036 = vpow.pop %v4035
  %v4037 = vmul.f32 %v4028, 1.442695
  %v4038 = vpow.pop %v4037
  %v4039 = vmul.f32 %v4029, 1.442695
  %v4040 = vpow.pop %v4039
  %v4041 = vmul.f32 %v4030, 1.442695
  %v4042 = vpow.pop %v4041
  %v4043 = vmul.f32 %v4031, 1.442695
  %v4044 = vpow.pop %v4043
  %v4045 = vmul.f32 %v4032, 1.442695
  %v4046 = vpow.pop %v4045
  %v4047 = vmul.f32 %v4033, 1.442695
  %v4048 = vpow.pop %v4047
  %v4049 = vmul.f32 %v4034, 1.442695
  %v4050 = vpow.pop %v4049
  %v4051 = vadd.f32 %v4036, 1.0
  %v4052 = vadd.f32 %v4038, 1.0
  %v4053 = vadd.f32 %v4040, 1.0
  %v4054 = vadd.f32 %v4042, 1.0
  %v4055 = vadd.f32 %v4044, 1.0
  %v4056 = vadd.f32 %v4046, 1.0
  %v4057 = vadd.f32 %v4048, 1.0
  %v4058 = vadd.f32 %v4050, 1.0
  %v4059 = vrcp.pop %v4051
  %v4060 = vrcp.pop %v4052
  %v4061 = vrcp.pop %v4053
  %v4062 = vrcp.pop %v4054
  %v4063 = vrcp.pop %v4055
  %v4064 = vrcp.pop %v4056
  %v4065 = vrcp.pop %v4057
  %v4066 = vrcp.pop %v4058
  %v4067 = vpack.c.bf16 %v4061, %v4059
  %v4068 = vpack.c.bf16 %v4062, %v4060
  %v4069 = vpack.c.bf16 %v4065, %v4063
  %v4070 = vpack.c.bf16 %v4066, %v4064
  %v4072 = vsel %vm522, %v4068, 0
  %v4075 = vsel %vm522, %v4070, 0
  %4077 = vmatprep.subr.bf16.mxu0 0
  %4078 = vmatpush1.bf16.msra.mxu0 %v508
  %4079 = vmatprep.subr.bf16.mxu0 0
  %4080 = vmatpush1.bf16.msra.mxu0 %v507
  %4081 = vmatprep.subr.bf16.mxu0 0
  %4082 = vmatpush1.bf16.msra.mxu0 %v506
  %4083 = vmatprep.subr.bf16.mxu0 0
  %4084 = vmatpush1.bf16.msra.mxu0 %v505
  %4085 = vmatprep.subr.bf16.mxu0 0
  %4086 = vmatpush1.bf16.msra.mxu0 %v504
  %4087 = vmatprep.subr.bf16.mxu0 0
  %4088 = vmatpush1.bf16.msra.mxu0 %v503
  %4089 = vmatprep.subr.bf16.mxu0 0
  %4090 = vmatpush1.bf16.msra.mxu0 %v502
  %4091 = vmatprep.subr.bf16.mxu0 0
  %4092 = vmatpush1.bf16.msra.mxu0 %v501
  %4093 = vmatprep.subr.bf16.mxu0 0
  %4094 = vmatpush2.bf16.msra.mxu0 0
  %4095 = vmatprep.subr.bf16.mxu0 0
  %4096 = vmatpush2.bf16.msra.mxu0 0
  %4097 = vmatprep.subr.bf16.mxu0 0
  %4098 = vmatpush2.bf16.msra.mxu0 0
  %4099 = vmatprep.subr.bf16.mxu0 0
  %4100 = vmatpush2.bf16.msra.mxu0 0
  %4101 = vmatprep.subr.bf16.mxu0 0
  %4102 = vmatpush2.bf16.msra.mxu0 0
  %4103 = vmatprep.subr.bf16.mxu0 0
  %4104 = vmatpush2.bf16.msra.mxu0 %v531
  %4105 = vmatprep.subr.bf16.mxu0 0
  %4106 = vmatpush2.bf16.msra.mxu0 %v510
  %4107 = vmatprep.subr.bf16.mxu0 0
  %4108 = vmatpush2.bf16.msra.mxu0 %v509
  %4109 = vmatprep.mubr.bf16.mxu0 %v4072
  %4110 = vmatmul.mubr.bf16.gmra.mxu0 %v4067
  %v4111 = vpop.f32.mrf.mxu0
  %v4112 = vadd.f32 0.0, %v4111
  %v4113 = vpop.f32.mrf.mxu0
  %v4114 = vpop.f32.mrf.mxu0
  %v4115 = vadd.f32 0.0, %v4114
  %v4116 = vpop.f32.mrf.mxu0
  %4117 = vmatprep.mubr.bf16.mxu0 %v4075
  %4118 = vmatmul.mubr.bf16.gmra.mxu0 %v4069
  %v4119 = vpop.f32.mrf.mxu0
  %v4120 = vadd.f32 0.0, %v4119
  %v4121 = vpop.f32.mrf.mxu0
  %v4122 = vpop.f32.mrf.mxu0
  %v4123 = vadd.f32 0.0, %v4122
  %v4124 = vpop.f32.mrf.mxu0
  %4125 = vdwg.mxu0
  %v4126 = vpack.c.bf16 %v4115, %v4112
  %v4127 = vpack.c.bf16 %v4123, %v4120
  %v4129 = vsel %vm593, %v4127, 0
  %4131 = vmatprep.subr.bf16.mxu0 0
  %4132 = vmatpush1.bf16.msra.mxu0 0
  %4133 = vmatprep.subr.bf16.mxu0 0
  %4134 = vmatpush1.bf16.msra.mxu0 0
  %4135 = vmatprep.subr.bf16.mxu0 0
  %4136 = vmatpush1.bf16.msra.mxu0 0
  %4137 = vmatprep.subr.bf16.mxu0 0
  %4138 = vmatpush1.bf16.msra.mxu0 0
  %4139 = vmatprep.subr.bf16.mxu0 0
  %4140 = vmatpush1.bf16.msra.mxu0 0
  %4141 = vmatprep.subr.bf16.mxu0 0
  %4142 = vmatpush1.bf16.msra.mxu0 0
  %4143 = vmatprep.subr.bf16.mxu0 0
  %4144 = vmatpush1.bf16.msra.mxu0 %v4129
  %4145 = vmatprep.subr.bf16.mxu0 0
  %4146 = vmatpush1.bf16.msra.mxu0 %v4126
  %4147 = vmatprep.subr.bf16.mxu0 0
  %4148 = vmatpush2.bf16.msra.mxu0 0
  %4149 = vmatprep.subr.bf16.mxu0 0
  %4150 = vmatpush2.bf16.msra.mxu0 0
  %4151 = vmatprep.subr.bf16.mxu0 0
  %4152 = vmatpush2.bf16.msra.mxu0 0
  %4153 = vmatprep.subr.bf16.mxu0 0
  %4154 = vmatpush2.bf16.msra.mxu0 0
  %4155 = vmatprep.subr.bf16.mxu0 0
  %4156 = vmatpush2.bf16.msra.mxu0 0
  %4157 = vmatprep.subr.bf16.mxu0 0
  %4158 = vmatpush2.bf16.msra.mxu0 0
  %4159 = vmatprep.subr.bf16.mxu0 0
  %4160 = vmatpush2.bf16.msra.mxu0 0
  %4161 = vmatprep.subr.bf16.mxu0 0
  %4162 = vmatpush2.bf16.msra.mxu0 0
  %4163 = vmatprep.mubr.bf16.mxu0 0
  %4164 = vmatmul.mubr.bf16.gmra.mxu0 %v591
  %v4165 = vpop.f32.mrf.mxu0
  %v4166 = vadd.f32 0.0, %v4165
  %v4167 = vpop.f32.mrf.mxu0
  %v4168 = vpop.f32.mrf.mxu0
  %v4169 = vadd.f32 0.0, %v4168
  %v4170 = vpop.f32.mrf.mxu0
  %4171 = vdwg.mxu0
  %v4172 = vpack.c.bf16 %v4169, %v4166
  %v4174 = vshrl.u32 %v4172, 16
  %v4176 = vshll.u32 %v4172, 16
  %v4178 = vrot.slane %v4176, 1
  %v4179 = vor.u32 %v4174, %v4178
  %4180 = vrot.lane.b32.xlu0 %v4179, 84
  %v4181 = vpop.permute.xlu0 %4180
  %v4183 = vrot.slane %v4172, 1
  %4184 = vrot.lane.b32.xlu0 %v4183, 40
  %v4185 = vpop.permute.xlu0 %4184
  %v4186 = vrot.slane %v4174, 1
  %v4187 = vrot.slane %v4176, 2
  %v4188 = vor.u32 %v4186, %v4187
  %4189 = vrot.lane.b32.xlu0 %v4188, 124
  %v4190 = vpop.permute.xlu0 %4189
  %v4191 = vrot.slane %v4172, 2
  %4192 = vrot.lane.b32.xlu0 %v4191, 80
  %v4193 = vpop.permute.xlu0 %4192
  %v4195 = vsel %vm660, %v4172, %v4181
  %v4198 = vsel %vm522, %v4181, %v4185
  %v4200 = vsel %vm666, %v4198, %v4190
  %v4203 = vsel %vm670, %v4190, %v4193
  %v4205 = vsel %vm950, %v4193, 0
  %4207 = vmatprep.subr.bf16.mxu0 %v859
  %4208 = vmatpush1.bf16.msra.mxu0 %v858
  %4209 = vmatprep.subr.bf16.mxu0 %v857
  %4210 = vmatpush1.bf16.msra.mxu0 %v856
  %4211 = vmatprep.subr.bf16.mxu0 %v855
  %4212 = vmatpush1.bf16.msra.mxu0 %v854
  %4213 = vmatprep.subr.bf16.mxu0 %v853
  %4214 = vmatpush1.bf16.msra.mxu0 %v852
  %4215 = vmatprep.subr.bf16.mxu0 %v851
  %4216 = vmatpush1.bf16.msra.mxu0 %v850
  %4217 = vmatprep.subr.bf16.mxu0 %v849
  %4218 = vmatpush1.bf16.msra.mxu0 %v848
  %4219 = vmatprep.subr.bf16.mxu0 %v847
  %4220 = vmatpush1.bf16.msra.mxu0 %v846
  %4221 = vmatprep.subr.bf16.mxu0 %v845
  %4222 = vmatpush1.bf16.msra.mxu0 %v844
  %4223 = vmatprep.subr.bf16.mxu0 %v875
  %4224 = vmatpush2.bf16.msra.mxu0 %v874
  %4225 = vmatprep.subr.bf16.mxu0 %v873
  %4226 = vmatpush2.bf16.msra.mxu0 %v872
  %4227 = vmatprep.subr.bf16.mxu0 %v871
  %4228 = vmatpush2.bf16.msra.mxu0 %v870
  %4229 = vmatprep.subr.bf16.mxu0 %v869
  %4230 = vmatpush2.bf16.msra.mxu0 %v868
  %4231 = vmatprep.subr.bf16.mxu0 %v867
  %4232 = vmatpush2.bf16.msra.mxu0 %v866
  %4233 = vmatprep.subr.bf16.mxu0 %v865
  %4234 = vmatpush2.bf16.msra.mxu0 %v864
  %4235 = vmatprep.subr.bf16.mxu0 %v863
  %4236 = vmatpush2.bf16.msra.mxu0 %v862
  %4237 = vmatprep.subr.bf16.mxu0 %v861
  %4238 = vmatpush2.bf16.msra.mxu0 %v860
  %4239 = vmatprep.mubr.bf16.mxu0 %v4200
  %4240 = vmatmul.mubr.bf16.gmra.mxu0 %v4195
  %v4241 = vpop.f32.mrf.mxu0
  %v4242 = vadd.f32 %v678, %v4241
  %v4243 = vpop.f32.mrf.mxu0
  %v4244 = vadd.f32 %v682, %v4243
  %v4245 = vpop.f32.mrf.mxu0
  %v4246 = vadd.f32 %v678, %v4245
  %v4247 = vpop.f32.mrf.mxu0
  %v4248 = vadd.f32 %v682, %v4247
  %4249 = vdwg.mxu0
  %4250 = vmatprep.subr.bf16.mxu0 %v891
  %4251 = vmatpush1.bf16.msra.mxu0 %v890
  %4252 = vmatprep.subr.bf16.mxu0 %v889
  %4253 = vmatpush1.bf16.msra.mxu0 %v888
  %4254 = vmatprep.subr.bf16.mxu0 %v887
  %4255 = vmatpush1.bf16.msra.mxu0 %v886
  %4256 = vmatprep.subr.bf16.mxu0 %v885
  %4257 = vmatpush1.bf16.msra.mxu0 %v884
  %4258 = vmatprep.subr.bf16.mxu0 %v883
  %4259 = vmatpush1.bf16.msra.mxu0 %v882
  %4260 = vmatprep.subr.bf16.mxu0 %v881
  %4261 = vmatpush1.bf16.msra.mxu0 %v880
  %4262 = vmatprep.subr.bf16.mxu0 %v879
  %4263 = vmatpush1.bf16.msra.mxu0 %v878
  %4264 = vmatprep.subr.bf16.mxu0 %v877
  %4265 = vmatpush1.bf16.msra.mxu0 %v876
  %4266 = vmatprep.subr.bf16.mxu0 0
  %4267 = vmatpush2.bf16.msra.mxu0 0
  %4268 = vmatprep.subr.bf16.mxu0 0
  %4269 = vmatpush2.bf16.msra.mxu0 0
  %4270 = vmatprep.subr.bf16.mxu0 0
  %4271 = vmatpush2.bf16.msra.mxu0 0
  %4272 = vmatprep.subr.bf16.mxu0 0
  %4273 = vmatpush2.bf16.msra.mxu0 0
  %4274 = vmatprep.subr.bf16.mxu0 0
  %4275 = vmatpush2.bf16.msra.mxu0 0
  %4276 = vmatprep.subr.bf16.mxu0 %v958
  %4277 = vmatpush2.bf16.msra.mxu0 %v955
  %4278 = vmatprep.subr.bf16.mxu0 %v895
  %4279 = vmatpush2.bf16.msra.mxu0 %v894
  %4280 = vmatprep.subr.bf16.mxu0 %v893
  %4281 = vmatpush2.bf16.msra.mxu0 %v892
  %4282 = vmatprep.mubr.bf16.mxu0 %v4205
  %4283 = vmatmul.mubr.bf16.gmra.mxu0 %v4203
  %v4284 = vpop.f32.mrf.mxu0
  %v4285 = vadd.f32 %v4242, %v4284
  %v4286 = vpop.f32.mrf.mxu0
  %v4287 = vadd.f32 %v4244, %v4286
  %v4288 = vpop.f32.mrf.mxu0
  %v4289 = vadd.f32 %v4246, %v4288
  %v4290 = vpop.f32.mrf.mxu0
  %v4291 = vadd.f32 %v4248, %v4290
  %4292 = vdwg.mxu0
  %v4293 = vsub.f32 0.0, %v4285
  %v4294 = vsub.f32 0.0, %v4287
  %v4295 = vsub.f32 0.0, %v4289
  %v4296 = vsub.f32 0.0, %v4291
  %v4297 = vmul.f32 %v4293, 1.442695
  %v4298 = vpow.pop %v4297
  %v4299 = vmul.f32 %v4294, 1.442695
  %v4300 = vpow.pop %v4299
  %v4301 = vmul.f32 %v4295, 1.442695
  %v4302 = vpow.pop %v4301
  %v4303 = vmul.f32 %v4296, 1.442695
  %v4304 = vpow.pop %v4303
  %v4305 = vadd.f32 %v4298, 1.0
  %v4306 = vadd.f32 %v4300, 1.0
  %v4307 = vadd.f32 %v4302, 1.0
  %v4308 = vadd.f32 %v4304, 1.0
  %v4309 = vrcp.pop %v4305
  %v4310 = vrcp.pop %v4306
  %v4311 = vrcp.pop %v4307
  %v4312 = vrcp.pop %v4308
  %v4313 = vpack.c.bf16 %v4311, %v4309
  %v4314 = vpack.c.bf16 %v4312, %v4310
  %v4316 = vsel %vm228, %v4314, 0
  %4318 = vmatprep.subr.bf16.mxu0 0
  %4319 = vmatpush1.bf16.msra.mxu0 %v1115
  %4320 = vmatprep.subr.bf16.mxu0 0
  %4321 = vmatpush1.bf16.msra.mxu0 %v1114
  %4322 = vmatprep.subr.bf16.mxu0 0
  %4323 = vmatpush1.bf16.msra.mxu0 %v1113
  %4324 = vmatprep.subr.bf16.mxu0 0
  %4325 = vmatpush1.bf16.msra.mxu0 %v1112
  %4326 = vmatprep.subr.bf16.mxu0 0
  %4327 = vmatpush1.bf16.msra.mxu0 %v1111
  %4328 = vmatprep.subr.bf16.mxu0 0
  %4329 = vmatpush1.bf16.msra.mxu0 %v1110
  %4330 = vmatprep.subr.bf16.mxu0 0
  %4331 = vmatpush1.bf16.msra.mxu0 %v1109
  %4332 = vmatprep.subr.bf16.mxu0 0
  %4333 = vmatpush1.bf16.msra.mxu0 %v1108
  %4334 = vmatprep.subr.bf16.mxu0 0
  %4335 = vmatpush2.bf16.msra.mxu0 0
  %4336 = vmatprep.subr.bf16.mxu0 0
  %4337 = vmatpush2.bf16.msra.mxu0 0
  %4338 = vmatprep.subr.bf16.mxu0 0
  %4339 = vmatpush2.bf16.msra.mxu0 0
  %4340 = vmatprep.subr.bf16.mxu0 0
  %4341 = vmatpush2.bf16.msra.mxu0 0
  %4342 = vmatprep.subr.bf16.mxu0 0
  %4343 = vmatpush2.bf16.msra.mxu0 0
  %4344 = vmatprep.subr.bf16.mxu0 0
  %4345 = vmatpush2.bf16.msra.mxu0 0
  %4346 = vmatprep.subr.bf16.mxu0 0
  %4347 = vmatpush2.bf16.msra.mxu0 %v1117
  %4348 = vmatprep.subr.bf16.mxu0 0
  %4349 = vmatpush2.bf16.msra.mxu0 %v1116
  %4350 = vmatprep.mubr.bf16.mxu0 %v4316
  %4351 = vmatmul.mubr.bf16.gmra.mxu0 %v4313
  %v4352 = vpop.f32.mrf.mxu0
  %v4353 = vadd.f32 0.0, %v4352
  %v4354 = vpop.f32.mrf.mxu0
  %v4355 = vpop.f32.mrf.mxu0
  %v4356 = vadd.f32 0.0, %v4355
  %v4357 = vpop.f32.mrf.mxu0
  %4358 = vdwg.mxu0
  %v4359 = vpack.c.bf16 %v4356, %v4353
  %v4361 = vsel %vm1177, %v4359, 0
  %4363 = vmatprep.subr.bf16.mxu0 0
  %4364 = vmatpush1.bf16.msra.mxu0 0
  %4365 = vmatprep.subr.bf16.mxu0 0
  %4366 = vmatpush1.bf16.msra.mxu0 0
  %4367 = vmatprep.subr.bf16.mxu0 0
  %4368 = vmatpush1.bf16.msra.mxu0 0
  %4369 = vmatprep.subr.bf16.mxu0 0
  %4370 = vmatpush1.bf16.msra.mxu0 0
  %4371 = vmatprep.subr.bf16.mxu0 0
  %4372 = vmatpush1.bf16.msra.mxu0 0
  %4373 = vmatprep.subr.bf16.mxu0 0
  %4374 = vmatpush1.bf16.msra.mxu0 0
  %4375 = vmatprep.subr.bf16.mxu0 0
  %4376 = vmatpush1.bf16.msra.mxu0 0
  %4377 = vmatprep.subr.bf16.mxu0 0
  %4378 = vmatpush1.bf16.msra.mxu0 %v4361
  %4379 = vmatprep.subr.bf16.mxu0 0
  %4380 = vmatpush2.bf16.msra.mxu0 0
  %4381 = vmatprep.subr.bf16.mxu0 0
  %4382 = vmatpush2.bf16.msra.mxu0 0
  %4383 = vmatprep.subr.bf16.mxu0 0
  %4384 = vmatpush2.bf16.msra.mxu0 0
  %4385 = vmatprep.subr.bf16.mxu0 0
  %4386 = vmatpush2.bf16.msra.mxu0 0
  %4387 = vmatprep.subr.bf16.mxu0 0
  %4388 = vmatpush2.bf16.msra.mxu0 0
  %4389 = vmatprep.subr.bf16.mxu0 0
  %4390 = vmatpush2.bf16.msra.mxu0 0
  %4391 = vmatprep.subr.bf16.mxu0 0
  %4392 = vmatpush2.bf16.msra.mxu0 0
  %4393 = vmatprep.subr.bf16.mxu0 0
  %4394 = vmatpush2.bf16.msra.mxu0 0
  %4395 = vmatprep.mubr.bf16.mxu0 0
  %4396 = vmatmul.mubr.bf16.gmra.mxu0 %v1175
  %v4397 = vpop.f32.mrf.mxu0
  %v4398 = vadd.f32 0.0, %v4397
  %v4399 = vpop.f32.mrf.mxu0
  %v4400 = vpop.f32.mrf.mxu0
  %v4401 = vpop.f32.mrf.mxu0
  %4402 = vdwg.mxu0
  %4403 = vst.msk [vmem:[#allocation2 + $0x6] sm:$0x1] %vm1221, %v4398
  %v4405 = vrot.slane %v4398, 1
  %4406 = vrot.lane.b32.xlu0 %v4405, 80
  %v4407 = vpop.permute.xlu0 %4406
  %4409 = vst.msk [vmem:[#allocation2 + $0x6] sm:$0x1] %vm1228, %v4407
  %4410 = vst.msk [vmem:[#allocation2 + $0xe] sm:$0x1] %vm1230, %v4407
  %v4411 = vrot.slane %v4398, 2
  %4412 = vrot.lane.b32.xlu0 %v4411, 32
  %v4413 = vpop.permute.xlu0 %4412
  %4415 = vst.msk [vmem:[#allocation2 + $0xe] sm:$0x1] %vm1236, %v4413
  %v4416 = vrot.slane %v4398, 3
  %4417 = vrot.lane.b32.xlu0 %v4416, 112
  %v4418 = vpop.permute.xlu0 %4417
  %4420 = vst.msk [vmem:[#allocation2 + $0xe] sm:$0x1] %vm1242, %v4418
  %4421 = vst.msk [vmem:[#allocation2 + $0x16] sm:$0x1] %vm1244, %v4418
  %v4422 = vrot.slane %v4398, 4
  %4423 = vrot.lane.b32.xlu0 %v4422, 64
  %v4424 = vpop.permute.xlu0 %4423
  %4426 = vst.msk [vmem:[#allocation2 + $0x16] sm:$0x1] %vm1250, %v4424
  %4427 = vst.msk [vmem:[#allocation2 + $0x1e] sm:$0x1] %vm1252, %v4424
  %s4428 = scalar_lea.vmem %s0, 112
  %v4429 = vld [vmem:[%s4428] sm:$0xf]
  %v4430 = vld [vmem:[%s4428 + $0x4] sm:$0xf]
  %v4431 = vld [vmem:[%s4428 + $0x8] sm:$0xf]
  %v4432 = vld [vmem:[%s4428 + $0xc] sm:$0xf]
  %v4437 = vunpack.c.l.b16 %v4429
  %v4438 = vunpack.c.l.b16 %v4430
  %v4439 = vunpack.c.l.b16 %v4431
  %v4440 = vunpack.c.l.b16 %v4432
  %v4441 = vpack.c.b16 %v4438, %v4437
  %v4442 = vpack.c.b16 %v4440, %v4439
  %v4444 = vshrl.u32 %v4441, 16
  %v4446 = vshll.u32 %v4441, 16
  %v4448 = vrot.slane %v4446, 1
  %v4449 = vor.u32 %v4444, %v4448
  %v4451 = vshll.u32 %v4442, 16
  %v4453 = vrot.slane %v4451, 1
  %v4454 = vsel %vm184, %v4449, %v4453
  %v4455 = vshrl.u32 %v4442, 16
  %v4457 = vor.u32 %v4455, %v4453
  %4458 = vrot.lane.b32.xlu0 %v4454, 32
  %v4459 = vpop.permute.xlu0 %4458
  %4460 = vrot.lane.b32.xlu0 %v4457, 32
  %v4461 = vpop.permute.xlu0 %4460
  %v4462 = vrot.slane %v4441, 1
  %v4463 = vrot.slane %v4442, 1
  %v4464 = vsel %vm204, %v4462, %v4463
  %4465 = vrot.lane.b32.xlu0 %v4464, 64
  %v4466 = vpop.permute.xlu0 %4465
  %4467 = vrot.lane.b32.xlu0 %v4463, 64
  %v4468 = vpop.permute.xlu0 %4467
  %v4469 = vrot.slane %v4444, 1
  %v4470 = vrot.slane %v4446, 2
  %v4471 = vor.u32 %v4469, %v4470
  %v4472 = vrot.slane %v4455, 1
  %v4473 = vrot.slane %v4451, 2
  %v4474 = vor.u32 %v4472, %v4473
  %v4475 = vsel %vm212, %v4471, %v4474
  %4476 = vrot.lane.b32.xlu0 %v4475, 96
  %v4477 = vpop.permute.xlu0 %4476
  %4478 = vrot.lane.b32.xlu0 %v4474, 96
  %v4479 = vpop.permute.xlu0 %4478
  %v4480 = vrot.slane %v4441, 2
  %v4481 = vrot.slane %v4442, 2
  %v4482 = vsel %vm224, %v4480, %v4481
  %v4484 = vsel %vm228, %v4441, %v4459
  %v4486 = vsel %vm228, %v4442, %v4461
  %v4488 = vsel %vm233, %v4484, %v4466
  %v4490 = vsel %vm233, %v4486, %v4468
  %v4492 = vsel %vm238, %v4488, %v4477
  %v4495 = vsel %vm238, %v4490, %v4479
  %v4498 = vsel %vm228, %v4482, 0
  %v4501 = vsel %vm228, %v4481, 0
  %4503 = vmatprep.subr.bf16.mxu0 %v331
  %4504 = vmatpush1.bf16.msra.mxu0 %v330
  %4505 = vmatprep.subr.bf16.mxu0 %v329
  %4506 = vmatpush1.bf16.msra.mxu0 %v328
  %4507 = vmatprep.subr.bf16.mxu0 %v327
  %4508 = vmatpush1.bf16.msra.mxu0 %v326
  %4509 = vmatprep.subr.bf16.mxu0 %v325
  %4510 = vmatpush1.bf16.msra.mxu0 %v324
  %4511 = vmatprep.subr.bf16.mxu0 %v323
  %4512 = vmatpush1.bf16.msra.mxu0 %v322
  %4513 = vmatprep.subr.bf16.mxu0 %v321
  %4514 = vmatpush1.bf16.msra.mxu0 %v320
  %4515 = vmatprep.subr.bf16.mxu0 %v319
  %4516 = vmatpush1.bf16.msra.mxu0 %v318
  %4517 = vmatprep.subr.bf16.mxu0 %v317
  %4518 = vmatpush1.bf16.msra.mxu0 %v316
  %4519 = vmatprep.subr.bf16.mxu0 0
  %4520 = vmatpush2.bf16.msra.mxu0 0
  %4521 = vmatprep.subr.bf16.mxu0 0
  %4522 = vmatpush2.bf16.msra.mxu0 0
  %4523 = vmatprep.subr.bf16.mxu0 0
  %4524 = vmatpush2.bf16.msra.mxu0 0
  %4525 = vmatprep.subr.bf16.mxu0 0
  %4526 = vmatpush2.bf16.msra.mxu0 0
  %4527 = vmatprep.subr.bf16.mxu0 0
  %4528 = vmatpush2.bf16.msra.mxu0 0
  %4529 = vmatprep.subr.bf16.mxu0 0
  %4530 = vmatpush2.bf16.msra.mxu0 0
  %4531 = vmatprep.subr.bf16.mxu0 %v335
  %4532 = vmatpush2.bf16.msra.mxu0 %v334
  %4533 = vmatprep.subr.bf16.mxu0 %v333
  %4534 = vmatpush2.bf16.msra.mxu0 %v332
  %4535 = vmatprep.mubr.bf16.mxu0 %v4498
  %4536 = vmatmul.mubr.bf16.gmra.mxu0 %v4492
  %v4537 = vpop.f32.mrf.mxu0
  %v4538 = vadd.f32 %v249, %v4537
  %v4539 = vpop.f32.mrf.mxu0
  %v4540 = vadd.f32 %v253, %v4539
  %v4541 = vpop.f32.mrf.mxu0
  %v4542 = vadd.f32 %v249, %v4541
  %v4543 = vpop.f32.mrf.mxu0
  %v4544 = vadd.f32 %v253, %v4543
  %4545 = vmatprep.mubr.bf16.mxu0 %v4501
  %4546 = vmatmul.mubr.bf16.gmra.mxu0 %v4495
  %v4547 = vpop.f32.mrf.mxu0
  %v4548 = vadd.f32 %v249, %v4547
  %v4549 = vpop.f32.mrf.mxu0
  %v4550 = vadd.f32 %v253, %v4549
  %v4551 = vpop.f32.mrf.mxu0
  %v4552 = vadd.f32 %v249, %v4551
  %v4553 = vpop.f32.mrf.mxu0
  %v4554 = vadd.f32 %v253, %v4553
  %4555 = vdwg.mxu0
  %v4556 = vsub.f32 0.0, %v4538
  %v4557 = vsub.f32 0.0, %v4540
  %v4558 = vsub.f32 0.0, %v4542
  %v4559 = vsub.f32 0.0, %v4544
  %v4560 = vsub.f32 0.0, %v4548
  %v4561 = vsub.f32 0.0, %v4550
  %v4562 = vsub.f32 0.0, %v4552
  %v4563 = vsub.f32 0.0, %v4554
  %v4564 = vmul.f32 %v4556, 1.442695
  %v4565 = vpow.pop %v4564
  %v4566 = vmul.f32 %v4557, 1.442695
  %v4567 = vpow.pop %v4566
  %v4568 = vmul.f32 %v4558, 1.442695
  %v4569 = vpow.pop %v4568
  %v4570 = vmul.f32 %v4559, 1.442695
  %v4571 = vpow.pop %v4570
  %v4572 = vmul.f32 %v4560, 1.442695
  %v4573 = vpow.pop %v4572
  %v4574 = vmul.f32 %v4561, 1.442695
  %v4575 = vpow.pop %v4574
  %v4576 = vmul.f32 %v4562, 1.442695
  %v4577 = vpow.pop %v4576
  %v4578 = vmul.f32 %v4563, 1.442695
  %v4579 = vpow.pop %v4578
  %v4580 = vadd.f32 %v4565, 1.0
  %v4581 = vadd.f32 %v4567, 1.0
  %v4582 = vadd.f32 %v4569, 1.0
  %v4583 = vadd.f32 %v4571, 1.0
  %v4584 = vadd.f32 %v4573, 1.0
  %v4585 = vadd.f32 %v4575, 1.0
  %v4586 = vadd.f32 %v4577, 1.0
  %v4587 = vadd.f32 %v4579, 1.0
  %v4588 = vrcp.pop %v4580
  %v4589 = vrcp.pop %v4581
  %v4590 = vrcp.pop %v4582
  %v4591 = vrcp.pop %v4583
  %v4592 = vrcp.pop %v4584
  %v4593 = vrcp.pop %v4585
  %v4594 = vrcp.pop %v4586
  %v4595 = vrcp.pop %v4587
  %v4596 = vpack.c.bf16 %v4590, %v4588
  %v4597 = vpack.c.bf16 %v4591, %v4589
  %v4598 = vpack.c.bf16 %v4594, %v4592
  %v4599 = vpack.c.bf16 %v4595, %v4593
  %v4601 = vsel %vm522, %v4597, 0
  %v4604 = vsel %vm522, %v4599, 0
  %4606 = vmatprep.subr.bf16.mxu0 0
  %4607 = vmatpush1.bf16.msra.mxu0 %v508
  %4608 = vmatprep.subr.bf16.mxu0 0
  %4609 = vmatpush1.bf16.msra.mxu0 %v507
  %4610 = vmatprep.subr.bf16.mxu0 0
  %4611 = vmatpush1.bf16.msra.mxu0 %v506
  %4612 = vmatprep.subr.bf16.mxu0 0
  %4613 = vmatpush1.bf16.msra.mxu0 %v505
  %4614 = vmatprep.subr.bf16.mxu0 0
  %4615 = vmatpush1.bf16.msra.mxu0 %v504
  %4616 = vmatprep.subr.bf16.mxu0 0
  %4617 = vmatpush1.bf16.msra.mxu0 %v503
  %4618 = vmatprep.subr.bf16.mxu0 0
  %4619 = vmatpush1.bf16.msra.mxu0 %v502
  %4620 = vmatprep.subr.bf16.mxu0 0
  %4621 = vmatpush1.bf16.msra.mxu0 %v501
  %4622 = vmatprep.subr.bf16.mxu0 0
  %4623 = vmatpush2.bf16.msra.mxu0 0
  %4624 = vmatprep.subr.bf16.mxu0 0
  %4625 = vmatpush2.bf16.msra.mxu0 0
  %4626 = vmatprep.subr.bf16.mxu0 0
  %4627 = vmatpush2.bf16.msra.mxu0 0
  %4628 = vmatprep.subr.bf16.mxu0 0
  %4629 = vmatpush2.bf16.msra.mxu0 0
  %4630 = vmatprep.subr.bf16.mxu0 0
  %4631 = vmatpush2.bf16.msra.mxu0 0
  %4632 = vmatprep.subr.bf16.mxu0 0
  %4633 = vmatpush2.bf16.msra.mxu0 %v531
  %4634 = vmatprep.subr.bf16.mxu0 0
  %4635 = vmatpush2.bf16.msra.mxu0 %v510
  %4636 = vmatprep.subr.bf16.mxu0 0
  %4637 = vmatpush2.bf16.msra.mxu0 %v509
  %4638 = vmatprep.mubr.bf16.mxu0 %v4601
  %4639 = vmatmul.mubr.bf16.gmra.mxu0 %v4596
  %v4640 = vpop.f32.mrf.mxu0
  %v4641 = vadd.f32 0.0, %v4640
  %v4642 = vpop.f32.mrf.mxu0
  %v4643 = vpop.f32.mrf.mxu0
  %v4644 = vadd.f32 0.0, %v4643
  %v4645 = vpop.f32.mrf.mxu0
  %4646 = vmatprep.mubr.bf16.mxu0 %v4604
  %4647 = vmatmul.mubr.bf16.gmra.mxu0 %v4598
  %v4648 = vpop.f32.mrf.mxu0
  %v4649 = vadd.f32 0.0, %v4648
  %v4650 = vpop.f32.mrf.mxu0
  %v4651 = vpop.f32.mrf.mxu0
  %v4652 = vadd.f32 0.0, %v4651
  %v4653 = vpop.f32.mrf.mxu0
  %4654 = vdwg.mxu0
  %v4655 = vpack.c.bf16 %v4644, %v4641
  %v4656 = vpack.c.bf16 %v4652, %v4649
  %v4658 = vsel %vm593, %v4656, 0
  %4660 = vmatprep.subr.bf16.mxu0 0
  %4661 = vmatpush1.bf16.msra.mxu0 0
  %4662 = vmatprep.subr.bf16.mxu0 0
  %4663 = vmatpush1.bf16.msra.mxu0 0
  %4664 = vmatprep.subr.bf16.mxu0 0
  %4665 = vmatpush1.bf16.msra.mxu0 0
  %4666 = vmatprep.subr.bf16.mxu0 0
  %4667 = vmatpush1.bf16.msra.mxu0 0
  %4668 = vmatprep.subr.bf16.mxu0 0
  %4669 = vmatpush1.bf16.msra.mxu0 0
  %4670 = vmatprep.subr.bf16.mxu0 0
  %4671 = vmatpush1.bf16.msra.mxu0 0
  %4672 = vmatprep.subr.bf16.mxu0 0
  %4673 = vmatpush1.bf16.msra.mxu0 %v4658
  %4674 = vmatprep.subr.bf16.mxu0 0
  %4675 = vmatpush1.bf16.msra.mxu0 %v4655
  %4676 = vmatprep.subr.bf16.mxu0 0
  %4677 = vmatpush2.bf16.msra.mxu0 0
  %4678 = vmatprep.subr.bf16.mxu0 0
  %4679 = vmatpush2.bf16.msra.mxu0 0
  %4680 = vmatprep.subr.bf16.mxu0 0
  %4681 = vmatpush2.bf16.msra.mxu0 0
  %4682 = vmatprep.subr.bf16.mxu0 0
  %4683 = vmatpush2.bf16.msra.mxu0 0
  %4684 = vmatprep.subr.bf16.mxu0 0
  %4685 = vmatpush2.bf16.msra.mxu0 0
  %4686 = vmatprep.subr.bf16.mxu0 0
  %4687 = vmatpush2.bf16.msra.mxu0 0
  %4688 = vmatprep.subr.bf16.mxu0 0
  %4689 = vmatpush2.bf16.msra.mxu0 0
  %4690 = vmatprep.subr.bf16.mxu0 0
  %4691 = vmatpush2.bf16.msra.mxu0 0
  %4692 = vmatprep.mubr.bf16.mxu0 0
  %4693 = vmatmul.mubr.bf16.gmra.mxu0 %v591
  %v4694 = vpop.f32.mrf.mxu0
  %v4695 = vadd.f32 0.0, %v4694
  %v4696 = vpop.f32.mrf.mxu0
  %v4697 = vpop.f32.mrf.mxu0
  %v4698 = vadd.f32 0.0, %v4697
  %v4699 = vpop.f32.mrf.mxu0
  %4700 = vdwg.mxu0
  %v4701 = vpack.c.bf16 %v4698, %v4695
  %v4703 = vshrl.u32 %v4701, 16
  %v4705 = vshll.u32 %v4701, 16
  %v4707 = vrot.slane %v4705, 1
  %v4708 = vor.u32 %v4703, %v4707
  %4709 = vrot.lane.b32.xlu0 %v4708, 84
  %v4710 = vpop.permute.xlu0 %4709
  %v4712 = vrot.slane %v4701, 1
  %4713 = vrot.lane.b32.xlu0 %v4712, 40
  %v4714 = vpop.permute.xlu0 %4713
  %v4715 = vrot.slane %v4703, 1
  %v4716 = vrot.slane %v4705, 2
  %v4717 = vor.u32 %v4715, %v4716
  %4718 = vrot.lane.b32.xlu0 %v4717, 124
  %v4719 = vpop.permute.xlu0 %4718
  %v4720 = vrot.slane %v4701, 2
  %4721 = vrot.lane.b32.xlu0 %v4720, 80
  %v4722 = vpop.permute.xlu0 %4721
  %v4724 = vsel %vm660, %v4701, %v4710
  %v4727 = vsel %vm522, %v4710, %v4714
  %v4729 = vsel %vm666, %v4727, %v4719
  %v4732 = vsel %vm670, %v4719, %v4722
  %v4734 = vsel %vm950, %v4722, 0
  %4736 = vmatprep.subr.bf16.mxu0 %v859
  %4737 = vmatpush1.bf16.msra.mxu0 %v858
  %4738 = vmatprep.subr.bf16.mxu0 %v857
  %4739 = vmatpush1.bf16.msra.mxu0 %v856
  %4740 = vmatprep.subr.bf16.mxu0 %v855
  %4741 = vmatpush1.bf16.msra.mxu0 %v854
  %4742 = vmatprep.subr.bf16.mxu0 %v853
  %4743 = vmatpush1.bf16.msra.mxu0 %v852
  %4744 = vmatprep.subr.bf16.mxu0 %v851
  %4745 = vmatpush1.bf16.msra.mxu0 %v850
  %4746 = vmatprep.subr.bf16.mxu0 %v849
  %4747 = vmatpush1.bf16.msra.mxu0 %v848
  %4748 = vmatprep.subr.bf16.mxu0 %v847
  %4749 = vmatpush1.bf16.msra.mxu0 %v846
  %4750 = vmatprep.subr.bf16.mxu0 %v845
  %4751 = vmatpush1.bf16.msra.mxu0 %v844
  %4752 = vmatprep.subr.bf16.mxu0 %v875
  %4753 = vmatpush2.bf16.msra.mxu0 %v874
  %4754 = vmatprep.subr.bf16.mxu0 %v873
  %4755 = vmatpush2.bf16.msra.mxu0 %v872
  %4756 = vmatprep.subr.bf16.mxu0 %v871
  %4757 = vmatpush2.bf16.msra.mxu0 %v870
  %4758 = vmatprep.subr.bf16.mxu0 %v869
  %4759 = vmatpush2.bf16.msra.mxu0 %v868
  %4760 = vmatprep.subr.bf16.mxu0 %v867
  %4761 = vmatpush2.bf16.msra.mxu0 %v866
  %4762 = vmatprep.subr.bf16.mxu0 %v865
  %4763 = vmatpush2.bf16.msra.mxu0 %v864
  %4764 = vmatprep.subr.bf16.mxu0 %v863
  %4765 = vmatpush2.bf16.msra.mxu0 %v862
  %4766 = vmatprep.subr.bf16.mxu0 %v861
  %4767 = vmatpush2.bf16.msra.mxu0 %v860
  %4768 = vmatprep.mubr.bf16.mxu0 %v4729
  %4769 = vmatmul.mubr.bf16.gmra.mxu0 %v4724
  %v4770 = vpop.f32.mrf.mxu0
  %v4771 = vadd.f32 %v678, %v4770
  %v4772 = vpop.f32.mrf.mxu0
  %v4773 = vadd.f32 %v682, %v4772
  %v4774 = vpop.f32.mrf.mxu0
  %v4775 = vadd.f32 %v678, %v4774
  %v4776 = vpop.f32.mrf.mxu0
  %v4777 = vadd.f32 %v682, %v4776
  %4778 = vdwg.mxu0
  %4779 = vmatprep.subr.bf16.mxu0 %v891
  %4780 = vmatpush1.bf16.msra.mxu0 %v890
  %4781 = vmatprep.subr.bf16.mxu0 %v889
  %4782 = vmatpush1.bf16.msra.mxu0 %v888
  %4783 = vmatprep.subr.bf16.mxu0 %v887
  %4784 = vmatpush1.bf16.msra.mxu0 %v886
  %4785 = vmatprep.subr.bf16.mxu0 %v885
  %4786 = vmatpush1.bf16.msra.mxu0 %v884
  %4787 = vmatprep.subr.bf16.mxu0 %v883
  %4788 = vmatpush1.bf16.msra.mxu0 %v882
  %4789 = vmatprep.subr.bf16.mxu0 %v881
  %4790 = vmatpush1.bf16.msra.mxu0 %v880
  %4791 = vmatprep.subr.bf16.mxu0 %v879
  %4792 = vmatpush1.bf16.msra.mxu0 %v878
  %4793 = vmatprep.subr.bf16.mxu0 %v877
  %4794 = vmatpush1.bf16.msra.mxu0 %v876
  %4795 = vmatprep.subr.bf16.mxu0 0
  %4796 = vmatpush2.bf16.msra.mxu0 0
  %4797 = vmatprep.subr.bf16.mxu0 0
  %4798 = vmatpush2.bf16.msra.mxu0 0
  %4799 = vmatprep.subr.bf16.mxu0 0
  %4800 = vmatpush2.bf16.msra.mxu0 0
  %4801 = vmatprep.subr.bf16.mxu0 0
  %4802 = vmatpush2.bf16.msra.mxu0 0
  %4803 = vmatprep.subr.bf16.mxu0 0
  %4804 = vmatpush2.bf16.msra.mxu0 0
  %4805 = vmatprep.subr.bf16.mxu0 %v958
  %4806 = vmatpush2.bf16.msra.mxu0 %v955
  %4807 = vmatprep.subr.bf16.mxu0 %v895
  %4808 = vmatpush2.bf16.msra.mxu0 %v894
  %4809 = vmatprep.subr.bf16.mxu0 %v893
  %4810 = vmatpush2.bf16.msra.mxu0 %v892
  %4811 = vmatprep.mubr.bf16.mxu0 %v4734
  %4812 = vmatmul.mubr.bf16.gmra.mxu0 %v4732
  %v4813 = vpop.f32.mrf.mxu0
  %v4814 = vadd.f32 %v4771, %v4813
  %v4815 = vpop.f32.mrf.mxu0
  %v4816 = vadd.f32 %v4773, %v4815
  %v4817 = vpop.f32.mrf.mxu0
  %v4818 = vadd.f32 %v4775, %v4817
  %v4819 = vpop.f32.mrf.mxu0
  %v4820 = vadd.f32 %v4777, %v4819
  %4821 = vdwg.mxu0
  %v4822 = vsub.f32 0.0, %v4814
  %v4823 = vsub.f32 0.0, %v4816
  %v4824 = vsub.f32 0.0, %v4818
  %v4825 = vsub.f32 0.0, %v4820
  %v4826 = vmul.f32 %v4822, 1.442695
  %v4827 = vpow.pop %v4826
  %v4828 = vmul.f32 %v4823, 1.442695
  %v4829 = vpow.pop %v4828
  %v4830 = vmul.f32 %v4824, 1.442695
  %v4831 = vpow.pop %v4830
  %v4832 = vmul.f32 %v4825, 1.442695
  %v4833 = vpow.pop %v4832
  %v4834 = vadd.f32 %v4827, 1.0
  %v4835 = vadd.f32 %v4829, 1.0
  %v4836 = vadd.f32 %v4831, 1.0
  %v4837 = vadd.f32 %v4833, 1.0
  %v4838 = vrcp.pop %v4834
  %v4839 = vrcp.pop %v4835
  %v4840 = vrcp.pop %v4836
  %v4841 = vrcp.pop %v4837
  %v4842 = vpack.c.bf16 %v4840, %v4838
  %v4843 = vpack.c.bf16 %v4841, %v4839
  %v4845 = vsel %vm228, %v4843, 0
  %4847 = vmatprep.subr.bf16.mxu0 0
  %4848 = vmatpush1.bf16.msra.mxu0 %v1115
  %4849 = vmatprep.subr.bf16.mxu0 0
  %4850 = vmatpush1.bf16.msra.mxu0 %v1114
  %4851 = vmatprep.subr.bf16.mxu0 0
  %4852 = vmatpush1.bf16.msra.mxu0 %v1113
  %4853 = vmatprep.subr.bf16.mxu0 0
  %4854 = vmatpush1.bf16.msra.mxu0 %v1112
  %4855 = vmatprep.subr.bf16.mxu0 0
  %4856 = vmatpush1.bf16.msra.mxu0 %v1111
  %4857 = vmatprep.subr.bf16.mxu0 0
  %4858 = vmatpush1.bf16.msra.mxu0 %v1110
  %4859 = vmatprep.subr.bf16.mxu0 0
  %4860 = vmatpush1.bf16.msra.mxu0 %v1109
  %4861 = vmatprep.subr.bf16.mxu0 0
  %4862 = vmatpush1.bf16.msra.mxu0 %v1108
  %4863 = vmatprep.subr.bf16.mxu0 0
  %4864 = vmatpush2.bf16.msra.mxu0 0
  %4865 = vmatprep.subr.bf16.mxu0 0
  %4866 = vmatpush2.bf16.msra.mxu0 0
  %4867 = vmatprep.subr.bf16.mxu0 0
  %4868 = vmatpush2.bf16.msra.mxu0 0
  %4869 = vmatprep.subr.bf16.mxu0 0
  %4870 = vmatpush2.bf16.msra.mxu0 0
  %4871 = vmatprep.subr.bf16.mxu0 0
  %4872 = vmatpush2.bf16.msra.mxu0 0
  %4873 = vmatprep.subr.bf16.mxu0 0
  %4874 = vmatpush2.bf16.msra.mxu0 0
  %4875 = vmatprep.subr.bf16.mxu0 0
  %4876 = vmatpush2.bf16.msra.mxu0 %v1117
  %4877 = vmatprep.subr.bf16.mxu0 0
  %4878 = vmatpush2.bf16.msra.mxu0 %v1116
  %4879 = vmatprep.mubr.bf16.mxu0 %v4845
  %4880 = vmatmul.mubr.bf16.gmra.mxu0 %v4842
  %v4881 = vpop.f32.mrf.mxu0
  %v4882 = vadd.f32 0.0, %v4881
  %v4883 = vpop.f32.mrf.mxu0
  %v4884 = vpop.f32.mrf.mxu0
  %v4885 = vadd.f32 0.0, %v4884
  %v4886 = vpop.f32.mrf.mxu0
  %4887 = vdwg.mxu0
  %v4888 = vpack.c.bf16 %v4885, %v4882
  %v4890 = vsel %vm1177, %v4888, 0
  %4892 = vmatprep.subr.bf16.mxu0 0
  %4893 = vmatpush1.bf16.msra.mxu0 0
  %4894 = vmatprep.subr.bf16.mxu0 0
  %4895 = vmatpush1.bf16.msra.mxu0 0
  %4896 = vmatprep.subr.bf16.mxu0 0
  %4897 = vmatpush1.bf16.msra.mxu0 0
  %4898 = vmatprep.subr.bf16.mxu0 0
  %4899 = vmatpush1.bf16.msra.mxu0 0
  %4900 = vmatprep.subr.bf16.mxu0 0
  %4901 = vmatpush1.bf16.msra.mxu0 0
  %4902 = vmatprep.subr.bf16.mxu0 0
  %4903 = vmatpush1.bf16.msra.mxu0 0
  %4904 = vmatprep.subr.bf16.mxu0 0
  %4905 = vmatpush1.bf16.msra.mxu0 0
  %4906 = vmatprep.subr.bf16.mxu0 0
  %4907 = vmatpush1.bf16.msra.mxu0 %v4890
  %4908 = vmatprep.subr.bf16.mxu0 0
  %4909 = vmatpush2.bf16.msra.mxu0 0
  %4910 = vmatprep.subr.bf16.mxu0 0
  %4911 = vmatpush2.bf16.msra.mxu0 0
  %4912 = vmatprep.subr.bf16.mxu0 0
  %4913 = vmatpush2.bf16.msra.mxu0 0
  %4914 = vmatprep.subr.bf16.mxu0 0
  %4915 = vmatpush2.bf16.msra.mxu0 0
  %4916 = vmatprep.subr.bf16.mxu0 0
  %4917 = vmatpush2.bf16.msra.mxu0 0
  %4918 = vmatprep.subr.bf16.mxu0 0
  %4919 = vmatpush2.bf16.msra.mxu0 0
  %4920 = vmatprep.subr.bf16.mxu0 0
  %4921 = vmatpush2.bf16.msra.mxu0 0
  %4922 = vmatprep.subr.bf16.mxu0 0
  %4923 = vmatpush2.bf16.msra.mxu0 0
  %4924 = vmatprep.mubr.bf16.mxu0 0
  %4925 = vmatmul.mubr.bf16.gmra.mxu0 %v1175
  %v4926 = vpop.f32.mrf.mxu0
  %v4927 = vadd.f32 0.0, %v4926
  %v4928 = vpop.f32.mrf.mxu0
  %v4929 = vpop.f32.mrf.mxu0
  %v4930 = vpop.f32.mrf.mxu0
  %4931 = vdwg.mxu0
  %4932 = vst.msk [vmem:[#allocation2 + $0x7] sm:$0x1] %vm1221, %v4927
  %v4934 = vrot.slane %v4927, 1
  %4935 = vrot.lane.b32.xlu0 %v4934, 80
  %v4936 = vpop.permute.xlu0 %4935
  %4938 = vst.msk [vmem:[#allocation2 + $0x7] sm:$0x1] %vm1228, %v4936
  %4939 = vst.msk [vmem:[#allocation2 + $0xf] sm:$0x1] %vm1230, %v4936
  %v4940 = vrot.slane %v4927, 2
  %4941 = vrot.lane.b32.xlu0 %v4940, 32
  %v4942 = vpop.permute.xlu0 %4941
  %4944 = vst.msk [vmem:[#allocation2 + $0xf] sm:$0x1] %vm1236, %v4942
  %v4945 = vrot.slane %v4927, 3
  %4946 = vrot.lane.b32.xlu0 %v4945, 112
  %v4947 = vpop.permute.xlu0 %4946
  %4949 = vst.msk [vmem:[#allocation2 + $0xf] sm:$0x1] %vm1242, %v4947
  %4950 = vst.msk [vmem:[#allocation2 + $0x17] sm:$0x1] %vm1244, %v4947
  %v4951 = vrot.slane %v4927, 4
  %4952 = vrot.lane.b32.xlu0 %v4951, 64
  %v4953 = vpop.permute.xlu0 %4952
  %4955 = vst.msk [vmem:[#allocation2 + $0x17] sm:$0x1] %vm1250, %v4953
  %4956 = vst.msk [vmem:[#allocation2 + $0x1f] sm:$0x1] %vm1252, %v4953
  %v4957 = vld [vmem:[#allocation2] sm:$0xff]
  %v4958 = vld [vmem:[#allocation2 + $0x8] sm:$0xff]
  %v4959 = vld [vmem:[#allocation2 + $0x10] sm:$0xff]
  %v4960 = vld [vmem:[#allocation2 + $0x18] sm:$0xff]
  %v4961 = vpack.c.bf16 %v4957, %v4957
  %v4962 = vpack.c.bf16 %v4958, %v4958
  %v4963 = vpack.c.bf16 %v4959, %v4959
  %v4964 = vpack.c.bf16 %v4960, %v4960
  %v4965 = vld [vmem:[%s9] sm:$0xf]
  %v4966 = vld [vmem:[%s9 + $0x4] sm:$0xf]
  %v4967 = vld [vmem:[%s9 + $0x8] sm:$0xf]
  %v4968 = vld [vmem:[%s9 + $0xc] sm:$0xf]
  %v4969 = vld [vmem:[%s9 + $0x10] sm:$0xf]
  %v4970 = vld [vmem:[%s9 + $0x14] sm:$0xf]
  %v4971 = vld [vmem:[%s9 + $0x18] sm:$0xf]
  %v4972 = vld [vmem:[%s9 + $0x1c] sm:$0xf]
  %v4973 = vld [vmem:[%s9 + $0x20] sm:$0xf]
  %v4974 = vld [vmem:[%s9 + $0x24] sm:$0xf]
  %v4975 = vld [vmem:[%s9 + $0x28] sm:$0xf]
  %v4976 = vld [vmem:[%s9 + $0x2c] sm:$0xf]
  %v4977 = vld [vmem:[%s9 + $0x30] sm:$0xf]
  %v4978 = vld [vmem:[%s9 + $0x34] sm:$0xf]
  %v4979 = vld [vmem:[%s9 + $0x38] sm:$0xf]
  %v4980 = vld [vmem:[%s9 + $0x3c] sm:$0xf]
  %v4981 = vld [vmem:[%s9 + $0x40] sm:$0xf]
  %v4982 = vld [vmem:[%s9 + $0x44] sm:$0xf]
  %v4983 = vld [vmem:[%s9 + $0x48] sm:$0xf]
  %v4984 = vld [vmem:[%s9 + $0x4c] sm:$0xf]
  %v4985 = vld [vmem:[%s9 + $0x50] sm:$0xf]
  %v4986 = vld [vmem:[%s9 + $0x54] sm:$0xf]
  %v4987 = vld [vmem:[%s9 + $0x58] sm:$0xf]
  %v4988 = vld [vmem:[%s9 + $0x5c] sm:$0xf]
  %v4989 = vld [vmem:[%s9 + $0x60] sm:$0xf]
  %v4990 = vld [vmem:[%s9 + $0x64] sm:$0xf]
  %v4991 = vld [vmem:[%s9 + $0x68] sm:$0xf]
  %v4992 = vld [vmem:[%s9 + $0x6c] sm:$0xf]
  %v4993 = vld [vmem:[%s9 + $0x70] sm:$0xf]
  %v4994 = vld [vmem:[%s9 + $0x74] sm:$0xf]
  %v4995 = vld [vmem:[%s9 + $0x78] sm:$0xf]
  %v4996 = vld [vmem:[%s9 + $0x7c] sm:$0xf]
  %v4997 = vld [vmem:[%s9 + $0x80] sm:$0xf]
  %v4998 = vld [vmem:[%s9 + $0x84] sm:$0xf]
  %v4999 = vld [vmem:[%s9 + $0x88] sm:$0xf]
  %v5000 = vld [vmem:[%s9 + $0x8c] sm:$0xf]
  %v5001 = vld [vmem:[%s9 + $0x90] sm:$0xf]
  %v5002 = vld [vmem:[%s9 + $0x94] sm:$0xf]
  %v5003 = vld [vmem:[%s9 + $0x98] sm:$0xf]
  %v5004 = vld [vmem:[%s9 + $0x9c] sm:$0xf]
  %v5005 = vld [vmem:[%s9 + $0xa0] sm:$0xf]
  %v5006 = vld [vmem:[%s9 + $0xa4] sm:$0xf]
  %v5007 = vld [vmem:[%s9 + $0xa8] sm:$0xf]
  %v5008 = vld [vmem:[%s9 + $0xac] sm:$0xf]
  %v5009 = vld [vmem:[%s9 + $0xb0] sm:$0xf]
  %v5010 = vld [vmem:[%s9 + $0xb4] sm:$0xf]
  %v5011 = vld [vmem:[%s9 + $0xb8] sm:$0xf]
  %v5012 = vld [vmem:[%s9 + $0xbc] sm:$0xf]
  %v5013 = vld [vmem:[%s9 + $0xc0] sm:$0xf]
  %v5014 = vld [vmem:[%s9 + $0xc4] sm:$0xf]
  %v5015 = vld [vmem:[%s10] sm:$0x1]
  %v5017 = vlaneseq
  %v5018 = vshrl.u32 %v5017, 7
  %v5019 = vsub.s32 0, %v5018
  %v5020 = vrot.slane %v5015, %v5019
  %v5072 = vunpack.c.l.b16 %v4965
  %v5073 = vunpack.c.l.b16 %v4966
  %v5074 = vunpack.c.l.b16 %v4967
  %v5075 = vunpack.c.l.b16 %v4968
  %v5076 = vunpack.c.l.b16 %v4969
  %v5077 = vunpack.c.l.b16 %v4970
  %v5078 = vunpack.c.l.b16 %v4971
  %v5079 = vunpack.c.l.b16 %v4972
  %v5080 = vunpack.c.l.b16 %v4973
  %v5081 = vunpack.c.l.b16 %v4974
  %v5082 = vunpack.c.l.b16 %v4975
  %v5083 = vunpack.c.l.b16 %v4976
  %v5084 = vunpack.c.l.b16 %v4977
  %v5085 = vunpack.c.l.b16 %v4978
  %v5086 = vunpack.c.l.b16 %v4979
  %v5087 = vunpack.c.l.b16 %v4980
  %v5088 = vunpack.c.l.b16 %v4981
  %v5089 = vunpack.c.l.b16 %v4982
  %v5090 = vunpack.c.l.b16 %v4983
  %v5091 = vunpack.c.l.b16 %v4984
  %v5092 = vunpack.c.l.b16 %v4985
  %v5093 = vunpack.c.l.b16 %v4986
  %v5094 = vunpack.c.l.b16 %v4987
  %v5095 = vunpack.c.l.b16 %v4988
  %v5096 = vunpack.c.l.b16 %v4989
  %v5097 = vunpack.c.l.b16 %v4990
  %v5098 = vunpack.c.l.b16 %v4991
  %v5099 = vunpack.c.l.b16 %v4992
  %v5100 = vunpack.c.l.b16 %v4993
  %v5101 = vunpack.c.l.b16 %v4994
  %v5102 = vunpack.c.l.b16 %v4995
  %v5103 = vunpack.c.l.b16 %v4996
  %v5104 = vunpack.c.l.b16 %v4997
  %v5105 = vunpack.c.l.b16 %v4998
  %v5106 = vunpack.c.l.b16 %v4999
  %v5107 = vunpack.c.l.b16 %v5000
  %v5108 = vunpack.c.l.b16 %v5001
  %v5109 = vunpack.c.l.b16 %v5002
  %v5110 = vunpack.c.l.b16 %v5003
  %v5111 = vunpack.c.l.b16 %v5004
  %v5112 = vunpack.c.l.b16 %v5005
  %v5113 = vunpack.c.l.b16 %v5006
  %v5114 = vunpack.c.l.b16 %v5007
  %v5115 = vunpack.c.l.b16 %v5008
  %v5116 = vunpack.c.l.b16 %v5009
  %v5117 = vunpack.c.l.b16 %v5010
  %v5118 = vunpack.c.l.b16 %v5011
  %v5119 = vunpack.c.l.b16 %v5012
  %v5120 = vunpack.c.l.b16 %v5013
  %v5121 = vunpack.c.l.b16 %v5014
  %v5122 = vpack.c.b16 %v5073, %v5072
  %v5123 = vpack.c.b16 %v5075, %v5074
  %v5124 = vpack.c.b16 %v5077, %v5076
  %v5125 = vpack.c.b16 %v5079, %v5078
  %v5126 = vpack.c.b16 %v5081, %v5080
  %v5127 = vpack.c.b16 %v5083, %v5082
  %v5128 = vpack.c.b16 %v5085, %v5084
  %v5129 = vpack.c.b16 %v5087, %v5086
  %v5130 = vpack.c.b16 %v5089, %v5088
  %v5131 = vpack.c.b16 %v5091, %v5090
  %v5132 = vpack.c.b16 %v5093, %v5092
  %v5133 = vpack.c.b16 %v5095, %v5094
  %v5134 = vpack.c.b16 %v5097, %v5096
  %v5135 = vpack.c.b16 %v5099, %v5098
  %v5136 = vpack.c.b16 %v5101, %v5100
  %v5137 = vpack.c.b16 %v5103, %v5102
  %v5138 = vpack.c.b16 %v5105, %v5104
  %v5139 = vpack.c.b16 %v5107, %v5106
  %v5140 = vpack.c.b16 %v5109, %v5108
  %v5141 = vpack.c.b16 %v5111, %v5110
  %v5142 = vpack.c.b16 %v5113, %v5112
  %v5143 = vpack.c.b16 %v5115, %v5114
  %v5144 = vpack.c.b16 %v5117, %v5116
  %v5145 = vpack.c.b16 %v5119, %v5118
  %v5146 = vpack.c.b16 %v5121, %v5120
  %vm5172 = vcmask 130048
  %v5174 = vsel %vm5172, %v4964, 0
  %5176 = vmatprep.subr.bf16.mxu0 0
  %5177 = vmatpush1.bf16.msra.mxu0 %v5129
  %5178 = vmatprep.subr.bf16.mxu0 0
  %5179 = vmatpush1.bf16.msra.mxu0 %v5128
  %5180 = vmatprep.subr.bf16.mxu0 0
  %5181 = vmatpush1.bf16.msra.mxu0 %v5127
  %5182 = vmatprep.subr.bf16.mxu0 0
  %5183 = vmatpush1.bf16.msra.mxu0 %v5126
  %5184 = vmatprep.subr.bf16.mxu0 0
  %5185 = vmatpush1.bf16.msra.mxu0 %v5125
  %5186 = vmatprep.subr.bf16.mxu0 0
  %5187 = vmatpush1.bf16.msra.mxu0 %v5124
  %5188 = vmatprep.subr.bf16.mxu0 0
  %5189 = vmatpush1.bf16.msra.mxu0 %v5123
  %5190 = vmatprep.subr.bf16.mxu0 0
  %5191 = vmatpush1.bf16.msra.mxu0 %v5122
  %5192 = vmatprep.subr.bf16.mxu0 0
  %5193 = vmatpush2.bf16.msra.mxu0 %v5137
  %5194 = vmatprep.subr.bf16.mxu0 0
  %5195 = vmatpush2.bf16.msra.mxu0 %v5136
  %5196 = vmatprep.subr.bf16.mxu0 0
  %5197 = vmatpush2.bf16.msra.mxu0 %v5135
  %5198 = vmatprep.subr.bf16.mxu0 0
  %5199 = vmatpush2.bf16.msra.mxu0 %v5134
  %5200 = vmatprep.subr.bf16.mxu0 0
  %5201 = vmatpush2.bf16.msra.mxu0 %v5133
  %5202 = vmatprep.subr.bf16.mxu0 0
  %5203 = vmatpush2.bf16.msra.mxu0 %v5132
  %5204 = vmatprep.subr.bf16.mxu0 0
  %5205 = vmatpush2.bf16.msra.mxu0 %v5131
  %5206 = vmatprep.subr.bf16.mxu0 0
  %5207 = vmatpush2.bf16.msra.mxu0 %v5130
  %5208 = vmatprep.mubr.bf16.mxu0 %v4962
  %5209 = vmatmul.mubr.bf16.gmra.mxu0 %v4961
  %v5210 = vpop.f32.mrf.mxu0
  %v5211 = vadd.f32 %v5020, %v5210
  %v5212 = vpop.f32.mrf.mxu0
  %v5213 = vpop.f32.mrf.mxu0
  %v5214 = vpop.f32.mrf.mxu0
  %5215 = vdwg.mxu0
  %5216 = vmatprep.subr.bf16.mxu0 0
  %5217 = vmatpush1.bf16.msra.mxu0 %v5145
  %5218 = vmatprep.subr.bf16.mxu0 0
  %5219 = vmatpush1.bf16.msra.mxu0 %v5144
  %5220 = vmatprep.subr.bf16.mxu0 0
  %5221 = vmatpush1.bf16.msra.mxu0 %v5143
  %5222 = vmatprep.subr.bf16.mxu0 0
  %5223 = vmatpush1.bf16.msra.mxu0 %v5142
  %5224 = vmatprep.subr.bf16.mxu0 0
  %5225 = vmatpush1.bf16.msra.mxu0 %v5141
  %5226 = vmatprep.subr.bf16.mxu0 0
  %5227 = vmatpush1.bf16.msra.mxu0 %v5140
  %5228 = vmatprep.subr.bf16.mxu0 0
  %5229 = vmatpush1.bf16.msra.mxu0 %v5139
  %5230 = vmatprep.subr.bf16.mxu0 0
  %5231 = vmatpush1.bf16.msra.mxu0 %v5138
  %5232 = vmatprep.subr.bf16.mxu0 0
  %5233 = vmatpush2.bf16.msra.mxu0 0
  %5234 = vmatprep.subr.bf16.mxu0 0
  %5235 = vmatpush2.bf16.msra.mxu0 0
  %5236 = vmatprep.subr.bf16.mxu0 0
  %5237 = vmatpush2.bf16.msra.mxu0 0
  %5238 = vmatprep.subr.bf16.mxu0 0
  %5239 = vmatpush2.bf16.msra.mxu0 0
  %5240 = vmatprep.subr.bf16.mxu0 0
  %5241 = vmatpush2.bf16.msra.mxu0 0
  %5242 = vmatprep.subr.bf16.mxu0 0
  %5243 = vmatpush2.bf16.msra.mxu0 0
  %5244 = vmatprep.subr.bf16.mxu0 0
  %5245 = vmatpush2.bf16.msra.mxu0 0
  %5246 = vmatprep.subr.bf16.mxu0 0
  %5247 = vmatpush2.bf16.msra.mxu0 %v5146
  %5248 = vmatprep.mubr.bf16.mxu0 %v5174
  %5249 = vmatmul.mubr.bf16.gmra.mxu0 %v4963
  %v5250 = vpop.f32.mrf.mxu0
  %v5251 = vadd.f32 %v5211, %v5250
  %v5252 = vpop.f32.mrf.mxu0
  %v5253 = vpop.f32.mrf.mxu0
  %v5254 = vpop.f32.mrf.mxu0
  %5255 = vdwg.mxu0
  %v5256 = vsub.f32 0.0, %v5251
  %v5257 = vmul.f32 %v5256, 1.442695
  %v5258 = vpow.pop %v5257
  %v5259 = vadd.f32 %v5258, 1.0
  %v5260 = vrcp.pop %v5259
  %v5261 = vpack.c.bf16 %v5260, %v5260
  %v5262 = vld [vmem:[%s11] sm:$0xf]
  %v5263 = vld [vmem:[%s11 + $0x4] sm:$0xf]
  %v5264 = vld [vmem:[%s11 + $0x8] sm:$0xf]
  %v5265 = vld [vmem:[%s11 + $0xc] sm:$0xf]
  %v5266 = vld [vmem:[%s11 + $0x10] sm:$0xf]
  %v5267 = vld [vmem:[%s11 + $0x14] sm:$0xf]
  %v5268 = vld [vmem:[%s11 + $0x18] sm:$0xf]
  %v5269 = vld [vmem:[%s11 + $0x1c] sm:$0xf]
  %v5270 = vld [vmem:[%s11 + $0x20] sm:$0xf]
  %v5271 = vld [vmem:[%s11 + $0x24] sm:$0xf]
  %v5272 = vld [vmem:[%s11 + $0x28] sm:$0xf]
  %v5273 = vld [vmem:[%s11 + $0x2c] sm:$0xf]
  %v5274 = vld [vmem:[%s11 + $0x30] sm:$0xf]
  %v5275 = vld [vmem:[%s11 + $0x34] sm:$0xf]
  %v5276 = vld [vmem:[%s11 + $0x38] sm:$0xf]
  %v5277 = vld [vmem:[%s12] sm:$0x1]
  %v5279 = vlaneseq
  %v5280 = vshrl.u32 %v5279, 7
  %v5281 = vsub.s32 0, %v5280
  %v5282 = vrot.slane %v5277, %v5281
  %v5299 = vunpack.c.l.b16 %v5262
  %v5300 = vunpack.c.l.b16 %v5263
  %v5301 = vunpack.c.l.b16 %v5264
  %v5302 = vunpack.c.l.b16 %v5265
  %v5303 = vunpack.c.l.b16 %v5266
  %v5304 = vunpack.c.l.b16 %v5267
  %v5305 = vunpack.c.l.b16 %v5268
  %v5306 = vunpack.c.l.b16 %v5269
  %v5307 = vunpack.c.l.b16 %v5270
  %v5308 = vunpack.c.l.b16 %v5271
  %v5309 = vunpack.c.l.b16 %v5272
  %v5310 = vunpack.c.l.b16 %v5273
  %v5311 = vunpack.c.l.b16 %v5274
  %v5312 = vunpack.c.l.b16 %v5275
  %v5313 = vunpack.c.l.b16 %v5276
  %v5314 = vpack.c.b16 %v5300, %v5299
  %v5315 = vpack.c.b16 %v5302, %v5301
  %v5316 = vpack.c.b16 %v5304, %v5303
  %v5317 = vpack.c.b16 %v5306, %v5305
  %v5318 = vpack.c.b16 %v5308, %v5307
  %v5319 = vpack.c.b16 %v5310, %v5309
  %v5320 = vpack.c.b16 %v5312, %v5311
  %v5321 = vpack.c.b16 %v5313, %v5313
  %vm5329 = vcmask 982016
  %v5331 = vsel %vm5329, %v5261, 0
  %v5334 = vsel %vm529, %v5321, 0
  %5336 = vmatprep.subr.bf16.mxu0 0
  %5337 = vmatpush1.bf16.msra.mxu0 %v5334
  %5338 = vmatprep.subr.bf16.mxu0 0
  %5339 = vmatpush1.bf16.msra.mxu0 %v5320
  %5340 = vmatprep.subr.bf16.mxu0 0
  %5341 = vmatpush1.bf16.msra.mxu0 %v5319
  %5342 = vmatprep.subr.bf16.mxu0 0
  %5343 = vmatpush1.bf16.msra.mxu0 %v5318
  %5344 = vmatprep.subr.bf16.mxu0 0
  %5345 = vmatpush1.bf16.msra.mxu0 %v5317
  %5346 = vmatprep.subr.bf16.mxu0 0
  %5347 = vmatpush1.bf16.msra.mxu0 %v5316
  %5348 = vmatprep.subr.bf16.mxu0 0
  %5349 = vmatpush1.bf16.msra.mxu0 %v5315
  %5350 = vmatprep.subr.bf16.mxu0 0
  %5351 = vmatpush1.bf16.msra.mxu0 %v5314
  %5352 = vmatprep.subr.bf16.mxu0 0
  %5353 = vmatpush2.bf16.msra.mxu0 0
  %5354 = vmatprep.subr.bf16.mxu0 0
  %5355 = vmatpush2.bf16.msra.mxu0 0
  %5356 = vmatprep.subr.bf16.mxu0 0
  %5357 = vmatpush2.bf16.msra.mxu0 0
  %5358 = vmatprep.subr.bf16.mxu0 0
  %5359 = vmatpush2.bf16.msra.mxu0 0
  %5360 = vmatprep.subr.bf16.mxu0 0
  %5361 = vmatpush2.bf16.msra.mxu0 0
  %5362 = vmatprep.subr.bf16.mxu0 0
  %5363 = vmatpush2.bf16.msra.mxu0 0
  %5364 = vmatprep.subr.bf16.mxu0 0
  %5365 = vmatpush2.bf16.msra.mxu0 0
  %5366 = vmatprep.subr.bf16.mxu0 0
  %5367 = vmatpush2.bf16.msra.mxu0 0
  %5368 = vmatprep.mubr.bf16.mxu0 0
  %5369 = vmatmul.mubr.bf16.gmra.mxu0 %v5331
  %v5370 = vpop.f32.mrf.mxu0
  %v5371 = vadd.f32 %v5282, %v5370
  %v5372 = vpop.f32.mrf.mxu0
  %v5373 = vpop.f32.mrf.mxu0
  %v5374 = vpop.f32.mrf.mxu0
  %5375 = vdwg.mxu0
  %v5376 = vsub.f32 0.0, %v5371
  %v5377 = vmul.f32 %v5376, 1.442695
  %v5378 = vpow.pop %v5377
  %v5379 = vadd.f32 %v5378, 1.0
  %v5380 = vrcp.pop %v5379
  %v5381 = vpack.c.bf16 %v5380, %v5380
  %v5382 = vld [vmem:[%s13] sm:$0xf]
  %v5383 = vld [vmem:[%s13 + $0x4] sm:$0xf]
  %v5384 = vld [vmem:[%s13 + $0x8] sm:$0xf]
  %v5385 = vld [vmem:[%s13 + $0xc] sm:$0xf]
  %v5386 = vld [vmem:[%s13 + $0x10] sm:$0xf]
  %v5387 = vld [vmem:[%s13 + $0x14] sm:$0xf]
  %v5388 = vld [vmem:[%s13 + $0x18] sm:$0xf]
  %v5389 = vld [vmem:[%s13 + $0x1c] sm:$0xf]
  %v5390 = vld [vmem:[%s13 + $0x20] sm:$0xf]
  %v5391 = vld [vmem:[%s13 + $0x24] sm:$0xf]
  %v5392 = vld [vmem:[%s13 + $0x28] sm:$0x3]
  %v5393 = vld [vmem:[%s14] sm:$0x1]
  %v5395 = vlaneseq
  %v5396 = vshrl.u32 %v5395, 7
  %v5397 = vsub.s32 0, %v5396
  %v5398 = vrot.slane %v5393, %v5397
  %v5411 = vunpack.c.l.b16 %v5382
  %v5412 = vunpack.c.l.b16 %v5383
  %v5413 = vunpack.c.l.b16 %v5384
  %v5414 = vunpack.c.l.b16 %v5385
  %v5415 = vunpack.c.l.b16 %v5386
  %v5416 = vunpack.c.l.b16 %v5387
  %v5417 = vunpack.c.l.b16 %v5388
  %v5418 = vunpack.c.l.b16 %v5389
  %v5419 = vunpack.c.l.b16 %v5390
  %v5420 = vunpack.c.l.b16 %v5391
  %v5421 = vunpack.c.l.b16 %v5392
  %v5422 = vpack.c.b16 %v5412, %v5411
  %v5423 = vpack.c.b16 %v5414, %v5413
  %v5424 = vpack.c.b16 %v5416, %v5415
  %v5425 = vpack.c.b16 %v5418, %v5417
  %v5426 = vpack.c.b16 %v5420, %v5419
  %v5427 = vpack.c.b16 %v5421, %v5421
  %v5434 = vsel %vm660, %v5381, 0
  %v5437 = vsel %vm953, %v5427, 0
  %5439 = vmatprep.subr.bf16.mxu0 0
  %5440 = vmatpush1.bf16.msra.mxu0 0
  %5441 = vmatprep.subr.bf16.mxu0 0
  %5442 = vmatpush1.bf16.msra.mxu0 0
  %5443 = vmatprep.subr.bf16.mxu0 0
  %5444 = vmatpush1.bf16.msra.mxu0 %v5437
  %5445 = vmatprep.subr.bf16.mxu0 0
  %5446 = vmatpush1.bf16.msra.mxu0 %v5426
  %5447 = vmatprep.subr.bf16.mxu0 0
  %5448 = vmatpush1.bf16.msra.mxu0 %v5425
  %5449 = vmatprep.subr.bf16.mxu0 0
  %5450 = vmatpush1.bf16.msra.mxu0 %v5424
  %5451 = vmatprep.subr.bf16.mxu0 0
  %5452 = vmatpush1.bf16.msra.mxu0 %v5423
  %5453 = vmatprep.subr.bf16.mxu0 0
  %5454 = vmatpush1.bf16.msra.mxu0 %v5422
  %5455 = vmatprep.subr.bf16.mxu0 0
  %5456 = vmatpush2.bf16.msra.mxu0 0
  %5457 = vmatprep.subr.bf16.mxu0 0
  %5458 = vmatpush2.bf16.msra.mxu0 0
  %5459 = vmatprep.subr.bf16.mxu0 0
  %5460 = vmatpush2.bf16.msra.mxu0 0
  %5461 = vmatprep.subr.bf16.mxu0 0
  %5462 = vmatpush2.bf16.msra.mxu0 0
  %5463 = vmatprep.subr.bf16.mxu0 0
  %5464 = vmatpush2.bf16.msra.mxu0 0
  %5465 = vmatprep.subr.bf16.mxu0 0
  %5466 = vmatpush2.bf16.msra.mxu0 0
  %5467 = vmatprep.subr.bf16.mxu0 0
  %5468 = vmatpush2.bf16.msra.mxu0 0
  %5469 = vmatprep.subr.bf16.mxu0 0
  %5470 = vmatpush2.bf16.msra.mxu0 0
  %5471 = vmatprep.mubr.bf16.mxu0 0
  %5472 = vmatmul.mubr.bf16.gmra.mxu0 %v5434
  %v5473 = vpop.f32.mrf.mxu0
  %v5474 = vadd.f32 %v5398, %v5473
  %v5475 = vpop.f32.mrf.mxu0
  %v5476 = vpop.f32.mrf.mxu0
  %v5477 = vpop.f32.mrf.mxu0
  %5478 = vdwg.mxu0
  %5479 = vst [vmem:[%s15] sm:$0xff] %v5474
  // Predicated region
  $region62: #{_forward_impl.1} parent=0 // pred_check
    _
  $region63: #{_forward_impl.1} parent=0 // pred_check_branch
    %5481 = sbr.rel (0) target = $region65
  $region64: #{_forward_impl.1} parent=0 // pred_region
    _
  $region65: #{_forward_impl.1} parent=0 // pred_fallthru
    _
  // Predicated region
  $region66: #{_forward_impl.1} parent=0 // pred_check
    _
  $region67: #{_forward_impl.1} parent=0 // pred_check_branch
    %5483 = sbr.rel (0) target = $region69
  $region68: #{_forward_impl.1} parent=0 // pred_region
    _
  $region69: #{_forward_impl.1} parent=0 // pred_fallthru
    _

</llo_original>
